<compile_context>
chip_gen: v5e
topology: v5e:2x2
jax: 0.10.0
libtpu: 0.0.40
codegen_flags: <defaults>
</compile_context>

<pallas_src>
import math
from functools import partial

import jax
import jax.numpy as jnp
from jax.experimental import pallas as pl
from jax.experimental.pallas import tpu as pltpu


# -----------------------------------------------------------------------------
# Config
# -----------------------------------------------------------------------------

# Matmul-operand dtype.  float32 keeps numerics closest to the PyTorch reference;
# switch to jnp.bfloat16 on v6e / v7x for ~2x MXU throughput (accumulation stays
# float32 via preferred_element_type in every dot below).
MXU_DTYPE = jnp.float32

# Raise the scoped-VMEM limit so resident weights + double-buffered activation tiles
# fit (scoped defaults: 16 MiB v5e, 32 MiB v6e/v7x).  48 MiB stays below physical VMEM
# on every generation (v7x has 64 MiB per TensorCore).
VMEM_LIMIT_BYTES = 48 * 1024 * 1024

# Row-tile size for the flattened (batch*seq, d_model) kernels.  512 rows keeps the
# double-buffered activation tiles small while staying near the HBM roofline.
MAX_ROW_TILE = 512


def _cparams(dimension_semantics):
    return pltpu.CompilerParams(dimension_semantics=dimension_semantics,
                                vmem_limit_bytes=VMEM_LIMIT_BYTES)


def _row_tile(rows):
    # Full block when it fits, otherwise 512-row tiles (multiple of 8 sublanes).
    # The ragged tail is handled by Pallas' masked writes (all kernels are
    # row-independent, so garbage rows in the padded read never contaminate output).
    tm = rows if rows <= MAX_ROW_TILE else MAX_ROW_TILE
    return tm, (pl.cdiv(rows, tm),)


def _mxu(x):
    return x.astype(MXU_DTYPE)


# -----------------------------------------------------------------------------
# Kernels
# -----------------------------------------------------------------------------

def _norm_rows(x, alpha, beta, eps):
    # PyTorch-tutorial Norm: alpha * (x - mean) / (std + eps) + beta,
    # with torch.std default unbiased=True (ddof=1).  Statistics kept in f32.
    d = x.shape[-1]
    mean = jnp.mean(x, axis=-1, keepdims=True)
    var = jnp.sum((x - mean) ** 2, axis=-1, keepdims=True) * (1.0 / (d - 1))
    std = jnp.sqrt(var)
    return alpha * (x - mean) / (std + eps) + beta


def _embed_scale_pe_kernel(e_ref, pe_ref, o_ref, *, scale):
    # o = emb * sqrt(d_model) + positional_encoding   (dropout = identity in eval)
    o_ref[...] = (e_ref[...] * scale + pe_ref[...]).astype(o_ref.dtype)


def _norm_kernel(x_ref, a_ref, b_ref, o_ref, *, eps):
    x = x_ref[...].astype(jnp.float32)
    o_ref[...] = _norm_rows(x, a_ref[...], b_ref[...], eps).astype(o_ref.dtype)


def _norm_matmul_kernel(x_ref, a_ref, b_ref, w_ref, bias_ref, o_ref, *, eps):
    # fused: Linear(Norm(x)) -- used for norm1->QKV and norm2->Q projections.
    xn = _norm_rows(x_ref[...].astype(jnp.float32), a_ref[...], b_ref[...], eps)
    y = jnp.dot(_mxu(xn), _mxu(w_ref[...]),
                preferred_element_type=jnp.float32) + bias_ref[...]
    o_ref[...] = y.astype(o_ref.dtype)


def _norm_ffn_kernel(x_ref, a_ref, b_ref, w1_ref, b1_ref, w2_ref, b2_ref, o_ref, *, eps):
    # fused: x + Linear2(ReLU(Linear1(Norm(x))))   (dropout = identity in eval)
    x = x_ref[...].astype(jnp.float32)
    xn = _norm_rows(x, a_ref[...], b_ref[...], eps)
    h = jnp.dot(_mxu(xn), _mxu(w1_ref[...]),
                preferred_element_type=jnp.float32) + b1_ref[...]
    h = jnp.maximum(h, 0.0)
    y = jnp.dot(_mxu(h), _mxu(w2_ref[...]),
                preferred_element_type=jnp.float32) + b2_ref[...]
    o_ref[...] = (x + y).astype(o_ref.dtype)


def _linear_kernel(x_ref, w_ref, b_ref, o_ref):
    y = jnp.dot(_mxu(x_ref[...]), _mxu(w_ref[...]),
                preferred_element_type=jnp.float32) + b_ref[...]
    o_ref[...] = y.astype(o_ref.dtype)


def _linear_residual_kernel(x_ref, w_ref, b_ref, r_ref, o_ref):
    y = jnp.dot(_mxu(x_ref[...]), _mxu(w_ref[...]),
                preferred_element_type=jnp.float32) + b_ref[...]
    o_ref[...] = (y + r_ref[...]).astype(o_ref.dtype)


def _mha_body(q, k, v, m, *, scale, heads):
    # q: (Sq, D), k/v: (Sk, D), m: (Mq, Sk) int (Mq in {1, Sq}); returns (Sq, D).
    sq, d = q.shape
    dk = d // heads
    outs = []
    for h in range(heads):                     # static unroll over heads
        lo = h * dk
        qh = q[:, lo:lo + dk]
        kh = k[:, lo:lo + dk]
        vh = v[:, lo:lo + dk]
        # q @ k^T without materializing k.T: trans-B contraction feeds the MXU directly.
        s = jax.lax.dot_general(_mxu(qh), _mxu(kh), (((1,), (1,)), ((), ())),
                                preferred_element_type=jnp.float32) * scale
        s = jnp.where(m == 0, -1e9, s)
        s = s - jnp.max(s, axis=-1, keepdims=True)
        p = jnp.exp(s)
        denom = jnp.maximum(jnp.sum(p, axis=-1, keepdims=True), 1e-30)
        p = p * pl.reciprocal(denom, approx=True)      # EUP vrcp, frees VALU slots
        outs.append(jnp.dot(_mxu(p), _mxu(vh), preferred_element_type=jnp.float32))
    return jnp.concatenate(outs, axis=-1)              # head-concatenated (Sq, D)


def _self_attn_kernel(qkv_ref, m_ref, o_ref, *, scale, heads, d_model):
    # one batch element per grid step, all heads; packed QKV sliced in-kernel.
    qkv = qkv_ref[0].astype(jnp.float32)               # (Sq, 3D)
    q = qkv[:, :d_model]
    k = qkv[:, d_model:2 * d_model]
    v = qkv[:, 2 * d_model:]
    o_ref[0] = _mha_body(q, k, v, m_ref[0], scale=scale, heads=heads).astype(o_ref.dtype)


def _cross_attn_kernel(q_ref, kv_ref, m_ref, o_ref, *, scale, heads, d_model):
    q = q_ref[0].astype(jnp.float32)                   # (Sq, D)
    kv = kv_ref[0].astype(jnp.float32)                 # (Sk, 2D)
    k = kv[:, :d_model]
    v = kv[:, d_model:]
    o_ref[0] = _mha_body(q, k, v, m_ref[0], scale=scale, heads=heads).astype(o_ref.dtype)


# -----------------------------------------------------------------------------
# pallas_call wrappers
# -----------------------------------------------------------------------------

def embed_scale_pe(emb, pe, d_model):
    B, S, D = emb.shape
    return pl.pallas_call(
        partial(_embed_scale_pe_kernel, scale=math.sqrt(d_model)),
        out_shape=jax.ShapeDtypeStruct((B, S, D), jnp.float32),
        grid=(B,),
        in_specs=[pl.BlockSpec((1, S, D), lambda b: (b, 0, 0)),
                  pl.BlockSpec((S, D), lambda b: (0, 0))],
        out_specs=pl.BlockSpec((1, S, D), lambda b: (b, 0, 0)),
        compiler_params=_cparams(("parallel",)),
    )(emb, pe)


def layer_norm(x, alpha, beta, eps=1e-6):
    B, S, D = x.shape
    rows = B * S
    x2 = x.reshape(rows, D)
    tm, grid = _row_tile(rows)
    out = pl.pallas_call(
        partial(_norm_kernel, eps=eps),
        out_shape=jax.ShapeDtypeStruct((rows, D), jnp.float32),
        grid=grid,
        in_specs=[pl.BlockSpec((tm, D), lambda i: (i, 0)),
                  pl.BlockSpec((1, D), lambda i: (0, 0)),
                  pl.BlockSpec((1, D), lambda i: (0, 0))],
        out_specs=pl.BlockSpec((tm, D), lambda i: (i, 0)),
        compiler_params=_cparams(("parallel",)),
    )(x2, alpha.reshape(1, D), beta.reshape(1, D))
    return out.reshape(B, S, D)


def norm_matmul(x, alpha, beta, w, b, eps=1e-6):
    # fused LayerNorm + Linear; weights stay VMEM-resident across row tiles.
    B, S, D = x.shape
    Dout = w.shape[1]
    rows = B * S
    x2 = x.reshape(rows, D)
    tm, grid = _row_tile(rows)
    out = pl.pallas_call(
        partial(_norm_matmul_kernel, eps=eps),
        out_shape=jax.ShapeDtypeStruct((rows, Dout), jnp.float32),
        grid=grid,
        in_specs=[pl.BlockSpec((tm, D), lambda i: (i, 0)),
                  pl.BlockSpec((1, D), lambda i: (0, 0)),
                  pl.BlockSpec((1, D), lambda i: (0, 0)),
                  pl.BlockSpec((D, Dout), lambda i: (0, 0)),
                  pl.BlockSpec((1, Dout), lambda i: (0, 0))],
        out_specs=pl.BlockSpec((tm, Dout), lambda i: (i, 0)),
        compiler_params=_cparams(("parallel",)),
    )(x2, alpha.reshape(1, D), beta.reshape(1, D), w, b.reshape(1, Dout))
    return out.reshape(B, S, Dout)


def linear(x, w, b):
    B, S, Din = x.shape
    Dout = w.shape[1]
    rows = B * S
    x2 = x.reshape(rows, Din)
    tm, grid = _row_tile(rows)
    out = pl.pallas_call(
        _linear_kernel,
        out_shape=jax.ShapeDtypeStruct((rows, Dout), jnp.float32),
        grid=grid,
        in_specs=[pl.BlockSpec((tm, Din), lambda i: (i, 0)),
                  pl.BlockSpec((Din, Dout), lambda i: (0, 0)),
                  pl.BlockSpec((1, Dout), lambda i: (0, 0))],
        out_specs=pl.BlockSpec((tm, Dout), lambda i: (i, 0)),
        compiler_params=_cparams(("parallel",)),
    )(x2, w, b.reshape(1, Dout))
    return out.reshape(B, S, Dout)


def linear_residual(x, w, b, res):
    B, S, Din = x.shape
    Dout = w.shape[1]
    rows = B * S
    x2 = x.reshape(rows, Din)
    r2 = res.reshape(rows, Dout)
    tm, grid = _row_tile(rows)
    out = pl.pallas_call(
        _linear_residual_kernel,
        out_shape=jax.ShapeDtypeStruct((rows, Dout), jnp.float32),
        grid=grid,
        in_specs=[pl.BlockSpec((tm, Din), lambda i: (i, 0)),
                  pl.BlockSpec((Din, Dout), lambda i: (0, 0)),
                  pl.BlockSpec((1, Dout), lambda i: (0, 0)),
                  pl.BlockSpec((tm, Dout), lambda i: (i, 0))],
        out_specs=pl.BlockSpec((tm, Dout), lambda i: (i, 0)),
        compiler_params=_cparams(("parallel",)),
    )(x2, w, b.reshape(1, Dout), r2)
    return out.reshape(B, S, Dout)


def norm_ffn(x, alpha, beta, w1, b1, w2, b2, eps=1e-6):
    # fused LayerNorm + FFN + residual.
    # TODO(synk): for large d_ff on v7x (64 MiB VMEM) additionally tile Dff and
    # accumulate in a VMEM scratch instead of keeping both weight matrices resident.
    B, S, D = x.shape
    Dff = w1.shape[1]
    rows = B * S
    x2 = x.reshape(rows, D)
    tm, grid = _row_tile(rows)
    out = pl.pallas_call(
        partial(_norm_ffn_kernel, eps=eps),
        out_shape=jax.ShapeDtypeStruct((rows, D), jnp.float32),
        grid=grid,
        in_specs=[pl.BlockSpec((tm, D), lambda i: (i, 0)),
                  pl.BlockSpec((1, D), lambda i: (0, 0)),
                  pl.BlockSpec((1, D), lambda i: (0, 0)),
                  pl.BlockSpec((D, Dff), lambda i: (0, 0)),
                  pl.BlockSpec((1, Dff), lambda i: (0, 0)),
                  pl.BlockSpec((Dff, D), lambda i: (0, 0)),
                  pl.BlockSpec((1, D), lambda i: (0, 0))],
        out_specs=pl.BlockSpec((tm, D), lambda i: (i, 0)),
        compiler_params=_cparams(("parallel",)),
    )(x2, alpha.reshape(1, D), beta.reshape(1, D), w1, b1.reshape(1, Dff),
      w2, b2.reshape(1, D))
    return out.reshape(B, S, D)


def self_attention(qkv, mask, heads):
    # qkv: (B, S, 3D) packed projections; mask: (B, Mq, S) with Mq in {1, S}.
    B, S, D3 = qkv.shape
    D = D3 // 3
    Mq, Sk = mask.shape[1], mask.shape[2]
    scale = 1.0 / math.sqrt(D // heads)
    return pl.pallas_call(
        partial(_self_attn_kernel, scale=scale, heads=heads, d_model=D),
        out_shape=jax.ShapeDtypeStruct((B, S, D), jnp.float32),
        grid=(B,),
        in_specs=[pl.BlockSpec((1, S, D3), lambda b: (b, 0, 0)),
                  pl.BlockSpec((1, Mq, Sk), lambda b: (b, 0, 0))],
        out_specs=pl.BlockSpec((1, S, D), lambda b: (b, 0, 0)),
        compiler_params=_cparams(("parallel",)),
    )(qkv, mask.astype(jnp.int32))


def cross_attention(q, kv, mask, heads):
    # q: (B, Sq, D); kv: (B, Sk, 2D) packed K|V of encoder outputs; mask: (B, Mq, Sk).
    B, Sq, D = q.shape
    Sk = kv.shape[1]
    Mq = mask.shape[1]
    scale = 1.0 / math.sqrt(D // heads)
    return pl.pallas_call(
        partial(_cross_attn_kernel, scale=scale, heads=heads, d_model=D),
        out_shape=jax.ShapeDtypeStruct((B, Sq, D), jnp.float32),
        grid=(B,),
        in_specs=[pl.BlockSpec((1, Sq, D), lambda b: (b, 0, 0)),
                  pl.BlockSpec((1, Sk, 2 * D), lambda b: (b, 0, 0)),
                  pl.BlockSpec((1, Mq, Sk), lambda b: (b, 0, 0))],
        out_specs=pl.BlockSpec((1, Sq, D), lambda b: (b, 0, 0)),
        compiler_params=_cparams(("parallel",)),
    )(q, kv, mask.astype(jnp.int32))


# -----------------------------------------------------------------------------
# Model glue
# -----------------------------------------------------------------------------

def decoder_layer(x, e_outputs, src_mask, trg_mask, p, heads):
    # --- self-attention: norm1 fused into the packed Q|K|V projection ---
    qkv = norm_matmul(x, p["norm1"]["a"], p["norm1"]["b"],
                      p["attn1"]["wqkv"], p["attn1"]["bqkv"])        # (B, S, 3D)
    attn = self_attention(qkv, trg_mask, heads)                       # (B, S, D)
    x = linear_residual(attn, p["attn1"]["wo"], p["attn1"]["bo"], x)
    # --- cross-attention: norm2 fused into Q projection; packed K|V of e_outputs ---
    q2 = norm_matmul(x, p["norm2"]["a"], p["norm2"]["b"],
                     p["attn2"]["wq"], p["attn2"]["bq"])              # (B, S, D)
    kv2 = linear(e_outputs, p["attn2"]["wkv"], p["attn2"]["bkv"])     # (B, Ssrc, 2D)
    attn2 = cross_attention(q2, kv2, src_mask, heads)                 # (B, S, D)
    x = linear_residual(attn2, p["attn2"]["wo"], p["attn2"]["bo"], x)
    # --- FFN: norm3 + linear1 + relu + linear2 + residual in one kernel ---
    x = norm_ffn(x, p["norm3"]["a"], p["norm3"]["b"],
                 p["ff"]["w1"], p["ff"]["b1"], p["ff"]["w2"], p["ff"]["b2"])
    return x


def decoder_forward(params, trg, e_outputs, src_mask, trg_mask, heads):
    B, S = trg.shape
    D = params["embed"].shape[1]
    # TODO(synk): nn.Embedding row gather kept as an XLA gather (jnp.take); an
    # in-kernel scalar-prefetch DMA gather needs tile-aligned dynamic row offsets.
    emb = jnp.take(params["embed"], trg, axis=0)                      # (B, S, D)
    x = embed_scale_pe(emb, params["pe"][:S], D)                      # dropout == identity
    for lp in params["layers"]:
        x = decoder_layer(x, e_outputs, src_mask, trg_mask, lp, heads)
    return layer_norm(x, params["norm"]["a"], params["norm"]["b"])


def init_params(key, vocab_size, embed_dim, d_model, N, heads, d_ff, max_seq_len):
    assert embed_dim == d_model, "residual stream requires embed_dim == d_model"

    def w_init(k, din, dout):
        return jax.random.normal(k, (din, dout), jnp.float32) * 0.02

    def norm():
        return {"a": jnp.ones((d_model,), jnp.float32),
                "b": jnp.zeros((d_model,), jnp.float32)}

    def layer(k):
        ks = jax.random.split(k, 10)
        wq1, wk1, wv1, wo1 = (w_init(ks[i], d_model, d_model) for i in range(4))
        wq2, wk2, wv2, wo2 = (w_init(ks[i], d_model, d_model) for i in range(4, 8))
        return {
            "norm1": norm(),
            # self-attention: Q|K|V fused into a single (D, 3D) projection
            "attn1": {"wqkv": jnp.concatenate([wq1, wk1, wv1], axis=1),
                      "bqkv": jnp.zeros((3 * d_model,), jnp.float32),
                      "wo": wo1, "bo": jnp.zeros((d_model,), jnp.float32)},
            "norm2": norm(),
            # cross-attention: Q alone (normed x); K|V fused (encoder outputs)
            "attn2": {"wq": wq2, "bq": jnp.zeros((d_model,), jnp.float32),
                      "wkv": jnp.concatenate([wk2, wv2], axis=1),
                      "bkv": jnp.zeros((2 * d_model,), jnp.float32),
                      "wo": wo2, "bo": jnp.zeros((d_model,), jnp.float32)},
            "norm3": norm(),
            "ff": {"w1": w_init(ks[8], d_model, d_ff),
                   "b1": jnp.zeros((d_ff,), jnp.float32),
                   "w2": w_init(ks[9], d_ff, d_model),
                   "b2": jnp.zeros((d_model,), jnp.float32)},
        }

    keys = jax.random.split(key, N + 1)
    embed = jax.random.normal(keys[0], (vocab_size, embed_dim), jnp.float32) * 0.02

    # sinusoidal positional encoding table (max_seq_len, d_model)
    pos = jnp.arange(max_seq_len, dtype=jnp.float32)[:, None]
    i = jnp.arange(d_model // 2, dtype=jnp.float32)
    angle = pos / jnp.power(10000.0, (2.0 * i) / d_model)
    pe = jnp.zeros((max_seq_len, d_model), jnp.float32)
    pe = pe.at[:, 0::2].set(jnp.sin(angle)).at[:, 1::2].set(jnp.cos(angle))

    return {"embed": embed, "pe": pe,
            "layers": [layer(keys[1 + n]) for n in range(N)], "norm": norm()}


# -----------------------------------------------------------------------------
# Demo
# -----------------------------------------------------------------------------

if __name__ == "__main__":
    vocab_size = 50
    embed_dim = d_model = 32
    N = 2
    heads = 4
    d_ff = 64
    max_seq_len = 16
    dropout = 0.0            # eval mode -> identity

    B, S_trg, S_src = 2, 8, 8

    key = jax.random.PRNGKey(0)
    kp, kt, ke = jax.random.split(key, 3)

    params = init_params(kp, vocab_size, embed_dim, d_model, N, heads, d_ff, max_seq_len)

    trg = jax.random.randint(kt, (B, S_trg), 0, vocab_size, dtype=jnp.int32)
    e_outputs = jax.random.normal(ke, (B, S_src, d_model), jnp.float32)
    src_mask = jnp.ones((B, 1, S_src), jnp.int32)                        # no padding
    trg_mask = jnp.broadcast_to(
        jnp.tril(jnp.ones((S_trg, S_trg), jnp.int32))[None], (B, S_trg, S_trg))

    fwd = jax.jit(partial(decoder_forward, heads=heads))
    out = fwd(params, trg, e_outputs, src_mask, trg_mask)
    out = jax.block_until_ready(out)
    assert out.shape == (B, S_trg, d_model)
    assert bool(jnp.all(jnp.isfinite(out)))
    print("KERNEL_OK")
</pallas_src>

<mosaic_0001>
module attributes {stable_mosaic.version = 11 : i64} {
  func.func @_linear_residual_kernel(%arg0: i32, %arg1: memref<16x32xf32, #tpu.memory_space<vmem>>, %arg2: memref<32x32xf32, #tpu.memory_space<vmem>>, %arg3: memref<1x32xf32, #tpu.memory_space<vmem>>, %arg4: memref<16x32xf32, #tpu.memory_space<vmem>>, %arg5: memref<16x32xf32, #tpu.memory_space<vmem>>) attributes {dimension_semantics = [#tpu.dimension_semantics<parallel>], iteration_bounds = array<i64: 1>, scalar_prefetch = 0 : i64, scratch_operands = 0 : i64, tpu.core_type = #tpu.core_type<tc>, window_params = [{transform_indices = @transform_0, window_bounds = array<i64: 16, 32>}, {pipeline_mode = #tpu.pipeline_mode<synchronous>, transform_indices = @transform_1, window_bounds = array<i64: 32, 32>}, {pipeline_mode = #tpu.pipeline_mode<synchronous>, transform_indices = @transform_2, window_bounds = array<i64: 1, 32>}, {transform_indices = @transform_3, window_bounds = array<i64: 16, 32>}, {transform_indices = @transform_4, window_bounds = array<i64: 16, 32>}]} {
    %c0 = arith.constant 0 : index
    %c0_0 = arith.constant 0 : index
    %0 = vector.load %arg1[%c0, %c0_0] : memref<16x32xf32, #tpu.memory_space<vmem>>, vector<16x32xf32>
    %c0_1 = arith.constant 0 : index
    %c0_2 = arith.constant 0 : index
    %1 = vector.load %arg2[%c0_1, %c0_2] : memref<32x32xf32, #tpu.memory_space<vmem>>, vector<32x32xf32>
    %cst = arith.constant dense<0.000000e+00> : vector<16x32xf32>
    %2 = tpu.matmul %0, %1, %cst {dimension_numbers = #tpu.dot_dimension_numbers<[1], [0], [0], [1], [0, 0, 1, 1], [], []>} : vector<16x32xf32>, vector<32x32xf32>, vector<16x32xf32> -> vector<16x32xf32>
    %c0_3 = arith.constant 0 : index
    %c0_4 = arith.constant 0 : index
    %3 = vector.load %arg3[%c0_3, %c0_4] : memref<1x32xf32, #tpu.memory_space<vmem>>, vector<1x32xf32>
    %4 = vector.broadcast %3 : vector<1x32xf32> to vector<16x32xf32>
    %5 = arith.addf %2, %4 : vector<16x32xf32>
    %c0_5 = arith.constant 0 : index
    %c0_6 = arith.constant 0 : index
    %6 = vector.load %arg4[%c0_5, %c0_6] : memref<16x32xf32, #tpu.memory_space<vmem>>, vector<16x32xf32>
    %7 = arith.addf %5, %6 : vector<16x32xf32>
    %c0_7 = arith.constant 0 : index
    %c0_8 = arith.constant 0 : index
    %8 = vector.load %arg5[%c0_7, %c0_8] : memref<16x32xf32, #tpu.memory_space<vmem>>, vector<16x32xf32>
    tpu.vector_store %arg5[%c0_7, %c0_8], %7 {strides = array<i32>} : memref<16x32xf32, #tpu.memory_space<vmem>>, vector<16x32xf32>,
    return
  }
  func.func @transform_0(%arg0: i32) -> (i32, i32) {
    %c0_i32 = arith.constant 0 : i32
    %c0_i32_0 = arith.constant 0 : i32
    return %arg0, %c0_i32 : i32, i32
  }
  func.func @transform_1(%arg0: i32) -> (i32, i32) {
    %c0_i32 = arith.constant 0 : i32
    %c0_i32_0 = arith.constant 0 : i32
    %c0_i32_1 = arith.constant 0 : i32
    return %c0_i32, %c0_i32_0 : i32, i32
  }
  func.func @transform_2(%arg0: i32) -> (i32, i32) {
    %c0_i32 = arith.constant 0 : i32
    %c0_i32_0 = arith.constant 0 : i32
    %c0_i32_1 = arith.constant 0 : i32
    return %c0_i32, %c0_i32_0 : i32, i32
  }
  func.func @transform_3(%arg0: i32) -> (i32, i32) {
    %c0_i32 = arith.constant 0 : i32
    %c0_i32_0 = arith.constant 0 : i32
    return %arg0, %c0_i32 : i32, i32
  }
  func.func @transform_4(%arg0: i32) -> (i32, i32) {
    %c0_i32 = arith.constant 0 : i32
    %c0_i32_0 = arith.constant 0 : i32
    return %arg0, %c0_i32 : i32, i32
  }
}

module attributes {stable_mosaic.version = 11 : i64} {
  func.func @_embed_scale_pe_kernel(%arg0: i32, %arg1: memref<1x8x32xf32, #tpu.memory_space<vmem>>, %arg2: memref<8x32xf32, #tpu.memory_space<vmem>>, %arg3: memref<1x8x32xf32, #tpu.memory_space<vmem>>) attributes {dimension_semantics = [#tpu.dimension_semantics<parallel>], iteration_bounds = array<i64: 2>, scalar_prefetch = 0 : i64, scratch_operands = 0 : i64, tpu.core_type = #tpu.core_type<tc>, window_params = [{transform_indices = @transform_0, window_bounds = array<i64: 1, 8, 32>}, {pipeline_mode = #tpu.pipeline_mode<synchronous>, transform_indices = @transform_1, window_bounds = array<i64: 8, 32>}, {transform_indices = @transform_2, window_bounds = array<i64: 1, 8, 32>}]} {
    %c0 = arith.constant 0 : index
    %c0_0 = arith.constant 0 : index
    %c0_1 = arith.constant 0 : index
    %0 = vector.load %arg1[%c0, %c0_0, %c0_1] : memref<1x8x32xf32, #tpu.memory_space<vmem>>, vector<1x8x32xf32>
    %cst = arith.constant 5.65685415 : f32
    %1 = vector.broadcast %cst : f32 to vector<1x8x32xf32>
    %2 = arith.mulf %0, %1 : vector<1x8x32xf32>
    %c0_2 = arith.constant 0 : index
    %c0_3 = arith.constant 0 : index
    %3 = vector.load %arg2[%c0_2, %c0_3] : memref<8x32xf32, #tpu.memory_space<vmem>>, vector<8x32xf32>
    %4 = vector.shape_cast %3 : vector<8x32xf32> to vector<1x8x32xf32>
    %5 = arith.addf %2, %4 : vector<1x8x32xf32>
    %c0_4 = arith.constant 0 : index
    %c0_5 = arith.constant 0 : index
    %c0_6 = arith.constant 0 : index
    %6 = vector.load %arg3[%c0_4, %c0_5, %c0_6] : memref<1x8x32xf32, #tpu.memory_space<vmem>>, vector<1x8x32xf32>
    tpu.vector_store %arg3[%c0_4, %c0_5, %c0_6], %5 {strides = array<i32>} : memref<1x8x32xf32, #tpu.memory_space<vmem>>, vector<1x8x32xf32>,
    return
  }
  func.func @transform_0(%arg0: i32) -> (i32, i32, i32) {
    %c0_i32 = arith.constant 0 : i32
    %c0_i32_0 = arith.constant 0 : i32
    %c0_i32_1 = arith.constant 0 : i32
    return %arg0, %c0_i32, %c0_i32_0 : i32, i32, i32
  }
  func.func @transform_1(%arg0: i32) -> (i32, i32) {
    %c0_i32 = arith.constant 0 : i32
    %c0_i32_0 = arith.constant 0 : i32
    %c0_i32_1 = arith.constant 0 : i32
    return %c0_i32, %c0_i32_0 : i32, i32
  }
  func.func @transform_2(%arg0: i32) -> (i32, i32, i32) {
    %c0_i32 = arith.constant 0 : i32
    %c0_i32_0 = arith.constant 0 : i32
    %c0_i32_1 = arith.constant 0 : i32
    return %arg0, %c0_i32, %c0_i32_0 : i32, i32, i32
  }
}

module attributes {stable_mosaic.version = 11 : i64} {
  func.func @_norm_matmul_kernel(%arg0: i32, %arg1: memref<16x32xf32, #tpu.memory_space<vmem>>, %arg2: memref<1x32xf32, #tpu.memory_space<vmem>>, %arg3: memref<1x32xf32, #tpu.memory_space<vmem>>, %arg4: memref<32x96xf32, #tpu.memory_space<vmem>>, %arg5: memref<1x96xf32, #tpu.memory_space<vmem>>, %arg6: memref<16x96xf32, #tpu.memory_space<vmem>>) attributes {dimension_semantics = [#tpu.dimension_semantics<parallel>], iteration_bounds = array<i64: 1>, scalar_prefetch = 0 : i64, scratch_operands = 0 : i64, tpu.core_type = #tpu.core_type<tc>, window_params = [{transform_indices = @transform_0, window_bounds = array<i64: 16, 32>}, {pipeline_mode = #tpu.pipeline_mode<synchronous>, transform_indices = @transform_1, window_bounds = array<i64: 1, 32>}, {pipeline_mode = #tpu.pipeline_mode<synchronous>, transform_indices = @transform_2, window_bounds = array<i64: 1, 32>}, {pipeline_mode = #tpu.pipeline_mode<synchronous>, transform_indices = @transform_3, window_bounds = array<i64: 32, 96>}, {pipeline_mode = #tpu.pipeline_mode<synchronous>, transform_indices = @transform_4, window_bounds = array<i64: 1, 96>}, {transform_indices = @transform_5, window_bounds = array<i64: 16, 96>}]} {
    %c0 = arith.constant 0 : index
    %c0_0 = arith.constant 0 : index
    %0 = vector.load %arg1[%c0, %c0_0] : memref<16x32xf32, #tpu.memory_space<vmem>>, vector<16x32xf32>
    %c0_1 = arith.constant 0 : index
    %c0_2 = arith.constant 0 : index
    %1 = vector.load %arg2[%c0_1, %c0_2] : memref<1x32xf32, #tpu.memory_space<vmem>>, vector<1x32xf32>
    %c0_3 = arith.constant 0 : index
    %c0_4 = arith.constant 0 : index
    %2 = vector.load %arg3[%c0_3, %c0_4] : memref<1x32xf32, #tpu.memory_space<vmem>>, vector<1x32xf32>
    %cst = arith.constant dense<0.000000e+00> : vector<16xf32>
    %3 = vector.multi_reduction <add>, %0, %cst [1] : vector<16x32xf32> to vector<16xf32>
    %4 = vector.shape_cast %3 : vector<16xf32> to vector<16x1xf32>
    %cst_5 = arith.constant 3.200000e+01 : f32
    %5 = vector.broadcast %cst_5 : f32 to vector<16x1xf32>
    %6 = arith.divf %4, %5 : vector<16x1xf32>
    %7 = vector.broadcast %6 : vector<16x1xf32> to vector<16x32xf32>
    %8 = arith.subf %0, %7 : vector<16x32xf32>
    %9 = arith.mulf %8, %8 : vector<16x32xf32>
    %cst_6 = arith.constant dense<0.000000e+00> : vector<16xf32>
    %10 = vector.multi_reduction <add>, %9, %cst_6 [1] : vector<16x32xf32> to vector<16xf32>
    %11 = vector.shape_cast %10 : vector<16xf32> to vector<16x1xf32>
    %cst_7 = arith.constant 0.0322580636 : f32
    %12 = vector.broadcast %cst_7 : f32 to vector<16x1xf32>
    %13 = arith.mulf %11, %12 : vector<16x1xf32>
    %14 = math.sqrt %13 : vector<16x1xf32>
    %15 = vector.broadcast %6 : vector<16x1xf32> to vector<16x32xf32>
    %16 = arith.subf %0, %15 : vector<16x32xf32>
    %17 = vector.broadcast %1 : vector<1x32xf32> to vector<16x32xf32>
    %18 = arith.mulf %17, %16 : vector<16x32xf32>
    %cst_8 = arith.constant 9.99999997E-7 : f32
    %19 = vector.broadcast %cst_8 : f32 to vector<16x1xf32>
    %20 = arith.addf %14, %19 : vector<16x1xf32>
    %21 = vector.broadcast %20 : vector<16x1xf32> to vector<16x32xf32>
    %22 = arith.divf %18, %21 : vector<16x32xf32>
    %23 = vector.broadcast %2 : vector<1x32xf32> to vector<16x32xf32>
    %24 = arith.addf %22, %23 : vector<16x32xf32>
    %c0_9 = arith.constant 0 : index
    %c0_10 = arith.constant 0 : index
    %25 = vector.load %arg4[%c0_9, %c0_10] : memref<32x96xf32, #tpu.memory_space<vmem>>, vector<32x96xf32>
    %cst_11 = arith.constant dense<0.000000e+00> : vector<16x96xf32>
    %26 = tpu.matmul %24, %25, %cst_11 {dimension_numbers = #tpu.dot_dimension_numbers<[1], [0], [0], [1], [0, 0, 1, 1], [], []>} : vector<16x32xf32>, vector<32x96xf32>, vector<16x96xf32> -> vector<16x96xf32>
    %c0_12 = arith.constant 0 : index
    %c0_13 = arith.constant 0 : index
    %27 = vector.load %arg5[%c0_12, %c0_13] : memref<1x96xf32, #tpu.memory_space<vmem>>, vector<1x96xf32>
    %28 = vector.broadcast %27 : vector<1x96xf32> to vector<16x96xf32>
    %29 = arith.addf %26, %28 : vector<16x96xf32>
    %c0_14 = arith.constant 0 : index
    %c0_15 = arith.constant 0 : index
    %30 = vector.load %arg6[%c0_14, %c0_15] : memref<16x96xf32, #tpu.memory_space<vmem>>, vector<16x96xf32>
    tpu.vector_store %arg6[%c0_14, %c0_15], %29 {strides = array<i32>} : memref<16x96xf32, #tpu.memory_space<vmem>>, vector<16x96xf32>,
    return
  }
  func.func @transform_0(%arg0: i32) -> (i32, i32) {
    %c0_i32 = arith.constant 0 : i32
    %c0_i32_0 = arith.constant 0 : i32
    return %arg0, %c0_i32 : i32, i32
  }
  func.func @transform_1(%arg0: i32) -> (i32, i32) {
    %c0_i32 = arith.constant 0 : i32
    %c0_i32_0 = arith.constant 0 : i32
    %c0_i32_1 = arith.constant 0 : i32
    return %c0_i32, %c0_i32_0 : i32, i32
  }
  func.func @transform_2(%arg0: i32) -> (i32, i32) {
    %c0_i32 = arith.constant 0 : i32
    %c0_i32_0 = arith.constant 0 : i32
    %c0_i32_1 = arith.constant 0 : i32
    return %c0_i32, %c0_i32_0 : i32, i32
  }
  func.func @transform_3(%arg0: i32) -> (i32, i32) {
    %c0_i32 = arith.constant 0 : i32
    %c0_i32_0 = arith.constant 0 : i32
    %c0_i32_1 = arith.constant 0 : i32
    return %c0_i32, %c0_i32_0 : i32, i32
  }
  func.func @transform_4(%arg0: i32) -> (i32, i32) {
    %c0_i32 = arith.constant 0 : i32
    %c0_i32_0 = arith.constant 0 : i32
    %c0_i32_1 = arith.constant 0 : i32
    return %c0_i32, %c0_i32_0 : i32, i32
  }
  func.func @transform_5(%arg0: i32) -> (i32, i32) {
    %c0_i32 = arith.constant 0 : i32
    %c0_i32_0 = arith.constant 0 : i32
    return %arg0, %c0_i32 : i32, i32
  }
}

module attributes {stable_mosaic.version = 11 : i64} {
  func.func @_self_attn_kernel(%arg0: i32, %arg1: memref<1x8x96xf32, #tpu.memory_space<vmem>>, %arg2: memref<1x8x8xi32, #tpu.memory_space<vmem>>, %arg3: memref<1x8x32xf32, #tpu.memory_space<vmem>>) attributes {dimension_semantics = [#tpu.dimension_semantics<parallel>], iteration_bounds = array<i64: 2>, scalar_prefetch = 0 : i64, scratch_operands = 0 : i64, tpu.core_type = #tpu.core_type<tc>, window_params = [{transform_indices = @transform_0, window_bounds = array<i64: 1, 8, 96>}, {transform_indices = @transform_1, window_bounds = array<i64: 1, 8, 8>}, {transform_indices = @transform_2, window_bounds = array<i64: 1, 8, 32>}]} {
    %c0 = arith.constant 0 : index
    %c0_0 = arith.constant 0 : index
    %c0_1 = arith.constant 0 : index
    %0 = vector.load %arg1[%c0, %c0_0, %c0_1] : memref<1x8x96xf32, #tpu.memory_space<vmem>>, vector<1x8x96xf32>
    %1 = vector.shape_cast %0 : vector<1x8x96xf32> to vector<8x96xf32>
    %2 = vector.extract_strided_slice %1 {offsets = [0, 0], sizes = [8, 32], strides = [1, 1]} : vector<8x96xf32> to vector<8x32xf32>
    %3 = vector.extract_strided_slice %1 {offsets = [0, 32], sizes = [8, 32], strides = [1, 1]} : vector<8x96xf32> to vector<8x32xf32>
    %4 = vector.extract_strided_slice %1 {offsets = [0, 64], sizes = [8, 32], strides = [1, 1]} : vector<8x96xf32> to vector<8x32xf32>
    %c0_2 = arith.constant 0 : index
    %c0_3 = arith.constant 0 : index
    %c0_4 = arith.constant 0 : index
    %5 = vector.load %arg2[%c0_2, %c0_3, %c0_4] : memref<1x8x8xi32, #tpu.memory_space<vmem>>, vector<1x8x8xi32>
    %6 = vector.shape_cast %5 : vector<1x8x8xi32> to vector<8x8xi32>
    %7 = vector.extract_strided_slice %2 {offsets = [0, 0], sizes = [8, 8], strides = [1, 1]} : vector<8x32xf32> to vector<8x8xf32>
    %8 = vector.extract_strided_slice %3 {offsets = [0, 0], sizes = [8, 8], strides = [1, 1]} : vector<8x32xf32> to vector<8x8xf32>
    %9 = vector.extract_strided_slice %4 {offsets = [0, 0], sizes = [8, 8], strides = [1, 1]} : vector<8x32xf32> to vector<8x8xf32>
    %cst = arith.constant dense<0.000000e+00> : vector<8x8xf32>
    %10 = tpu.matmul %7, %8, %cst {dimension_numbers = #tpu.dot_dimension_numbers<[1], [1], [0], [0], [0, 0, 1, 0], [], []>} : vector<8x8xf32>, vector<8x8xf32>, vector<8x8xf32> -> vector<8x8xf32>
    %cst_5 = arith.constant 0.353553385 : f32
    %11 = vector.broadcast %cst_5 : f32 to vector<8x8xf32>
    %12 = arith.mulf %10, %11 : vector<8x8xf32>
    %c0_i32 = arith.constant 0 : i32
    %13 = vector.broadcast %c0_i32 : i32 to vector<8x8xi32>
    %14 = arith.cmpi eq, %6, %13 : vector<8x8xi32>
    %cst_6 = arith.constant -1.000000e+09 : f32
    %15 = vector.broadcast %cst_6 : f32 to vector<8x8xf32>
    %16 = arith.select %14, %15, %12 : vector<8x8xi1>, vector<8x8xf32>
    %cst_7 = arith.constant dense<0xFF800000> : vector<8xf32>
    %17 = vector.multi_reduction <maximumf>, %16, %cst_7 [1] : vector<8x8xf32> to vector<8xf32>
    %18 = vector.shape_cast %17 : vector<8xf32> to vector<8x1xf32>
    %19 = vector.broadcast %18 : vector<8x1xf32> to vector<8x8xf32>
    %20 = arith.subf %16, %19 : vector<8x8xf32>
    %21 = math.exp %20 : vector<8x8xf32>
    %cst_8 = arith.constant dense<0.000000e+00> : vector<8xf32>
    %22 = vector.multi_reduction <add>, %21, %cst_8 [1] : vector<8x8xf32> to vector<8xf32>
    %23 = vector.shape_cast %22 : vector<8xf32> to vector<8x1xf32>
    %cst_9 = arith.constant 1.000000e-30 : f32
    %24 = vector.broadcast %cst_9 : f32 to vector<8x1xf32>
    %25 = arith.maximumf %23, %24 : vector<8x1xf32>
    %26 = tpu.reciprocal %25 {approx = true} : vector<8x1xf32> -> vector<8x1xf32>
    %27 = vector.broadcast %26 : vector<8x1xf32> to vector<8x8xf32>
    %28 = arith.mulf %21, %27 : vector<8x8xf32>
    %cst_10 = arith.constant dense<0.000000e+00> : vector<8x8xf32>
    %29 = tpu.matmul %28, %9, %cst_10 {dimension_numbers = #tpu.dot_dimension_numbers<[1], [0], [0], [1], [0, 0, 1, 1], [], []>} : vector<8x8xf32>, vector<8x8xf32>, vector<8x8xf32> -> vector<8x8xf32>
    %30 = vector.extract_strided_slice %2 {offsets = [0, 8], sizes = [8, 8], strides = [1, 1]} : vector<8x32xf32> to vector<8x8xf32>
    %31 = vector.extract_strided_slice %3 {offsets = [0, 8], sizes = [8, 8], strides = [1, 1]} : vector<8x32xf32> to vector<8x8xf32>
    %32 = vector.extract_strided_slice %4 {offsets = [0, 8], sizes = [8, 8], strides = [1, 1]} : vector<8x32xf32> to vector<8x8xf32>
    %cst_11 = arith.constant dense<0.000000e+00> : vector<8x8xf32>
    %33 = tpu.matmul %30, %31, %cst_11 {dimension_numbers = #tpu.dot_dimension_numbers<[1], [1], [0], [0], [0, 0, 1, 0], [], []>} : vector<8x8xf32>, vector<8x8xf32>, vector<8x8xf32> -> vector<8x8xf32>
    %cst_12 = arith.constant 0.353553385 : f32
    %34 = vector.broadcast %cst_12 : f32 to vector<8x8xf32>
    %35 = arith.mulf %33, %34 : vector<8x8xf32>
    %c0_i32_13 = arith.constant 0 : i32
    %36 = vector.broadcast %c0_i32_13 : i32 to vector<8x8xi32>
    %37 = arith.cmpi eq, %6, %36 : vector<8x8xi32>
    %cst_14 = arith.constant -1.000000e+09 : f32
    %38 = vector.broadcast %cst_14 : f32 to vector<8x8xf32>
    %39 = arith.select %37, %38, %35 : vector<8x8xi1>, vector<8x8xf32>
    %cst_15 = arith.constant dense<0xFF800000> : vector<8xf32>
    %40 = vector.multi_reduction <maximumf>, %39, %cst_15 [1] : vector<8x8xf32> to vector<8xf32>
    %41 = vector.shape_cast %40 : vector<8xf32> to vector<8x1xf32>
    %42 = vector.broadcast %41 : vector<8x1xf32> to vector<8x8xf32>
    %43 = arith.subf %39, %42 : vector<8x8xf32>
    %44 = math.exp %43 : vector<8x8xf32>
    %cst_16 = arith.constant dense<0.000000e+00> : vector<8xf32>
    %45 = vector.multi_reduction <add>, %44, %cst_16 [1] : vector<8x8xf32> to vector<8xf32>
    %46 = vector.shape_cast %45 : vector<8xf32> to vector<8x1xf32>
    %cst_17 = arith.constant 1.000000e-30 : f32
    %47 = vector.broadcast %cst_17 : f32 to vector<8x1xf32>
    %48 = arith.maximumf %46, %47 : vector<8x1xf32>
    %49 = tpu.reciprocal %48 {approx = true} : vector<8x1xf32> -> vector<8x1xf32>
    %50 = vector.broadcast %49 : vector<8x1xf32> to vector<8x8xf32>
    %51 = arith.mulf %44, %50 : vector<8x8xf32>
    %cst_18 = arith.constant dense<0.000000e+00> : vector<8x8xf32>
    %52 = tpu.matmul %51, %32, %cst_18 {dimension_numbers = #tpu.dot_dimension_numbers<[1], [0], [0], [1], [0, 0, 1, 1], [], []>} : vector<8x8xf32>, vector<8x8xf32>, vector<8x8xf32> -> vector<8x8xf32>
    %53 = vector.extract_strided_slice %2 {offsets = [0, 16], sizes = [8, 8], strides = [1, 1]} : vector<8x32xf32> to vector<8x8xf32>
    %54 = vector.extract_strided_slice %3 {offsets = [0, 16], sizes = [8, 8], strides = [1, 1]} : vector<8x32xf32> to vector<8x8xf32>
    %55 = vector.extract_strided_slice %4 {offsets = [0, 16], sizes = [8, 8], strides = [1, 1]} : vector<8x32xf32> to vector<8x8xf32>
    %cst_19 = arith.constant dense<0.000000e+00> : vector<8x8xf32>
    %56 = tpu.matmul %53, %54, %cst_19 {dimension_numbers = #tpu.dot_dimension_numbers<[1], [1], [0], [0], [0, 0, 1, 0], [], []>} : vector<8x8xf32>, vector<8x8xf32>, vector<8x8xf32> -> vector<8x8xf32>
    %cst_20 = arith.constant 0.353553385 : f32
    %57 = vector.broadcast %cst_20 : f32 to vector<8x8xf32>
    %58 = arith.mulf %56, %57 : vector<8x8xf32>
    %c0_i32_21 = arith.constant 0 : i32
    %59 = vector.broadcast %c0_i32_21 : i32 to vector<8x8xi32>
    %60 = arith.cmpi eq, %6, %59 : vector<8x8xi32>
    %cst_22 = arith.constant -1.000000e+09 : f32
    %61 = vector.broadcast %cst_22 : f32 to vector<8x8xf32>
    %62 = arith.select %60, %61, %58 : vector<8x8xi1>, vector<8x8xf32>
    %cst_23 = arith.constant dense<0xFF800000> : vector<8xf32>
    %63 = vector.multi_reduction <maximumf>, %62, %cst_23 [1] : vector<8x8xf32> to vector<8xf32>
    %64 = vector.shape_cast %63 : vector<8xf32> to vector<8x1xf32>
    %65 = vector.broadcast %64 : vector<8x1xf32> to vector<8x8xf32>
    %66 = arith.subf %62, %65 : vector<8x8xf32>
    %67 = math.exp %66 : vector<8x8xf32>
    %cst_24 = arith.constant dense<0.000000e+00> : vector<8xf32>
    %68 = vector.multi_reduction <add>, %67, %cst_24 [1] : vector<8x8xf32> to vector<8xf32>
    %69 = vector.shape_cast %68 : vector<8xf32> to vector<8x1xf32>
    %cst_25 = arith.constant 1.000000e-30 : f32
    %70 = vector.broadcast %cst_25 : f32 to vector<8x1xf32>
    %71 = arith.maximumf %69, %70 : vector<8x1xf32>
    %72 = tpu.reciprocal %71 {approx = true} : vector<8x1xf32> -> vector<8x1xf32>
    %73 = vector.broadcast %72 : vector<8x1xf32> to vector<8x8xf32>
    %74 = arith.mulf %67, %73 : vector<8x8xf32>
    %cst_26 = arith.constant dense<0.000000e+00> : vector<8x8xf32>
    %75 = tpu.matmul %74, %55, %cst_26 {dimension_numbers = #tpu.dot_dimension_numbers<[1], [0], [0], [1], [0, 0, 1, 1], [], []>} : vector<8x8xf32>, vector<8x8xf32>, vector<8x8xf32> -> vector<8x8xf32>
    %76 = vector.extract_strided_slice %2 {offsets = [0, 24], sizes = [8, 8], strides = [1, 1]} : vector<8x32xf32> to vector<8x8xf32>
    %77 = vector.extract_strided_slice %3 {offsets = [0, 24], sizes = [8, 8], strides = [1, 1]} : vector<8x32xf32> to vector<8x8xf32>
    %78 = vector.extract_strided_slice %4 {offsets = [0, 24], sizes = [8, 8], strides = [1, 1]} : vector<8x32xf32> to vector<8x8xf32>
    %cst_27 = arith.constant dense<0.000000e+00> : vector<8x8xf32>
    %79 = tpu.matmul %76, %77, %cst_27 {dimension_numbers = #tpu.dot_dimension_numbers<[1], [1], [0], [0], [0, 0, 1, 0], [], []>} : vector<8x8xf32>, vector<8x8xf32>, vector<8x8xf32> -> vector<8x8xf32>
    %cst_28 = arith.constant 0.353553385 : f32
    %80 = vector.broadcast %cst_28 : f32 to vector<8x8xf32>
    %81 = arith.mulf %79, %80 : vector<8x8xf32>
    %c0_i32_29 = arith.constant 0 : i32
    %82 = vector.broadcast %c0_i32_29 : i32 to vector<8x8xi32>
    %83 = arith.cmpi eq, %6, %82 : vector<8x8xi32>
    %cst_30 = arith.constant -1.000000e+09 : f32
    %84 = vector.broadcast %cst_30 : f32 to vector<8x8xf32>
    %85 = arith.select %83, %84, %81 : vector<8x8xi1>, vector<8x8xf32>
    %cst_31 = arith.constant dense<0xFF800000> : vector<8xf32>
    %86 = vector.multi_reduction <maximumf>, %85, %cst_31 [1] : vector<8x8xf32> to vector<8xf32>
    %87 = vector.shape_cast %86 : vector<8xf32> to vector<8x1xf32>
    %88 = vector.broadcast %87 : vector<8x1xf32> to vector<8x8xf32>
    %89 = arith.subf %85, %88 : vector<8x8xf32>
    %90 = math.exp %89 : vector<8x8xf32>
    %cst_32 = arith.constant dense<0.000000e+00> : vector<8xf32>
    %91 = vector.multi_reduction <add>, %90, %cst_32 [1] : vector<8x8xf32> to vector<8xf32>
    %92 = vector.shape_cast %91 : vector<8xf32> to vector<8x1xf32>
    %cst_33 = arith.constant 1.000000e-30 : f32
    %93 = vector.broadcast %cst_33 : f32 to vector<8x1xf32>
    %94 = arith.maximumf %92, %93 : vector<8x1xf32>
    %95 = tpu.reciprocal %94 {approx = true} : vector<8x1xf32> -> vector<8x1xf32>
    %96 = vector.broadcast %95 : vector<8x1xf32> to vector<8x8xf32>
    %97 = arith.mulf %90, %96 : vector<8x8xf32>
    %cst_34 = arith.constant dense<0.000000e+00> : vector<8x8xf32>
    %98 = tpu.matmul %97, %78, %cst_34 {dimension_numbers = #tpu.dot_dimension_numbers<[1], [0], [0], [1], [0, 0, 1, 1], [], []>} : vector<8x8xf32>, vector<8x8xf32>, vector<8x8xf32> -> vector<8x8xf32>
    %99 = tpu.concatenate %29, %52, %75, %98 in 1 : vector<8x8xf32>, vector<8x8xf32>, vector<8x8xf32>, vector<8x8xf32> -> vector<8x32xf32>
    %c0_35 = arith.constant 0 : index
    %c0_36 = arith.constant 0 : index
    %c0_37 = arith.constant 0 : index
    %100 = vector.load %arg3[%c0_35, %c0_36, %c0_37] : memref<1x8x32xf32, #tpu.memory_space<vmem>>, vector<1x8x32xf32>
    %101 = vector.shape_cast %100 : vector<1x8x32xf32> to vector<8x32xf32>
    %102 = vector.shape_cast %99 : vector<8x32xf32> to vector<1x8x32xf32>
    tpu.vector_store %arg3[%c0_35, %c0_36, %c0_37], %102 {strides = array<i32>} : memref<1x8x32xf32, #tpu.memory_space<vmem>>, vector<1x8x32xf32>,
    return
  }
  func.func @transform_0(%arg0: i32) -> (i32, i32, i32) {
    %c0_i32 = arith.constant 0 : i32
    %c0_i32_0 = arith.constant 0 : i32
    %c0_i32_1 = arith.constant 0 : i32
    return %arg0, %c0_i32, %c0_i32_0 : i32, i32, i32
  }
  func.func @transform_1(%arg0: i32) -> (i32, i32, i32) {
    %c0_i32 = arith.constant 0 : i32
    %c0_i32_0 = arith.constant 0 : i32
    %c0_i32_1 = arith.constant 0 : i32
    return %arg0, %c0_i32, %c0_i32_0 : i32, i32, i32
  }
  func.func @transform_2(%arg0: i32) -> (i32, i32, i32) {
    %c0_i32 = arith.constant 0 : i32
    %c0_i32_0 = arith.constant 0 : i32
    %c0_i32_1 = arith.constant 0 : i32
    return %arg0, %c0_i32, %c0_i32_0 : i32, i32, i32
  }
}

module attributes {stable_mosaic.version = 11 : i64} {
  func.func @_linear_kernel(%arg0: i32, %arg1: memref<16x32xf32, #tpu.memory_space<vmem>>, %arg2: memref<32x64xf32, #tpu.memory_space<vmem>>, %arg3: memref<1x64xf32, #tpu.memory_space<vmem>>, %arg4: memref<16x64xf32, #tpu.memory_space<vmem>>) attributes {dimension_semantics = [#tpu.dimension_semantics<parallel>], iteration_bounds = array<i64: 1>, scalar_prefetch = 0 : i64, scratch_operands = 0 : i64, tpu.core_type = #tpu.core_type<tc>, window_params = [{transform_indices = @transform_0, window_bounds = array<i64: 16, 32>}, {pipeline_mode = #tpu.pipeline_mode<synchronous>, transform_indices = @transform_1, window_bounds = array<i64: 32, 64>}, {pipeline_mode = #tpu.pipeline_mode<synchronous>, transform_indices = @transform_2, window_bounds = array<i64: 1, 64>}, {transform_indices = @transform_3, window_bounds = array<i64: 16, 64>}]} {
    %c0 = arith.constant 0 : index
    %c0_0 = arith.constant 0 : index
    %0 = vector.load %arg1[%c0, %c0_0] : memref<16x32xf32, #tpu.memory_space<vmem>>, vector<16x32xf32>
    %c0_1 = arith.constant 0 : index
    %c0_2 = arith.constant 0 : index
    %1 = vector.load %arg2[%c0_1, %c0_2] : memref<32x64xf32, #tpu.memory_space<vmem>>, vector<32x64xf32>
    %cst = arith.constant dense<0.000000e+00> : vector<16x64xf32>
    %2 = tpu.matmul %0, %1, %cst {dimension_numbers = #tpu.dot_dimension_numbers<[1], [0], [0], [1], [0, 0, 1, 1], [], []>} : vector<16x32xf32>, vector<32x64xf32>, vector<16x64xf32> -> vector<16x64xf32>
    %c0_3 = arith.constant 0 : index
    %c0_4 = arith.constant 0 : index
    %3 = vector.load %arg3[%c0_3, %c0_4] : memref<1x64xf32, #tpu.memory_space<vmem>>, vector<1x64xf32>
    %4 = vector.broadcast %3 : vector<1x64xf32> to vector<16x64xf32>
    %5 = arith.addf %2, %4 : vector<16x64xf32>
    %c0_5 = arith.constant 0 : index
    %c0_6 = arith.constant 0 : index
    %6 = vector.load %arg4[%c0_5, %c0_6] : memref<16x64xf32, #tpu.memory_space<vmem>>, vector<16x64xf32>
    tpu.vector_store %arg4[%c0_5, %c0_6], %5 {strides = array<i32>} : memref<16x64xf32, #tpu.memory_space<vmem>>, vector<16x64xf32>,
    return
  }
  func.func @transform_0(%arg0: i32) -> (i32, i32) {
    %c0_i32 = arith.constant 0 : i32
    %c0_i32_0 = arith.constant 0 : i32
    return %arg0, %c0_i32 : i32, i32
  }
  func.func @transform_1(%arg0: i32) -> (i32, i32) {
    %c0_i32 = arith.constant 0 : i32
    %c0_i32_0 = arith.constant 0 : i32
    %c0_i32_1 = arith.constant 0 : i32
    return %c0_i32, %c0_i32_0 : i32, i32
  }
  func.func @transform_2(%arg0: i32) -> (i32, i32) {
    %c0_i32 = arith.constant 0 : i32
    %c0_i32_0 = arith.constant 0 : i32
    %c0_i32_1 = arith.constant 0 : i32
    return %c0_i32, %c0_i32_0 : i32, i32
  }
  func.func @transform_3(%arg0: i32) -> (i32, i32) {
    %c0_i32 = arith.constant 0 : i32
    %c0_i32_0 = arith.constant 0 : i32
    return %arg0, %c0_i32 : i32, i32
  }
}

module attributes {stable_mosaic.version = 11 : i64} {
  func.func @_norm_matmul_kernel(%arg0: i32, %arg1: memref<16x32xf32, #tpu.memory_space<vmem>>, %arg2: memref<1x32xf32, #tpu.memory_space<vmem>>, %arg3: memref<1x32xf32, #tpu.memory_space<vmem>>, %arg4: memref<32x32xf32, #tpu.memory_space<vmem>>, %arg5: memref<1x32xf32, #tpu.memory_space<vmem>>, %arg6: memref<16x32xf32, #tpu.memory_space<vmem>>) attributes {dimension_semantics = [#tpu.dimension_semantics<parallel>], iteration_bounds = array<i64: 1>, scalar_prefetch = 0 : i64, scratch_operands = 0 : i64, tpu.core_type = #tpu.core_type<tc>, window_params = [{transform_indices = @transform_0, window_bounds = array<i64: 16, 32>}, {pipeline_mode = #tpu.pipeline_mode<synchronous>, transform_indices = @transform_1, window_bounds = array<i64: 1, 32>}, {pipeline_mode = #tpu.pipeline_mode<synchronous>, transform_indices = @transform_2, window_bounds = array<i64: 1, 32>}, {pipeline_mode = #tpu.pipeline_mode<synchronous>, transform_indices = @transform_3, window_bounds = array<i64: 32, 32>}, {pipeline_mode = #tpu.pipeline_mode<synchronous>, transform_indices = @transform_4, window_bounds = array<i64: 1, 32>}, {transform_indices = @transform_5, window_bounds = array<i64: 16, 32>}]} {
    %c0 = arith.constant 0 : index
    %c0_0 = arith.constant 0 : index
    %0 = vector.load %arg1[%c0, %c0_0] : memref<16x32xf32, #tpu.memory_space<vmem>>, vector<16x32xf32>
    %c0_1 = arith.constant 0 : index
    %c0_2 = arith.constant 0 : index
    %1 = vector.load %arg2[%c0_1, %c0_2] : memref<1x32xf32, #tpu.memory_space<vmem>>, vector<1x32xf32>
    %c0_3 = arith.constant 0 : index
    %c0_4 = arith.constant 0 : index
    %2 = vector.load %arg3[%c0_3, %c0_4] : memref<1x32xf32, #tpu.memory_space<vmem>>, vector<1x32xf32>
    %cst = arith.constant dense<0.000000e+00> : vector<16xf32>
    %3 = vector.multi_reduction <add>, %0, %cst [1] : vector<16x32xf32> to vector<16xf32>
    %4 = vector.shape_cast %3 : vector<16xf32> to vector<16x1xf32>
    %cst_5 = arith.constant 3.200000e+01 : f32
    %5 = vector.broadcast %cst_5 : f32 to vector<16x1xf32>
    %6 = arith.divf %4, %5 : vector<16x1xf32>
    %7 = vector.broadcast %6 : vector<16x1xf32> to vector<16x32xf32>
    %8 = arith.subf %0, %7 : vector<16x32xf32>
    %9 = arith.mulf %8, %8 : vector<16x32xf32>
    %cst_6 = arith.constant dense<0.000000e+00> : vector<16xf32>
    %10 = vector.multi_reduction <add>, %9, %cst_6 [1] : vector<16x32xf32> to vector<16xf32>
    %11 = vector.shape_cast %10 : vector<16xf32> to vector<16x1xf32>
    %cst_7 = arith.constant 0.0322580636 : f32
    %12 = vector.broadcast %cst_7 : f32 to vector<16x1xf32>
    %13 = arith.mulf %11, %12 : vector<16x1xf32>
    %14 = math.sqrt %13 : vector<16x1xf32>
    %15 = vector.broadcast %6 : vector<16x1xf32> to vector<16x32xf32>
    %16 = arith.subf %0, %15 : vector<16x32xf32>
    %17 = vector.broadcast %1 : vector<1x32xf32> to vector<16x32xf32>
    %18 = arith.mulf %17, %16 : vector<16x32xf32>
    %cst_8 = arith.constant 9.99999997E-7 : f32
    %19 = vector.broadcast %cst_8 : f32 to vector<16x1xf32>
    %20 = arith.addf %14, %19 : vector<16x1xf32>
    %21 = vector.broadcast %20 : vector<16x1xf32> to vector<16x32xf32>
    %22 = arith.divf %18, %21 : vector<16x32xf32>
    %23 = vector.broadcast %2 : vector<1x32xf32> to vector<16x32xf32>
    %24 = arith.addf %22, %23 : vector<16x32xf32>
    %c0_9 = arith.constant 0 : index
    %c0_10 = arith.constant 0 : index
    %25 = vector.load %arg4[%c0_9, %c0_10] : memref<32x32xf32, #tpu.memory_space<vmem>>, vector<32x32xf32>
    %cst_11 = arith.constant dense<0.000000e+00> : vector<16x32xf32>
    %26 = tpu.matmul %24, %25, %cst_11 {dimension_numbers = #tpu.dot_dimension_numbers<[1], [0], [0], [1], [0, 0, 1, 1], [], []>} : vector<16x32xf32>, vector<32x32xf32>, vector<16x32xf32> -> vector<16x32xf32>
    %c0_12 = arith.constant 0 : index
    %c0_13 = arith.constant 0 : index
    %27 = vector.load %arg5[%c0_12, %c0_13] : memref<1x32xf32, #tpu.memory_space<vmem>>, vector<1x32xf32>
    %28 = vector.broadcast %27 : vector<1x32xf32> to vector<16x32xf32>
    %29 = arith.addf %26, %28 : vector<16x32xf32>
    %c0_14 = arith.constant 0 : index
    %c0_15 = arith.constant 0 : index
    %30 = vector.load %arg6[%c0_14, %c0_15] : memref<16x32xf32, #tpu.memory_space<vmem>>, vector<16x32xf32>
    tpu.vector_store %arg6[%c0_14, %c0_15], %29 {strides = array<i32>} : memref<16x32xf32, #tpu.memory_space<vmem>>, vector<16x32xf32>,
    return
  }
  func.func @transform_0(%arg0: i32) -> (i32, i32) {
    %c0_i32 = arith.constant 0 : i32
    %c0_i32_0 = arith.constant 0 : i32
    return %arg0, %c0_i32 : i32, i32
  }
  func.func @transform_1(%arg0: i32) -> (i32, i32) {
    %c0_i32 = arith.constant 0 : i32
    %c0_i32_0 = arith.constant 0 : i32
    %c0_i32_1 = arith.constant 0 : i32
    return %c0_i32, %c0_i32_0 : i32, i32
  }
  func.func @transform_2(%arg0: i32) -> (i32, i32) {
    %c0_i32 = arith.constant 0 : i32
    %c0_i32_0 = arith.constant 0 : i32
    %c0_i32_1 = arith.constant 0 : i32
    return %c0_i32, %c0_i32_0 : i32, i32
  }
  func.func @transform_3(%arg0: i32) -> (i32, i32) {
    %c0_i32 = arith.constant 0 : i32
    %c0_i32_0 = arith.constant 0 : i32
    %c0_i32_1 = arith.constant 0 : i32
    return %c0_i32, %c0_i32_0 : i32, i32
  }
  func.func @transform_4(%arg0: i32) -> (i32, i32) {
    %c0_i32 = arith.constant 0 : i32
    %c0_i32_0 = arith.constant 0 : i32
    %c0_i32_1 = arith.constant 0 : i32
    return %c0_i32, %c0_i32_0 : i32, i32
  }
  func.func @transform_5(%arg0: i32) -> (i32, i32) {
    %c0_i32 = arith.constant 0 : i32
    %c0_i32_0 = arith.constant 0 : i32
    return %arg0, %c0_i32 : i32, i32
  }
}

module attributes {stable_mosaic.version = 11 : i64} {
  func.func @_cross_attn_kernel(%arg0: i32, %arg1: memref<1x8x32xf32, #tpu.memory_space<vmem>>, %arg2: memref<1x8x64xf32, #tpu.memory_space<vmem>>, %arg3: memref<1x1x8xi32, #tpu.memory_space<vmem>>, %arg4: memref<1x8x32xf32, #tpu.memory_space<vmem>>) attributes {dimension_semantics = [#tpu.dimension_semantics<parallel>], iteration_bounds = array<i64: 2>, scalar_prefetch = 0 : i64, scratch_operands = 0 : i64, tpu.core_type = #tpu.core_type<tc>, window_params = [{transform_indices = @transform_0, window_bounds = array<i64: 1, 8, 32>}, {transform_indices = @transform_1, window_bounds = array<i64: 1, 8, 64>}, {transform_indices = @transform_2, window_bounds = array<i64: 1, 1, 8>}, {transform_indices = @transform_3, window_bounds = array<i64: 1, 8, 32>}]} {
    %c0 = arith.constant 0 : index
    %c0_0 = arith.constant 0 : index
    %c0_1 = arith.constant 0 : index
    %0 = vector.load %arg1[%c0, %c0_0, %c0_1] : memref<1x8x32xf32, #tpu.memory_space<vmem>>, vector<1x8x32xf32>
    %1 = vector.shape_cast %0 : vector<1x8x32xf32> to vector<8x32xf32>
    %c0_2 = arith.constant 0 : index
    %c0_3 = arith.constant 0 : index
    %c0_4 = arith.constant 0 : index
    %2 = vector.load %arg2[%c0_2, %c0_3, %c0_4] : memref<1x8x64xf32, #tpu.memory_space<vmem>>, vector<1x8x64xf32>
    %3 = vector.shape_cast %2 : vector<1x8x64xf32> to vector<8x64xf32>
    %4 = vector.extract_strided_slice %3 {offsets = [0, 0], sizes = [8, 32], strides = [1, 1]} : vector<8x64xf32> to vector<8x32xf32>
    %5 = vector.extract_strided_slice %3 {offsets = [0, 32], sizes = [8, 32], strides = [1, 1]} : vector<8x64xf32> to vector<8x32xf32>
    %c0_5 = arith.constant 0 : index
    %c0_6 = arith.constant 0 : index
    %c0_7 = arith.constant 0 : index
    %6 = vector.load %arg3[%c0_5, %c0_6, %c0_7] : memref<1x1x8xi32, #tpu.memory_space<vmem>>, vector<1x1x8xi32>
    %7 = vector.shape_cast %6 : vector<1x1x8xi32> to vector<1x8xi32>
    %8 = vector.extract_strided_slice %1 {offsets = [0, 0], sizes = [8, 8], strides = [1, 1]} : vector<8x32xf32> to vector<8x8xf32>
    %9 = vector.extract_strided_slice %4 {offsets = [0, 0], sizes = [8, 8], strides = [1, 1]} : vector<8x32xf32> to vector<8x8xf32>
    %10 = vector.extract_strided_slice %5 {offsets = [0, 0], sizes = [8, 8], strides = [1, 1]} : vector<8x32xf32> to vector<8x8xf32>
    %cst = arith.constant dense<0.000000e+00> : vector<8x8xf32>
    %11 = tpu.matmul %8, %9, %cst {dimension_numbers = #tpu.dot_dimension_numbers<[1], [1], [0], [0], [0, 0, 1, 0], [], []>} : vector<8x8xf32>, vector<8x8xf32>, vector<8x8xf32> -> vector<8x8xf32>
    %cst_8 = arith.constant 0.353553385 : f32
    %12 = vector.broadcast %cst_8 : f32 to vector<8x8xf32>
    %13 = arith.mulf %11, %12 : vector<8x8xf32>
    %c0_i32 = arith.constant 0 : i32
    %14 = vector.broadcast %c0_i32 : i32 to vector<1x8xi32>
    %15 = arith.cmpi eq, %7, %14 : vector<1x8xi32>
    %cst_9 = arith.constant -1.000000e+09 : f32
    %16 = vector.shape_cast %15 : vector<1x8xi1> to vector<1x8xi1>
    %17 = vector.broadcast %16 : vector<1x8xi1> to vector<8x8xi1>
    %18 = vector.broadcast %cst_9 : f32 to vector<8x8xf32>
    %19 = arith.select %17, %18, %13 : vector<8x8xi1>, vector<8x8xf32>
    %cst_10 = arith.constant dense<0xFF800000> : vector<8xf32>
    %20 = vector.multi_reduction <maximumf>, %19, %cst_10 [1] : vector<8x8xf32> to vector<8xf32>
    %21 = vector.shape_cast %20 : vector<8xf32> to vector<8x1xf32>
    %22 = vector.broadcast %21 : vector<8x1xf32> to vector<8x8xf32>
    %23 = arith.subf %19, %22 : vector<8x8xf32>
    %24 = math.exp %23 : vector<8x8xf32>
    %cst_11 = arith.constant dense<0.000000e+00> : vector<8xf32>
    %25 = vector.multi_reduction <add>, %24, %cst_11 [1] : vector<8x8xf32> to vector<8xf32>
    %26 = vector.shape_cast %25 : vector<8xf32> to vector<8x1xf32>
    %cst_12 = arith.constant 1.000000e-30 : f32
    %27 = vector.broadcast %cst_12 : f32 to vector<8x1xf32>
    %28 = arith.maximumf %26, %27 : vector<8x1xf32>
    %29 = tpu.reciprocal %28 {approx = true} : vector<8x1xf32> -> vector<8x1xf32>
    %30 = vector.broadcast %29 : vector<8x1xf32> to vector<8x8xf32>
    %31 = arith.mulf %24, %30 : vector<8x8xf32>
    %cst_13 = arith.constant dense<0.000000e+00> : vector<8x8xf32>
    %32 = tpu.matmul %31, %10, %cst_13 {dimension_numbers = #tpu.dot_dimension_numbers<[1], [0], [0], [1], [0, 0, 1, 1], [], []>} : vector<8x8xf32>, vector<8x8xf32>, vector<8x8xf32> -> vector<8x8xf32>
    %33 = vector.extract_strided_slice %1 {offsets = [0, 8], sizes = [8, 8], strides = [1, 1]} : vector<8x32xf32> to vector<8x8xf32>
    %34 = vector.extract_strided_slice %4 {offsets = [0, 8], sizes = [8, 8], strides = [1, 1]} : vector<8x32xf32> to vector<8x8xf32>
    %35 = vector.extract_strided_slice %5 {offsets = [0, 8], sizes = [8, 8], strides = [1, 1]} : vector<8x32xf32> to vector<8x8xf32>
    %cst_14 = arith.constant dense<0.000000e+00> : vector<8x8xf32>
    %36 = tpu.matmul %33, %34, %cst_14 {dimension_numbers = #tpu.dot_dimension_numbers<[1], [1], [0], [0], [0, 0, 1, 0], [], []>} : vector<8x8xf32>, vector<8x8xf32>, vector<8x8xf32> -> vector<8x8xf32>
    %cst_15 = arith.constant 0.353553385 : f32
    %37 = vector.broadcast %cst_15 : f32 to vector<8x8xf32>
    %38 = arith.mulf %36, %37 : vector<8x8xf32>
    %c0_i32_16 = arith.constant 0 : i32
    %39 = vector.broadcast %c0_i32_16 : i32 to vector<1x8xi32>
    %40 = arith.cmpi eq, %7, %39 : vector<1x8xi32>
    %cst_17 = arith.constant -1.000000e+09 : f32
    %41 = vector.shape_cast %40 : vector<1x8xi1> to vector<1x8xi1>
    %42 = vector.broadcast %41 : vector<1x8xi1> to vector<8x8xi1>
    %43 = vector.broadcast %cst_17 : f32 to vector<8x8xf32>
    %44 = arith.select %42, %43, %38 : vector<8x8xi1>, vector<8x8xf32>
    %cst_18 = arith.constant dense<0xFF800000> : vector<8xf32>
    %45 = vector.multi_reduction <maximumf>, %44, %cst_18 [1] : vector<8x8xf32> to vector<8xf32>
    %46 = vector.shape_cast %45 : vector<8xf32> to vector<8x1xf32>
    %47 = vector.broadcast %46 : vector<8x1xf32> to vector<8x8xf32>
    %48 = arith.subf %44, %47 : vector<8x8xf32>
    %49 = math.exp %48 : vector<8x8xf32>
    %cst_19 = arith.constant dense<0.000000e+00> : vector<8xf32>
    %50 = vector.multi_reduction <add>, %49, %cst_19 [1] : vector<8x8xf32> to vector<8xf32>
    %51 = vector.shape_cast %50 : vector<8xf32> to vector<8x1xf32>
    %cst_20 = arith.constant 1.000000e-30 : f32
    %52 = vector.broadcast %cst_20 : f32 to vector<8x1xf32>
    %53 = arith.maximumf %51, %52 : vector<8x1xf32>
    %54 = tpu.reciprocal %53 {approx = true} : vector<8x1xf32> -> vector<8x1xf32>
    %55 = vector.broadcast %54 : vector<8x1xf32> to vector<8x8xf32>
    %56 = arith.mulf %49, %55 : vector<8x8xf32>
    %cst_21 = arith.constant dense<0.000000e+00> : vector<8x8xf32>
    %57 = tpu.matmul %56, %35, %cst_21 {dimension_numbers = #tpu.dot_dimension_numbers<[1], [0], [0], [1], [0, 0, 1, 1], [], []>} : vector<8x8xf32>, vector<8x8xf32>, vector<8x8xf32> -> vector<8x8xf32>
    %58 = vector.extract_strided_slice %1 {offsets = [0, 16], sizes = [8, 8], strides = [1, 1]} : vector<8x32xf32> to vector<8x8xf32>
    %59 = vector.extract_strided_slice %4 {offsets = [0, 16], sizes = [8, 8], strides = [1, 1]} : vector<8x32xf32> to vector<8x8xf32>
    %60 = vector.extract_strided_slice %5 {offsets = [0, 16], sizes = [8, 8], strides = [1, 1]} : vector<8x32xf32> to vector<8x8xf32>
    %cst_22 = arith.constant dense<0.000000e+00> : vector<8x8xf32>
    %61 = tpu.matmul %58, %59, %cst_22 {dimension_numbers = #tpu.dot_dimension_numbers<[1], [1], [0], [0], [0, 0, 1, 0], [], []>} : vector<8x8xf32>, vector<8x8xf32>, vector<8x8xf32> -> vector<8x8xf32>
    %cst_23 = arith.constant 0.353553385 : f32
    %62 = vector.broadcast %cst_23 : f32 to vector<8x8xf32>
    %63 = arith.mulf %61, %62 : vector<8x8xf32>
    %c0_i32_24 = arith.constant 0 : i32
    %64 = vector.broadcast %c0_i32_24 : i32 to vector<1x8xi32>
    %65 = arith.cmpi eq, %7, %64 : vector<1x8xi32>
    %cst_25 = arith.constant -1.000000e+09 : f32
    %66 = vector.shape_cast %65 : vector<1x8xi1> to vector<1x8xi1>
    %67 = vector.broadcast %66 : vector<1x8xi1> to vector<8x8xi1>
    %68 = vector.broadcast %cst_25 : f32 to vector<8x8xf32>
    %69 = arith.select %67, %68, %63 : vector<8x8xi1>, vector<8x8xf32>
    %cst_26 = arith.constant dense<0xFF800000> : vector<8xf32>
    %70 = vector.multi_reduction <maximumf>, %69, %cst_26 [1] : vector<8x8xf32> to vector<8xf32>
    %71 = vector.shape_cast %70 : vector<8xf32> to vector<8x1xf32>
    %72 = vector.broadcast %71 : vector<8x1xf32> to vector<8x8xf32>
    %73 = arith.subf %69, %72 : vector<8x8xf32>
    %74 = math.exp %73 : vector<8x8xf32>
    %cst_27 = arith.constant dense<0.000000e+00> : vector<8xf32>
    %75 = vector.multi_reduction <add>, %74, %cst_27 [1] : vector<8x8xf32> to vector<8xf32>
    %76 = vector.shape_cast %75 : vector<8xf32> to vector<8x1xf32>
    %cst_28 = arith.constant 1.000000e-30 : f32
    %77 = vector.broadcast %cst_28 : f32 to vector<8x1xf32>
    %78 = arith.maximumf %76, %77 : vector<8x1xf32>
    %79 = tpu.reciprocal %78 {approx = true} : vector<8x1xf32> -> vector<8x1xf32>
    %80 = vector.broadcast %79 : vector<8x1xf32> to vector<8x8xf32>
    %81 = arith.mulf %74, %80 : vector<8x8xf32>
    %cst_29 = arith.constant dense<0.000000e+00> : vector<8x8xf32>
    %82 = tpu.matmul %81, %60, %cst_29 {dimension_numbers = #tpu.dot_dimension_numbers<[1], [0], [0], [1], [0, 0, 1, 1], [], []>} : vector<8x8xf32>, vector<8x8xf32>, vector<8x8xf32> -> vector<8x8xf32>
    %83 = vector.extract_strided_slice %1 {offsets = [0, 24], sizes = [8, 8], strides = [1, 1]} : vector<8x32xf32> to vector<8x8xf32>
    %84 = vector.extract_strided_slice %4 {offsets = [0, 24], sizes = [8, 8], strides = [1, 1]} : vector<8x32xf32> to vector<8x8xf32>
    %85 = vector.extract_strided_slice %5 {offsets = [0, 24], sizes = [8, 8], strides = [1, 1]} : vector<8x32xf32> to vector<8x8xf32>
    %cst_30 = arith.constant dense<0.000000e+00> : vector<8x8xf32>
    %86 = tpu.matmul %83, %84, %cst_30 {dimension_numbers = #tpu.dot_dimension_numbers<[1], [1], [0], [0], [0, 0, 1, 0], [], []>} : vector<8x8xf32>, vector<8x8xf32>, vector<8x8xf32> -> vector<8x8xf32>
    %cst_31 = arith.constant 0.353553385 : f32
    %87 = vector.broadcast %cst_31 : f32 to vector<8x8xf32>
    %88 = arith.mulf %86, %87 : vector<8x8xf32>
    %c0_i32_32 = arith.constant 0 : i32
    %89 = vector.broadcast %c0_i32_32 : i32 to vector<1x8xi32>
    %90 = arith.cmpi eq, %7, %89 : vector<1x8xi32>
    %cst_33 = arith.constant -1.000000e+09 : f32
    %91 = vector.shape_cast %90 : vector<1x8xi1> to vector<1x8xi1>
    %92 = vector.broadcast %91 : vector<1x8xi1> to vector<8x8xi1>
    %93 = vector.broadcast %cst_33 : f32 to vector<8x8xf32>
    %94 = arith.select %92, %93, %88 : vector<8x8xi1>, vector<8x8xf32>
    %cst_34 = arith.constant dense<0xFF800000> : vector<8xf32>
    %95 = vector.multi_reduction <maximumf>, %94, %cst_34 [1] : vector<8x8xf32> to vector<8xf32>
    %96 = vector.shape_cast %95 : vector<8xf32> to vector<8x1xf32>
    %97 = vector.broadcast %96 : vector<8x1xf32> to vector<8x8xf32>
    %98 = arith.subf %94, %97 : vector<8x8xf32>
    %99 = math.exp %98 : vector<8x8xf32>
    %cst_35 = arith.constant dense<0.000000e+00> : vector<8xf32>
    %100 = vector.multi_reduction <add>, %99, %cst_35 [1] : vector<8x8xf32> to vector<8xf32>
    %101 = vector.shape_cast %100 : vector<8xf32> to vector<8x1xf32>
    %cst_36 = arith.constant 1.000000e-30 : f32
    %102 = vector.broadcast %cst_36 : f32 to vector<8x1xf32>
    %103 = arith.maximumf %101, %102 : vector<8x1xf32>
    %104 = tpu.reciprocal %103 {approx = true} : vector<8x1xf32> -> vector<8x1xf32>
    %105 = vector.broadcast %104 : vector<8x1xf32> to vector<8x8xf32>
    %106 = arith.mulf %99, %105 : vector<8x8xf32>
    %cst_37 = arith.constant dense<0.000000e+00> : vector<8x8xf32>
    %107 = tpu.matmul %106, %85, %cst_37 {dimension_numbers = #tpu.dot_dimension_numbers<[1], [0], [0], [1], [0, 0, 1, 1], [], []>} : vector<8x8xf32>, vector<8x8xf32>, vector<8x8xf32> -> vector<8x8xf32>
    %108 = tpu.concatenate %32, %57, %82, %107 in 1 : vector<8x8xf32>, vector<8x8xf32>, vector<8x8xf32>, vector<8x8xf32> -> vector<8x32xf32>
    %c0_38 = arith.constant 0 : index
    %c0_39 = arith.constant 0 : index
    %c0_40 = arith.constant 0 : index
    %109 = vector.load %arg4[%c0_38, %c0_39, %c0_40] : memref<1x8x32xf32, #tpu.memory_space<vmem>>, vector<1x8x32xf32>
    %110 = vector.shape_cast %109 : vector<1x8x32xf32> to vector<8x32xf32>
    %111 = vector.shape_cast %108 : vector<8x32xf32> to vector<1x8x32xf32>
    tpu.vector_store %arg4[%c0_38, %c0_39, %c0_40], %111 {strides = array<i32>} : memref<1x8x32xf32, #tpu.memory_space<vmem>>, vector<1x8x32xf32>,
    return
  }
  func.func @transform_0(%arg0: i32) -> (i32, i32, i32) {
    %c0_i32 = arith.constant 0 : i32
    %c0_i32_0 = arith.constant 0 : i32
    %c0_i32_1 = arith.constant 0 : i32
    return %arg0, %c0_i32, %c0_i32_0 : i32, i32, i32
  }
  func.func @transform_1(%arg0: i32) -> (i32, i32, i32) {
    %c0_i32 = arith.constant 0 : i32
    %c0_i32_0 = arith.constant 0 : i32
    %c0_i32_1 = arith.constant 0 : i32
    return %arg0, %c0_i32, %c0_i32_0 : i32, i32, i32
  }
  func.func @transform_2(%arg0: i32) -> (i32, i32, i32) {
    %c0_i32 = arith.constant 0 : i32
    %c0_i32_0 = arith.constant 0 : i32
    %c0_i32_1 = arith.constant 0 : i32
    return %arg0, %c0_i32, %c0_i32_0 : i32, i32, i32
  }
  func.func @transform_3(%arg0: i32) -> (i32, i32, i32) {
    %c0_i32 = arith.constant 0 : i32
    %c0_i32_0 = arith.constant 0 : i32
    %c0_i32_1 = arith.constant 0 : i32
    return %arg0, %c0_i32, %c0_i32_0 : i32, i32, i32
  }
}

module attributes {stable_mosaic.version = 11 : i64} {
  func.func @_norm_matmul_kernel(%arg0: i32, %arg1: memref<16x32xf32, #tpu.memory_space<vmem>>, %arg2: memref<1x32xf32, #tpu.memory_space<vmem>>, %arg3: memref<1x32xf32, #tpu.memory_space<vmem>>, %arg4: memref<32x96xf32, #tpu.memory_space<vmem>>, %arg5: memref<1x96xf32, #tpu.memory_space<vmem>>, %arg6: memref<16x96xf32, #tpu.memory_space<vmem>>) attributes {dimension_semantics = [#tpu.dimension_semantics<parallel>], iteration_bounds = array<i64: 1>, scalar_prefetch = 0 : i64, scratch_operands = 0 : i64, tpu.core_type = #tpu.core_type<tc>, window_params = [{transform_indices = @transform_0, window_bounds = array<i64: 16, 32>}, {pipeline_mode = #tpu.pipeline_mode<synchronous>, transform_indices = @transform_1, window_bounds = array<i64: 1, 32>}, {pipeline_mode = #tpu.pipeline_mode<synchronous>, transform_indices = @transform_2, window_bounds = array<i64: 1, 32>}, {pipeline_mode = #tpu.pipeline_mode<synchronous>, transform_indices = @transform_3, window_bounds = array<i64: 32, 96>}, {pipeline_mode = #tpu.pipeline_mode<synchronous>, transform_indices = @transform_4, window_bounds = array<i64: 1, 96>}, {transform_indices = @transform_5, window_bounds = array<i64: 16, 96>}]} {
    %c0 = arith.constant 0 : index
    %c0_0 = arith.constant 0 : index
    %0 = vector.load %arg1[%c0, %c0_0] : memref<16x32xf32, #tpu.memory_space<vmem>>, vector<16x32xf32>
    %c0_1 = arith.constant 0 : index
    %c0_2 = arith.constant 0 : index
    %1 = vector.load %arg2[%c0_1, %c0_2] : memref<1x32xf32, #tpu.memory_space<vmem>>, vector<1x32xf32>
    %c0_3 = arith.constant 0 : index
    %c0_4 = arith.constant 0 : index
    %2 = vector.load %arg3[%c0_3, %c0_4] : memref<1x32xf32, #tpu.memory_space<vmem>>, vector<1x32xf32>
    %cst = arith.constant dense<0.000000e+00> : vector<16xf32>
    %3 = vector.multi_reduction <add>, %0, %cst [1] : vector<16x32xf32> to vector<16xf32>
    %4 = vector.shape_cast %3 : vector<16xf32> to vector<16x1xf32>
    %cst_5 = arith.constant 3.200000e+01 : f32
    %5 = vector.broadcast %cst_5 : f32 to vector<16x1xf32>
    %6 = arith.divf %4, %5 : vector<16x1xf32>
    %7 = vector.broadcast %6 : vector<16x1xf32> to vector<16x32xf32>
    %8 = arith.subf %0, %7 : vector<16x32xf32>
    %9 = arith.mulf %8, %8 : vector<16x32xf32>
    %cst_6 = arith.constant dense<0.000000e+00> : vector<16xf32>
    %10 = vector.multi_reduction <add>, %9, %cst_6 [1] : vector<16x32xf32> to vector<16xf32>
    %11 = vector.shape_cast %10 : vector<16xf32> to vector<16x1xf32>
    %cst_7 = arith.constant 0.0322580636 : f32
    %12 = vector.broadcast %cst_7 : f32 to vector<16x1xf32>
    %13 = arith.mulf %11, %12 : vector<16x1xf32>
    %14 = math.sqrt %13 : vector<16x1xf32>
    %15 = vector.broadcast %6 : vector<16x1xf32> to vector<16x32xf32>
    %16 = arith.subf %0, %15 : vector<16x32xf32>
    %17 = vector.broadcast %1 : vector<1x32xf32> to vector<16x32xf32>
    %18 = arith.mulf %17, %16 : vector<16x32xf32>
    %cst_8 = arith.constant 9.99999997E-7 : f32
    %19 = vector.broadcast %cst_8 : f32 to vector<16x1xf32>
    %20 = arith.addf %14, %19 : vector<16x1xf32>
    %21 = vector.broadcast %20 : vector<16x1xf32> to vector<16x32xf32>
    %22 = arith.divf %18, %21 : vector<16x32xf32>
    %23 = vector.broadcast %2 : vector<1x32xf32> to vector<16x32xf32>
    %24 = arith.addf %22, %23 : vector<16x32xf32>
    %c0_9 = arith.constant 0 : index
    %c0_10 = arith.constant 0 : index
    %25 = vector.load %arg4[%c0_9, %c0_10] : memref<32x96xf32, #tpu.memory_space<vmem>>, vector<32x96xf32>
    %cst_11 = arith.constant dense<0.000000e+00> : vector<16x96xf32>
    %26 = tpu.matmul %24, %25, %cst_11 {dimension_numbers = #tpu.dot_dimension_numbers<[1], [0], [0], [1], [0, 0, 1, 1], [], []>} : vector<16x32xf32>, vector<32x96xf32>, vector<16x96xf32> -> vector<16x96xf32>
    %c0_12 = arith.constant 0 : index
    %c0_13 = arith.constant 0 : index
    %27 = vector.load %arg5[%c0_12, %c0_13] : memref<1x96xf32, #tpu.memory_space<vmem>>, vector<1x96xf32>
    %28 = vector.broadcast %27 : vector<1x96xf32> to vector<16x96xf32>
    %29 = arith.addf %26, %28 : vector<16x96xf32>
    %c0_14 = arith.constant 0 : index
    %c0_15 = arith.constant 0 : index
    %30 = vector.load %arg6[%c0_14, %c0_15] : memref<16x96xf32, #tpu.memory_space<vmem>>, vector<16x96xf32>
    tpu.vector_store %arg6[%c0_14, %c0_15], %29 {strides = array<i32>} : memref<16x96xf32, #tpu.memory_space<vmem>>, vector<16x96xf32>,
    return
  }
  func.func @transform_0(%arg0: i32) -> (i32, i32) {
    %c0_i32 = arith.constant 0 : i32
    %c0_i32_0 = arith.constant 0 : i32
    return %arg0, %c0_i32 : i32, i32
  }
  func.func @transform_1(%arg0: i32) -> (i32, i32) {
    %c0_i32 = arith.constant 0 : i32
    %c0_i32_0 = arith.constant 0 : i32
    %c0_i32_1 = arith.constant 0 : i32
    return %c0_i32, %c0_i32_0 : i32, i32
  }
  func.func @transform_2(%arg0: i32) -> (i32, i32) {
    %c0_i32 = arith.constant 0 : i32
    %c0_i32_0 = arith.constant 0 : i32
    %c0_i32_1 = arith.constant 0 : i32
    return %c0_i32, %c0_i32_0 : i32, i32
  }
  func.func @transform_3(%arg0: i32) -> (i32, i32) {
    %c0_i32 = arith.constant 0 : i32
    %c0_i32_0 = arith.constant 0 : i32
    %c0_i32_1 = arith.constant 0 : i32
    return %c0_i32, %c0_i32_0 : i32, i32
  }
  func.func @transform_4(%arg0: i32) -> (i32, i32) {
    %c0_i32 = arith.constant 0 : i32
    %c0_i32_0 = arith.constant 0 : i32
    %c0_i32_1 = arith.constant 0 : i32
    return %c0_i32, %c0_i32_0 : i32, i32
  }
  func.func @transform_5(%arg0: i32) -> (i32, i32) {
    %c0_i32 = arith.constant 0 : i32
    %c0_i32_0 = arith.constant 0 : i32
    return %arg0, %c0_i32 : i32, i32
  }
}

module attributes {stable_mosaic.version = 11 : i64} {
  func.func @_norm_ffn_kernel(%arg0: i32, %arg1: memref<16x32xf32, #tpu.memory_space<vmem>>, %arg2: memref<1x32xf32, #tpu.memory_space<vmem>>, %arg3: memref<1x32xf32, #tpu.memory_space<vmem>>, %arg4: memref<32x64xf32, #tpu.memory_space<vmem>>, %arg5: memref<1x64xf32, #tpu.memory_space<vmem>>, %arg6: memref<64x32xf32, #tpu.memory_space<vmem>>, %arg7: memref<1x32xf32, #tpu.memory_space<vmem>>, %arg8: memref<16x32xf32, #tpu.memory_space<vmem>>) attributes {dimension_semantics = [#tpu.dimension_semantics<parallel>], iteration_bounds = array<i64: 1>, scalar_prefetch = 0 : i64, scratch_operands = 0 : i64, tpu.core_type = #tpu.core_type<tc>, window_params = [{transform_indices = @transform_0, window_bounds = array<i64: 16, 32>}, {pipeline_mode = #tpu.pipeline_mode<synchronous>, transform_indices = @transform_1, window_bounds = array<i64: 1, 32>}, {pipeline_mode = #tpu.pipeline_mode<synchronous>, transform_indices = @transform_2, window_bounds = array<i64: 1, 32>}, {pipeline_mode = #tpu.pipeline_mode<synchronous>, transform_indices = @transform_3, window_bounds = array<i64: 32, 64>}, {pipeline_mode = #tpu.pipeline_mode<synchronous>, transform_indices = @transform_4, window_bounds = array<i64: 1, 64>}, {pipeline_mode = #tpu.pipeline_mode<synchronous>, transform_indices = @transform_5, window_bounds = array<i64: 64, 32>}, {pipeline_mode = #tpu.pipeline_mode<synchronous>, transform_indices = @transform_6, window_bounds = array<i64: 1, 32>}, {transform_indices = @transform_7, window_bounds = array<i64: 16, 32>}]} {
    %c0 = arith.constant 0 : index
    %c0_0 = arith.constant 0 : index
    %0 = vector.load %arg1[%c0, %c0_0] : memref<16x32xf32, #tpu.memory_space<vmem>>, vector<16x32xf32>
    %c0_1 = arith.constant 0 : index
    %c0_2 = arith.constant 0 : index
    %1 = vector.load %arg2[%c0_1, %c0_2] : memref<1x32xf32, #tpu.memory_space<vmem>>, vector<1x32xf32>
    %c0_3 = arith.constant 0 : index
    %c0_4 = arith.constant 0 : index
    %2 = vector.load %arg3[%c0_3, %c0_4] : memref<1x32xf32, #tpu.memory_space<vmem>>, vector<1x32xf32>
    %cst = arith.constant dense<0.000000e+00> : vector<16xf32>
    %3 = vector.multi_reduction <add>, %0, %cst [1] : vector<16x32xf32> to vector<16xf32>
    %4 = vector.shape_cast %3 : vector<16xf32> to vector<16x1xf32>
    %cst_5 = arith.constant 3.200000e+01 : f32
    %5 = vector.broadcast %cst_5 : f32 to vector<16x1xf32>
    %6 = arith.divf %4, %5 : vector<16x1xf32>
    %7 = vector.broadcast %6 : vector<16x1xf32> to vector<16x32xf32>
    %8 = arith.subf %0, %7 : vector<16x32xf32>
    %9 = arith.mulf %8, %8 : vector<16x32xf32>
    %cst_6 = arith.constant dense<0.000000e+00> : vector<16xf32>
    %10 = vector.multi_reduction <add>, %9, %cst_6 [1] : vector<16x32xf32> to vector<16xf32>
    %11 = vector.shape_cast %10 : vector<16xf32> to vector<16x1xf32>
    %cst_7 = arith.constant 0.0322580636 : f32
    %12 = vector.broadcast %cst_7 : f32 to vector<16x1xf32>
    %13 = arith.mulf %11, %12 : vector<16x1xf32>
    %14 = math.sqrt %13 : vector<16x1xf32>
    %15 = vector.broadcast %6 : vector<16x1xf32> to vector<16x32xf32>
    %16 = arith.subf %0, %15 : vector<16x32xf32>
    %17 = vector.broadcast %1 : vector<1x32xf32> to vector<16x32xf32>
    %18 = arith.mulf %17, %16 : vector<16x32xf32>
    %cst_8 = arith.constant 9.99999997E-7 : f32
    %19 = vector.broadcast %cst_8 : f32 to vector<16x1xf32>
    %20 = arith.addf %14, %19 : vector<16x1xf32>
    %21 = vector.broadcast %20 : vector<16x1xf32> to vector<16x32xf32>
    %22 = arith.divf %18, %21 : vector<16x32xf32>
    %23 = vector.broadcast %2 : vector<1x32xf32> to vector<16x32xf32>
    %24 = arith.addf %22, %23 : vector<16x32xf32>
    %c0_9 = arith.constant 0 : index
    %c0_10 = arith.constant 0 : index
    %25 = vector.load %arg4[%c0_9, %c0_10] : memref<32x64xf32, #tpu.memory_space<vmem>>, vector<32x64xf32>
    %cst_11 = arith.constant dense<0.000000e+00> : vector<16x64xf32>
    %26 = tpu.matmul %24, %25, %cst_11 {dimension_numbers = #tpu.dot_dimension_numbers<[1], [0], [0], [1], [0, 0, 1, 1], [], []>} : vector<16x32xf32>, vector<32x64xf32>, vector<16x64xf32> -> vector<16x64xf32>
    %c0_12 = arith.constant 0 : index
    %c0_13 = arith.constant 0 : index
    %27 = vector.load %arg5[%c0_12, %c0_13] : memref<1x64xf32, #tpu.memory_space<vmem>>, vector<1x64xf32>
    %28 = vector.broadcast %27 : vector<1x64xf32> to vector<16x64xf32>
    %29 = arith.addf %26, %28 : vector<16x64xf32>
    %cst_14 = arith.constant 0.000000e+00 : f32
    %30 = vector.broadcast %cst_14 : f32 to vector<16x64xf32>
    %31 = arith.maximumf %29, %30 : vector<16x64xf32>
    %c0_15 = arith.constant 0 : index
    %c0_16 = arith.constant 0 : index
    %32 = vector.load %arg6[%c0_15, %c0_16] : memref<64x32xf32, #tpu.memory_space<vmem>>, vector<64x32xf32>
    %cst_17 = arith.constant dense<0.000000e+00> : vector<16x32xf32>
    %33 = tpu.matmul %31, %32, %cst_17 {dimension_numbers = #tpu.dot_dimension_numbers<[1], [0], [0], [1], [0, 0, 1, 1], [], []>} : vector<16x64xf32>, vector<64x32xf32>, vector<16x32xf32> -> vector<16x32xf32>
    %c0_18 = arith.constant 0 : index
    %c0_19 = arith.constant 0 : index
    %34 = vector.load %arg7[%c0_18, %c0_19] : memref<1x32xf32, #tpu.memory_space<vmem>>, vector<1x32xf32>
    %35 = vector.broadcast %34 : vector<1x32xf32> to vector<16x32xf32>
    %36 = arith.addf %33, %35 : vector<16x32xf32>
    %37 = arith.addf %0, %36 : vector<16x32xf32>
    %c0_20 = arith.constant 0 : index
    %c0_21 = arith.constant 0 : index
    %38 = vector.load %arg8[%c0_20, %c0_21] : memref<16x32xf32, #tpu.memory_space<vmem>>, vector<16x32xf32>
    tpu.vector_store %arg8[%c0_20, %c0_21], %37 {strides = array<i32>} : memref<16x32xf32, #tpu.memory_space<vmem>>, vector<16x32xf32>,
    return
  }
  func.func @transform_0(%arg0: i32) -> (i32, i32) {
    %c0_i32 = arith.constant 0 : i32
    %c0_i32_0 = arith.constant 0 : i32
    return %arg0, %c0_i32 : i32, i32
  }
  func.func @transform_1(%arg0: i32) -> (i32, i32) {
    %c0_i32 = arith.constant 0 : i32
    %c0_i32_0 = arith.constant 0 : i32
    %c0_i32_1 = arith.constant 0 : i32
    return %c0_i32, %c0_i32_0 : i32, i32
  }
  func.func @transform_2(%arg0: i32) -> (i32, i32) {
    %c0_i32 = arith.constant 0 : i32
    %c0_i32_0 = arith.constant 0 : i32
    %c0_i32_1 = arith.constant 0 : i32
    return %c0_i32, %c0_i32_0 : i32, i32
  }
  func.func @transform_3(%arg0: i32) -> (i32, i32) {
    %c0_i32 = arith.constant 0 : i32
    %c0_i32_0 = arith.constant 0 : i32
    %c0_i32_1 = arith.constant 0 : i32
    return %c0_i32, %c0_i32_0 : i32, i32
  }
  func.func @transform_4(%arg0: i32) -> (i32, i32) {
    %c0_i32 = arith.constant 0 : i32
    %c0_i32_0 = arith.constant 0 : i32
    %c0_i32_1 = arith.constant 0 : i32
    return %c0_i32, %c0_i32_0 : i32, i32
  }
  func.func @transform_5(%arg0: i32) -> (i32, i32) {
    %c0_i32 = arith.constant 0 : i32
    %c0_i32_0 = arith.constant 0 : i32
    %c0_i32_1 = arith.constant 0 : i32
    return %c0_i32, %c0_i32_0 : i32, i32
  }
  func.func @transform_6(%arg0: i32) -> (i32, i32) {
    %c0_i32 = arith.constant 0 : i32
    %c0_i32_0 = arith.constant 0 : i32
    %c0_i32_1 = arith.constant 0 : i32
    return %c0_i32, %c0_i32_0 : i32, i32
  }
  func.func @transform_7(%arg0: i32) -> (i32, i32) {
    %c0_i32 = arith.constant 0 : i32
    %c0_i32_0 = arith.constant 0 : i32
    return %arg0, %c0_i32 : i32, i32
  }
}

module attributes {stable_mosaic.version = 11 : i64} {
  func.func @_norm_kernel(%arg0: i32, %arg1: memref<16x32xf32, #tpu.memory_space<vmem>>, %arg2: memref<1x32xf32, #tpu.memory_space<vmem>>, %arg3: memref<1x32xf32, #tpu.memory_space<vmem>>, %arg4: memref<16x32xf32, #tpu.memory_space<vmem>>) attributes {dimension_semantics = [#tpu.dimension_semantics<parallel>], iteration_bounds = array<i64: 1>, scalar_prefetch = 0 : i64, scratch_operands = 0 : i64, tpu.core_type = #tpu.core_type<tc>, window_params = [{transform_indices = @transform_0, window_bounds = array<i64: 16, 32>}, {pipeline_mode = #tpu.pipeline_mode<synchronous>, transform_indices = @transform_1, window_bounds = array<i64: 1, 32>}, {pipeline_mode = #tpu.pipeline_mode<synchronous>, transform_indices = @transform_2, window_bounds = array<i64: 1, 32>}, {transform_indices = @transform_3, window_bounds = array<i64: 16, 32>}]} {
    %c0 = arith.constant 0 : index
    %c0_0 = arith.constant 0 : index
    %0 = vector.load %arg1[%c0, %c0_0] : memref<16x32xf32, #tpu.memory_space<vmem>>, vector<16x32xf32>
    %c0_1 = arith.constant 0 : index
    %c0_2 = arith.constant 0 : index
    %1 = vector.load %arg2[%c0_1, %c0_2] : memref<1x32xf32, #tpu.memory_space<vmem>>, vector<1x32xf32>
    %c0_3 = arith.constant 0 : index
    %c0_4 = arith.constant 0 : index
    %2 = vector.load %arg3[%c0_3, %c0_4] : memref<1x32xf32, #tpu.memory_space<vmem>>, vector<1x32xf32>
    %cst = arith.constant dense<0.000000e+00> : vector<16xf32>
    %3 = vector.multi_reduction <add>, %0, %cst [1] : vector<16x32xf32> to vector<16xf32>
    %4 = vector.shape_cast %3 : vector<16xf32> to vector<16x1xf32>
    %cst_5 = arith.constant 3.200000e+01 : f32
    %5 = vector.broadcast %cst_5 : f32 to vector<16x1xf32>
    %6 = arith.divf %4, %5 : vector<16x1xf32>
    %7 = vector.broadcast %6 : vector<16x1xf32> to vector<16x32xf32>
    %8 = arith.subf %0, %7 : vector<16x32xf32>
    %9 = arith.mulf %8, %8 : vector<16x32xf32>
    %cst_6 = arith.constant dense<0.000000e+00> : vector<16xf32>
    %10 = vector.multi_reduction <add>, %9, %cst_6 [1] : vector<16x32xf32> to vector<16xf32>
    %11 = vector.shape_cast %10 : vector<16xf32> to vector<16x1xf32>
    %cst_7 = arith.constant 0.0322580636 : f32
    %12 = vector.broadcast %cst_7 : f32 to vector<16x1xf32>
    %13 = arith.mulf %11, %12 : vector<16x1xf32>
    %14 = math.sqrt %13 : vector<16x1xf32>
    %15 = vector.broadcast %6 : vector<16x1xf32> to vector<16x32xf32>
    %16 = arith.subf %0, %15 : vector<16x32xf32>
    %17 = vector.broadcast %1 : vector<1x32xf32> to vector<16x32xf32>
    %18 = arith.mulf %17, %16 : vector<16x32xf32>
    %cst_8 = arith.constant 9.99999997E-7 : f32
    %19 = vector.broadcast %cst_8 : f32 to vector<16x1xf32>
    %20 = arith.addf %14, %19 : vector<16x1xf32>
    %21 = vector.broadcast %20 : vector<16x1xf32> to vector<16x32xf32>
    %22 = arith.divf %18, %21 : vector<16x32xf32>
    %23 = vector.broadcast %2 : vector<1x32xf32> to vector<16x32xf32>
    %24 = arith.addf %22, %23 : vector<16x32xf32>
    %c0_9 = arith.constant 0 : index
    %c0_10 = arith.constant 0 : index
    %25 = vector.load %arg4[%c0_9, %c0_10] : memref<16x32xf32, #tpu.memory_space<vmem>>, vector<16x32xf32>
    tpu.vector_store %arg4[%c0_9, %c0_10], %24 {strides = array<i32>} : memref<16x32xf32, #tpu.memory_space<vmem>>, vector<16x32xf32>,
    return
  }
  func.func @transform_0(%arg0: i32) -> (i32, i32) {
    %c0_i32 = arith.constant 0 : i32
    %c0_i32_0 = arith.constant 0 : i32
    return %arg0, %c0_i32 : i32, i32
  }
  func.func @transform_1(%arg0: i32) -> (i32, i32) {
    %c0_i32 = arith.constant 0 : i32
    %c0_i32_0 = arith.constant 0 : i32
    %c0_i32_1 = arith.constant 0 : i32
    return %c0_i32, %c0_i32_0 : i32, i32
  }
  func.func @transform_2(%arg0: i32) -> (i32, i32) {
    %c0_i32 = arith.constant 0 : i32
    %c0_i32_0 = arith.constant 0 : i32
    %c0_i32_1 = arith.constant 0 : i32
    return %c0_i32, %c0_i32_0 : i32, i32
  }
  func.func @transform_3(%arg0: i32) -> (i32, i32) {
    %c0_i32 = arith.constant 0 : i32
    %c0_i32_0 = arith.constant 0 : i32
    return %arg0, %c0_i32 : i32, i32
  }
}

</mosaic_0001>

<llo_original>
// kernel: decoder_forward.18
$region0: #{decoder_forward.18}
  #allocation0 [shape = 'u32[]', space=smem, size = 0x4, offset = 0x4, fixed_abs, tag = 'smem constant byte address 0x4 - core index']
  #allocation1 [shape = 'u32[72,128]{1,0:T(1,128)}', space=vmem, size = 0x9000, scoped, tag = 'internal scratch']
  %s0 = inlined_call_operand.vmem [shape: f32[2,8,32], index: 0, kind: input, shape index: {}]
  %s1 = inlined_call_operand.vmem [shape: f32[8,32], index: 1, kind: input, shape index: {}]
  %s2 = inlined_call_operand.vmem [shape: f32[2,8,32], index: 2, kind: output, shape index: {}]
  %s3 = sld [smem:[#allocation0]]
  $region41: #{decoder_forward.18} parent=0
    _
  %s5 = ssub.s32 1, %s3
  %s6 = scalar_select 0, %s5, %s3
  loop: start=0, step=1, limit=4
  $region2: #{decoder_forward.18} parent=0 // loop_pre_header
    _
  $region3: #{decoder_forward.18} parent=0 // loop_header
    %s8 = sphi 0, %s12
    %p9 = scmp.ge.s32.totalorder %s8, 4
    %s18 = sphi 0, %s20
    %s21 = sphi 0, %s18
    %s22 = sphi 0, %s21
    %s38 = sphi 0, %s22
    %s42 = sphi 0, %s42
    %s44 = sphi 0, %s42
    %s45 = sphi 0, %s44
    %s59 = sphi 0, %s45
    %s65 = sphi 0, %s67
    %s68 = sphi 0, %s65
    %s69 = sphi 0, %s68
    %s85 = sphi 0, %s69
  $region4: #{decoder_forward.18} parent=0 // loop_header_branch
    %11 = sbr.rel (%p9) target = $region8
  $region5: #{decoder_forward.18} parent=0 // loop_body
    %s13 = ssub.s32 %s8, 1
    %s14 = ssub.s32 %s8, 2
    %s15 = sadd.s32 %s8, 1
    %s16 = ssub.s32 %s8, %s15
    %p17 = scmp.eq.s32.totalorder %s16, 0
    %s19 = sadd.s32 %s18, 1
    %s20 = scalar_select %p17, %s18, %s19
    %p23 = pneg %p17
    %p24 = scmp.eq.s32.totalorder %s8, 1
    %p25 = por %p23, %p24
    %p26 = scmp.ne.s32.totalorder %s18, %s21
    %p27 = scmp.eq.s32.totalorder %s8, 0
    %p28 = por %p26, %p27
    %p29 = scmp.ne.s32.totalorder %s18, %s21
    %p30 = scmp.eq.s32.totalorder %s13, 1
    %p31 = por %p29, %p30
    %p32 = scmp.ne.s32.totalorder %s21, %s22
    %p33 = scmp.eq.s32.totalorder %s13, 0
    %p34 = por %p32, %p33
    %p35 = scmp.ne.s32.totalorder %s21, %s22
    %p36 = scmp.eq.s32.totalorder %s14, 1
    %p37 = por %p35, %p36
    %p39 = scmp.ne.s32.totalorder %s22, %s38
    %p40 = scmp.eq.s32.totalorder %s14, 0
    %p41 = por %p39, %p40
    %s43 = sadd.s32 %s42, 1
    %p46 = scmp.eq.s32.totalorder %s8, 1
    %p47 = scmp.ne.s32.totalorder %s42, %s44
    %p48 = scmp.eq.s32.totalorder %s8, 0
    %p49 = por %p47, %p48
    %p50 = scmp.ne.s32.totalorder %s42, %s44
    %p51 = scmp.eq.s32.totalorder %s13, 1
    %p52 = por %p50, %p51
    %p53 = scmp.ne.s32.totalorder %s44, %s45
    %p54 = scmp.eq.s32.totalorder %s13, 0
    %p55 = por %p53, %p54
    %p56 = scmp.ne.s32.totalorder %s44, %s45
    %p57 = scmp.eq.s32.totalorder %s14, 1
    %p58 = por %p56, %p57
    %p60 = scmp.ne.s32.totalorder %s45, %s59
    %p61 = scmp.eq.s32.totalorder %s14, 0
    %p62 = por %p60, %p61
    %s63 = ssub.s32 %s8, %s15
    %p64 = scmp.eq.s32.totalorder %s63, 0
    %s66 = sadd.s32 %s65, 1
    %s67 = scalar_select %p64, %s65, %s66
    %p70 = pneg %p64
    %p71 = scmp.eq.s32.totalorder %s8, 1
    %p72 = por %p70, %p71
    %p73 = scmp.ne.s32.totalorder %s65, %s68
    %p74 = scmp.eq.s32.totalorder %s8, 0
    %p75 = por %p73, %p74
    %p76 = scmp.ne.s32.totalorder %s65, %s68
    %p77 = scmp.eq.s32.totalorder %s13, 1
    %p78 = por %p76, %p77
    %p79 = scmp.ne.s32.totalorder %s68, %s69
    %p80 = scmp.eq.s32.totalorder %s13, 0
    %p81 = por %p79, %p80
    %p82 = scmp.ne.s32.totalorder %s68, %s69
    %p83 = scmp.eq.s32.totalorder %s14, 1
    %p84 = por %p82, %p83
    %p86 = scmp.ne.s32.totalorder %s69, %s85
    %p87 = scmp.eq.s32.totalorder %s14, 0
    %p88 = por %p86, %p87
    %p89 = scmp.le.s32.totalorder 1, %s8
    %p90 = scmp.lt.s32.totalorder %s8, 3
    %p91 = pnand %p89, %p90
    %p92 = pneg %p91
    // Predicated region
    $region9: #{decoder_forward.18} parent=5 // pred_check
      _
    $region10: #{decoder_forward.18} parent=5 // pred_check_branch
      %94 = sbr.rel (%p91) target = $region12
    $region11: #{decoder_forward.18} parent=5 // pred_region
      %s95 = ssub.s32 %s8, 1
      // Predicated region
      $region13: #{decoder_forward.18} parent=11 // pred_check
        %p96 = pneg %p55
      $region14: #{decoder_forward.18} parent=11 // pred_check_branch
        %98 = sbr.rel (%p96) target = $region16
      $region15: #{decoder_forward.18} parent=11 // pred_region
        _
      $region16: #{decoder_forward.18} parent=11 // pred_fallthru
        _
    $region12: #{decoder_forward.18} parent=5 // pred_fallthru
      _
    %p99 = scmp.lt.s32.totalorder %s8, 2
    // Predicated region
    $region17: #{decoder_forward.18} parent=5 // pred_check
      %p100 = pneg %p99
    $region18: #{decoder_forward.18} parent=5 // pred_check_branch
      %102 = sbr.rel (%p100) target = $region20
    $region19: #{decoder_forward.18} parent=5 // pred_region
      // Predicated region
      $region21: #{decoder_forward.18} parent=19 // pred_check
        %p103 = pneg %p28
      $region22: #{decoder_forward.18} parent=19 // pred_check_branch
        %105 = sbr.rel (%p103) target = $region24
      $region23: #{decoder_forward.18} parent=19 // pred_region
        %p106 = scmp.lt.s32.totalorder %s8, 1
        %s107 = scalar_select %p106, %s8, 1
        %s108 = smul.addr %s107, 8
        %s109 = scalar_lea.vmem %s0, %s108
      $region24: #{decoder_forward.18} parent=19 // pred_fallthru
        _
    $region20: #{decoder_forward.18} parent=5 // pred_fallthru
      _
    %p110 = scmp.le.s32.totalorder 1, %s8
    %p111 = scmp.lt.s32.totalorder %s8, 3
    %p112 = pnand %p110, %p111
    %p113 = pneg %p112
    // Predicated region
    $region25: #{decoder_forward.18} parent=5 // pred_check
      _
    $region26: #{decoder_forward.18} parent=5 // pred_check_branch
      %115 = sbr.rel (%p112) target = $region28
    $region27: #{decoder_forward.18} parent=5 // pred_region
      %s116 = ssub.s32 %s8, 1
      %p117 = scmp.lt.s32.totalorder %s13, 1
      %s118 = scalar_select %p117, %s13, 1
      %s119 = smul.addr %s118, 8
      %s120 = scalar_lea.vmem %s0, %s119
      %p121 = pneg %p34
      %p122 = pneg %p31
      %p123 = pneg %p55
      %p124 = pneg %p52
      %p125 = pneg %p81
      %p126 = pneg %p78
      %p127 = scmp.lt.s32.totalorder %s13, 1
      %s128 = scalar_select %p127, %s13, 1
      %s129 = smul.addr %s128, 8
      %s130 = scalar_lea.vmem %s2, %s129
      %p131 = scmp.lt.s32.totalorder %s13, 1
      %s132 = scalar_select %p131, %s13, 1
      %s133 = smul.addr %s132, 8
      %s134 = scalar_lea.vmem %s0, %s133
      %p135 = scmp.lt.s32.totalorder %s13, 1
      %s136 = scalar_select %p135, %s13, 1
      %s137 = smul.addr %s136, 8
      %s138 = scalar_lea.vmem %s2, %s137
      %v139 = vld [vmem:[%s134] sm:$0xff]
      %v140 = vmul.f32 %v139, 5.656854
      %v141 = vld [vmem:[%s1] sm:$0xff]
      %v142 = vadd.f32 %v140, %v141
      %vm143 = vcmask 261120
      %144 = vst.msk [vmem:[%s138] sm:$0xff] %vm143, %v142
      %p145 = scmp.lt.s32.totalorder %s13, 1
      %s146 = scalar_select %p145, %s13, 1
      %s147 = smul.addr %s146, 8
      %s148 = scalar_lea.vmem %s2, %s147
      // Predicated region
      $region29: #{decoder_forward.18} parent=27 // pred_check
        %p149 = pneg %p78
      $region30: #{decoder_forward.18} parent=27 // pred_check_branch
        %151 = sbr.rel (%p149) target = $region32
      $region31: #{decoder_forward.18} parent=27 // pred_region
        _
      $region32: #{decoder_forward.18} parent=27 // pred_fallthru
        _
    $region28: #{decoder_forward.18} parent=5 // pred_fallthru
      _
    %p152 = scmp.le.s32.totalorder 2, %s8
    // Predicated region
    $region33: #{decoder_forward.18} parent=5 // pred_check
      %p153 = pneg %p152
    $region34: #{decoder_forward.18} parent=5 // pred_check_branch
      %155 = sbr.rel (%p153) target = $region36
    $region35: #{decoder_forward.18} parent=5 // pred_region
      %s156 = ssub.s32 %s8, 2
      // Predicated region
      $region37: #{decoder_forward.18} parent=35 // pred_check
        %p157 = pneg %p84
      $region38: #{decoder_forward.18} parent=35 // pred_check_branch
        %159 = sbr.rel (%p157) target = $region40
      $region39: #{decoder_forward.18} parent=35 // pred_region
        %p160 = scmp.lt.s32.totalorder %s14, 1
        %s161 = scalar_select %p160, %s14, 1
        %s162 = smul.addr %s161, 8
        %s163 = scalar_lea.vmem %s2, %s162
      $region40: #{decoder_forward.18} parent=35 // pred_fallthru
        _
    $region36: #{decoder_forward.18} parent=5 // pred_fallthru
      _
  $region6: #{decoder_forward.18} parent=0 // loop_footer
    %s12 = sadd.s32 1, %s8
  $region7: #{decoder_forward.18} parent=0 // loop_footer_branch
    %7 = sbr.rel target = $region3
  $region8: #{decoder_forward.18} parent=0 // loop_exit
    _

// kernel: decoder_forward.21
$region0: #{decoder_forward.21}
  #allocation0 [shape = 'u32[]', space=smem, size = 0x4, offset = 0x4, fixed_abs, tag = 'smem constant byte address 0x4 - core index']
  #allocation1 [shape = 'u32[72,128]{1,0:T(1,128)}', space=vmem, size = 0x9000, scoped, tag = 'internal scratch']
  %s0 = inlined_call_operand.vmem [shape: f32[16,32], index: 0, kind: input, shape index: {}]
  %s1 = inlined_call_operand.vmem [shape: f32[32,32], index: 1, kind: input, shape index: {}]
  %s2 = inlined_call_operand.vmem [shape: f32[1,32], index: 2, kind: input, shape index: {}]
  %s3 = inlined_call_operand.vmem [shape: f32[16,32], index: 3, kind: input, shape index: {}]
  %s4 = inlined_call_operand.vmem [shape: f32[16,32], index: 4, kind: output, shape index: {}]
  %s5 = sld [smem:[#allocation0]]
  $region26: #{decoder_forward.21} parent=0
    _
  %s7 = ssub.s32 1, %s5
  %s8 = scalar_select 0, %s7, %s5
  // Predicated region
  $region2: #{decoder_forward.21} parent=0 // pred_check
    _
  $region3: #{decoder_forward.21} parent=0 // pred_check_branch
    %10 = sbr.rel (0) target = $region5
  $region4: #{decoder_forward.21} parent=0 // pred_region
    _
  $region5: #{decoder_forward.21} parent=0 // pred_fallthru
    _
  // Predicated region
  $region6: #{decoder_forward.21} parent=0 // pred_check
    _
  $region7: #{decoder_forward.21} parent=0 // pred_check_branch
    %12 = sbr.rel (0) target = $region9
  $region8: #{decoder_forward.21} parent=0 // pred_region
    _
  $region9: #{decoder_forward.21} parent=0 // pred_fallthru
    _
  // Predicated region
  $region10: #{decoder_forward.21} parent=0 // pred_check
    _
  $region11: #{decoder_forward.21} parent=0 // pred_check_branch
    %14 = sbr.rel (0) target = $region13
  $region12: #{decoder_forward.21} parent=0 // pred_region
    _
  $region13: #{decoder_forward.21} parent=0 // pred_fallthru
    _
  // Predicated region
  $region14: #{decoder_forward.21} parent=0 // pred_check
    _
  $region15: #{decoder_forward.21} parent=0 // pred_check_branch
    %16 = sbr.rel (0) target = $region17
  $region16: #{decoder_forward.21} parent=0 // pred_region
    _
  $region17: #{decoder_forward.21} parent=0 // pred_fallthru
    _
  %v17 = vld [vmem:[%s0] sm:$0xff]
  %v18 = vld [vmem:[%s0 + $0x8] sm:$0xff]
  %v19 = vld [vmem:[%s1] sm:$0xff]
  %v20 = vld [vmem:[%s1 + $0x8] sm:$0xff]
  %v21 = vld [vmem:[%s1 + $0x10] sm:$0xff]
  %v22 = vld [vmem:[%s1 + $0x18] sm:$0xff]
  %v23 = vld [vmem:[%s2] sm:$0x1]
  %v25 = vperm.slane %v23, 0
  %vm27 = vcmask 261120
  %v29 = vsel %vm27, %v17, 0
  %v32 = vsel %vm27, %v18, 0
  %34 = vmatpush.msra.mxu0 0.0
  %35 = vmatpush.msra.mxu0 0.0
  %36 = vmatpush.msra.mxu0 0.0
  %37 = vmatpush.msra.mxu0 0.0
  %38 = vmatpush.msra.mxu0 0.0
  %39 = vmatpush.msra.mxu0 0.0
  %40 = vmatpush.msra.mxu0 0.0
  %41 = vmatpush.msra.mxu0 0.0
  %42 = vmatpush.msra.mxu0 0.0
  %43 = vmatpush.msra.mxu0 0.0
  %44 = vmatpush.msra.mxu0 0.0
  %45 = vmatpush.msra.mxu0 0.0
  %46 = vmatpush.msra.mxu0 %v22
  %47 = vmatpush.msra.mxu0 %v21
  %48 = vmatpush.msra.mxu0 %v20
  %49 = vmatpush.msra.mxu0 %v19
  %50 = vmatmul.f32.gmra.mxu0 %v29
  %v51 = vpop.f32.mrf.mxu0
  %v52 = vadd.f32 %v25, %v51
  %53 = vmatmul.f32.gmra.mxu0 %v32
  %v54 = vpop.f32.mrf.mxu0
  %v55 = vadd.f32 %v25, %v54
  %56 = vdwg.mxu0
  %v57 = vld [vmem:[%s3] sm:$0xff]
  %v58 = vld [vmem:[%s3 + $0x8] sm:$0xff]
  %v59 = vadd.f32 %v52, %v57
  %v60 = vadd.f32 %v55, %v58
  %61 = vst.msk [vmem:[%s4] sm:$0xff] %vm27, %v59
  %62 = vst.msk [vmem:[%s4 + $0x8] sm:$0xff] %vm27, %v60
  // Predicated region
  $region18: #{decoder_forward.21} parent=0 // pred_check
    _
  $region19: #{decoder_forward.21} parent=0 // pred_check_branch
    %64 = sbr.rel (0) target = $region21
  $region20: #{decoder_forward.21} parent=0 // pred_region
    _
  $region21: #{decoder_forward.21} parent=0 // pred_fallthru
    _
  // Predicated region
  $region22: #{decoder_forward.21} parent=0 // pred_check
    _
  $region23: #{decoder_forward.21} parent=0 // pred_check_branch
    %66 = sbr.rel (0) target = $region25
  $region24: #{decoder_forward.21} parent=0 // pred_region
    _
  $region25: #{decoder_forward.21} parent=0 // pred_fallthru
    _

// kernel: decoder_forward.19
$region0: #{decoder_forward.19}
  #allocation0 [shape = 'u32[]', space=smem, size = 0x4, offset = 0x4, fixed_abs, tag = 'smem constant byte address 0x4 - core index']
  #allocation1 [shape = 'u32[72,128]{1,0:T(1,128)}', space=vmem, size = 0x9000, scoped, tag = 'internal scratch']
  %s0 = inlined_call_operand.vmem [shape: f32[16,32], index: 0, kind: input, shape index: {}]
  %s1 = inlined_call_operand.vmem [shape: f32[1,32], index: 1, kind: input, shape index: {}]
  %s2 = inlined_call_operand.vmem [shape: f32[1,32], index: 2, kind: input, shape index: {}]
  %s3 = inlined_call_operand.vmem [shape: f32[32,96], index: 3, kind: input, shape index: {}]
  %s4 = inlined_call_operand.vmem [shape: f32[1,96], index: 4, kind: input, shape index: {}]
  %s5 = inlined_call_operand.vmem [shape: f32[16,96], index: 5, kind: output, shape index: {}]
  %s6 = sld [smem:[#allocation0]]
  $region30: #{decoder_forward.19} parent=0
    _
  %s8 = ssub.s32 1, %s6
  %s9 = scalar_select 0, %s8, %s6
  // Predicated region
  $region2: #{decoder_forward.19} parent=0 // pred_check
    _
  $region3: #{decoder_forward.19} parent=0 // pred_check_branch
    %11 = sbr.rel (0) target = $region5
  $region4: #{decoder_forward.19} parent=0 // pred_region
    _
  $region5: #{decoder_forward.19} parent=0 // pred_fallthru
    _
  // Predicated region
  $region6: #{decoder_forward.19} parent=0 // pred_check
    _
  $region7: #{decoder_forward.19} parent=0 // pred_check_branch
    %13 = sbr.rel (0) target = $region9
  $region8: #{decoder_forward.19} parent=0 // pred_region
    _
  $region9: #{decoder_forward.19} parent=0 // pred_fallthru
    _
  // Predicated region
  $region10: #{decoder_forward.19} parent=0 // pred_check
    _
  $region11: #{decoder_forward.19} parent=0 // pred_check_branch
    %15 = sbr.rel (0) target = $region13
  $region12: #{decoder_forward.19} parent=0 // pred_region
    _
  $region13: #{decoder_forward.19} parent=0 // pred_fallthru
    _
  // Predicated region
  $region14: #{decoder_forward.19} parent=0 // pred_check
    _
  $region15: #{decoder_forward.19} parent=0 // pred_check_branch
    %17 = sbr.rel (0) target = $region17
  $region16: #{decoder_forward.19} parent=0 // pred_region
    _
  $region17: #{decoder_forward.19} parent=0 // pred_fallthru
    _
  // Predicated region
  $region18: #{decoder_forward.19} parent=0 // pred_check
    _
  $region19: #{decoder_forward.19} parent=0 // pred_check_branch
    %19 = sbr.rel (0) target = $region21
  $region20: #{decoder_forward.19} parent=0 // pred_region
    _
  $region21: #{decoder_forward.19} parent=0 // pred_fallthru
    _
  %v20 = vld [vmem:[%s0] sm:$0xff]
  %v21 = vld [vmem:[%s0 + $0x8] sm:$0xff]
  %v22 = vld [vmem:[%s1] sm:$0x1]
  %v23 = vld [vmem:[%s2] sm:$0x1]
  %vm24 = vcmask 261120
  %v25 = vsel %vm24, %v20, 0.0
  %26 = vadd.xlane.f32.xlu0 %v25
  %v27 = vpop.xlane.xlu0 %26
  %v28 = vsel %vm24, %v21, 0.0
  %29 = vadd.xlane.f32.xlu0 %v28
  %v30 = vpop.xlane.xlu0 %29
  %v31 = vrcp.pop 32.0
  %v32 = vmul.f32 32.0, %v31
  %v33 = vsub.f32 1.0, %v32
  %v34 = vmul.f32 %v31, %v33
  %v35 = vadd.f32 %v31, %v34
  %vm36 = vweird.f32 %v31
  %v37 = vsel %vm36, %v31, %v35
  %v38 = vmul.f32 %v27, %v37
  %v39 = vmul.f32 %v30, %v37
  %v40 = vsub.f32 %v20, %v38
  %v41 = vsub.f32 %v21, %v39
  %v42 = vmul.f32 %v40, %v40
  %v43 = vmul.f32 %v41, %v41
  %v44 = vsel %vm24, %v42, 0.0
  %45 = vadd.xlane.f32.xlu0 %v44
  %v46 = vpop.xlane.xlu0 %45
  %v47 = vsel %vm24, %v43, 0.0
  %48 = vadd.xlane.f32.xlu0 %v47
  %v49 = vpop.xlane.xlu0 %48
  %v50 = vmul.f32 %v46, 0.032258064
  %v51 = vmul.f32 %v49, 0.032258064
  %v52 = vrsqrt.pop %v50
  %v53 = vmul.f32 %v52, %v50
  %v54 = vmul.f32 %v53, %v52
  %v55 = vmul.f32 0.5, %v54
  %v56 = vsub.f32 1.5, %v55
  %v57 = vmul.f32 %v52, %v56
  %v58 = vmul.f32 %v50, %v57
  %vm59 = vcmp.eq.f32.partialorder %v50, inf
  %v60 = vsel %vm59, %v50, %v58
  %vm61 = vcmp.eq.f32.partialorder %v50, 0.0
  %v62 = vand.u32 %v50, 2147483648
  %v63 = vsel %vm61, %v62, %v60
  %v64 = vrsqrt.pop %v51
  %v65 = vmul.f32 %v64, %v51
  %v66 = vmul.f32 %v65, %v64
  %v67 = vmul.f32 0.5, %v66
  %v68 = vsub.f32 1.5, %v67
  %v69 = vmul.f32 %v64, %v68
  %v70 = vmul.f32 %v51, %v69
  %vm71 = vcmp.eq.f32.partialorder %v51, inf
  %v72 = vsel %vm71, %v51, %v70
  %vm73 = vcmp.eq.f32.partialorder %v51, 0.0
  %v74 = vand.u32 %v51, 2147483648
  %v75 = vsel %vm73, %v74, %v72
  %v77 = vperm.slane %v22, 0
  %v79 = vmul.f32 %v77, %v40
  %v80 = vmul.f32 %v77, %v41
  %v81 = vadd.f32 %v63, 1e-06
  %v82 = vadd.f32 %v75, 1e-06
  %v83 = vrcp.pop %v81
  %v84 = vmul.f32 %v81, %v83
  %v85 = vsub.f32 1.0, %v84
  %v86 = vmul.f32 %v83, %v85
  %v87 = vadd.f32 %v83, %v86
  %vm88 = vweird.f32 %v81
  %vm89 = vweird.f32 %v83
  %vm90 = vmor %vm88, %vm89
  %v91 = vsel %vm90, %v83, %v87
  %v92 = vand.u32 2147483647, %v81
  %vm93 = vcmp.eq.f32.partialorder %v92, 8.507059e+37
  %v94 = vand.u32 %v81, 2147483648
  %v95 = vor.u32 1.1754944e-38, %v94
  %v96 = vsel %vm93, %v95, %v91
  %v97 = vmul.f32 %v79, %v96
  %v98 = vrcp.pop %v82
  %v99 = vmul.f32 %v82, %v98
  %v100 = vsub.f32 1.0, %v99
  %v101 = vmul.f32 %v98, %v100
  %v102 = vadd.f32 %v98, %v101
  %vm103 = vweird.f32 %v82
  %vm104 = vweird.f32 %v98
  %vm105 = vmor %vm103, %vm104
  %v106 = vsel %vm105, %v98, %v102
  %v107 = vand.u32 2147483647, %v82
  %vm108 = vcmp.eq.f32.partialorder %v107, 8.507059e+37
  %v109 = vand.u32 %v82, 2147483648
  %v110 = vor.u32 1.1754944e-38, %v109
  %v111 = vsel %vm108, %v110, %v106
  %v112 = vmul.f32 %v80, %v111
  %v114 = vperm.slane %v23, 0
  %v116 = vadd.f32 %v97, %v114
  %v117 = vadd.f32 %v112, %v114
  %v118 = vld [vmem:[%s3] sm:$0xff]
  %v119 = vld [vmem:[%s3 + $0x8] sm:$0xff]
  %v120 = vld [vmem:[%s3 + $0x10] sm:$0xff]
  %v121 = vld [vmem:[%s3 + $0x18] sm:$0xff]
  %v122 = vld [vmem:[%s4] sm:$0x1]
  %v124 = vperm.slane %v122, 0
  %v127 = vsel %vm24, %v116, 0
  %v130 = vsel %vm24, %v117, 0
  %132 = vmatpush.msra.mxu0 0.0
  %133 = vmatpush.msra.mxu0 0.0
  %134 = vmatpush.msra.mxu0 0.0
  %135 = vmatpush.msra.mxu0 0.0
  %136 = vmatpush.msra.mxu0 0.0
  %137 = vmatpush.msra.mxu0 0.0
  %138 = vmatpush.msra.mxu0 0.0
  %139 = vmatpush.msra.mxu0 0.0
  %140 = vmatpush.msra.mxu0 0.0
  %141 = vmatpush.msra.mxu0 0.0
  %142 = vmatpush.msra.mxu0 0.0
  %143 = vmatpush.msra.mxu0 0.0
  %144 = vmatpush.msra.mxu0 %v121
  %145 = vmatpush.msra.mxu0 %v120
  %146 = vmatpush.msra.mxu0 %v119
  %147 = vmatpush.msra.mxu0 %v118
  %148 = vmatmul.f32.gmra.mxu0 %v127
  %v149 = vpop.f32.mrf.mxu0
  %v150 = vadd.f32 %v124, %v149
  %151 = vmatmul.f32.gmra.mxu0 %v130
  %v152 = vpop.f32.mrf.mxu0
  %v153 = vadd.f32 %v124, %v152
  %154 = vdwg.mxu0
  %vm155 = vcmask 785408
  %156 = vst.msk [vmem:[%s5] sm:$0xff] %vm155, %v150
  %157 = vst.msk [vmem:[%s5 + $0x8] sm:$0xff] %vm155, %v153
  // Predicated region
  $region22: #{decoder_forward.19} parent=0 // pred_check
    _
  $region23: #{decoder_forward.19} parent=0 // pred_check_branch
    %159 = sbr.rel (0) target = $region25
  $region24: #{decoder_forward.19} parent=0 // pred_region
    _
  $region25: #{decoder_forward.19} parent=0 // pred_fallthru
    _
  // Predicated region
  $region26: #{decoder_forward.19} parent=0 // pred_check
    _
  $region27: #{decoder_forward.19} parent=0 // pred_check_branch
    %161 = sbr.rel (0) target = $region29
  $region28: #{decoder_forward.19} parent=0 // pred_region
    _
  $region29: #{decoder_forward.19} parent=0 // pred_fallthru
    _

// kernel: decoder_forward.20
$region0: #{decoder_forward.20}
  #allocation0 [shape = 'u32[]', space=smem, size = 0x4, offset = 0x4, fixed_abs, tag = 'smem constant byte address 0x4 - core index']
  #allocation1 [shape = 'u32[72,128]{1,0:T(1,128)}', space=vmem, size = 0x9000, scoped, tag = 'internal scratch']
  %s0 = inlined_call_operand.vmem [shape: f32[2,8,96], index: 0, kind: input, shape index: {}]
  %s1 = inlined_call_operand.hbm [shape: s32[2,8,8], index: 1, kind: input, shape index: {}]
  %s2 = inlined_call_operand.vmem [shape: f32[2,8,32], index: 2, kind: output, shape index: {}]
  %s3 = sld [smem:[#allocation0]]
  $region45: #{decoder_forward.20} parent=0
    _
  %s5 = ssub.s32 1, %s3
  %s6 = scalar_select 0, %s5, %s3
  $region1: #{decoder_forward.20} parent=0
    #allocation2 [shape = 'u8[8192]{0}', space=vmem, size = 0x2000, scoped, tag = 'input window, operand 1']
    #allocation3 [shape = 's32[2]{0}', space=sflag, size = 0x8, scoped, tag = 'scoped memory for decoder_forward.20']
    %7 = vsyncpa [#allocation3], 0
    %s8 = scalar_lea.sflag [#allocation3], 1
    %9 = vsyncpa %s8, 0
    loop: start=0, step=1, limit=4
    $region2: #{decoder_forward.20} parent=1 // loop_pre_header
      _
    $region3: #{decoder_forward.20} parent=1 // loop_header
      %s11 = sphi 0, %s15
      %p12 = scmp.ge.s32.totalorder %s11, 4
      %s21 = sphi 0, %s23
      %s24 = sphi 0, %s21
      %s25 = sphi 0, %s24
      %s41 = sphi 0, %s25
      %s47 = sphi 0, %s49
      %s50 = sphi 0, %s47
      %s51 = sphi 0, %s50
      %s67 = sphi 0, %s51
      %s73 = sphi 0, %s75
      %s76 = sphi 0, %s73
      %s77 = sphi 0, %s76
      %s93 = sphi 0, %s77
    $region4: #{decoder_forward.20} parent=1 // loop_header_branch
      %14 = sbr.rel (%p12) target = $region8
    $region5: #{decoder_forward.20} parent=1 // loop_body
      %s16 = ssub.s32 %s11, 1
      %s17 = ssub.s32 %s11, 2
      %s18 = sadd.s32 %s11, 1
      %s19 = ssub.s32 %s11, %s18
      %p20 = scmp.eq.s32.totalorder %s19, 0
      %s22 = sadd.s32 %s21, 1
      %s23 = scalar_select %p20, %s21, %s22
      %p26 = pneg %p20
      %p27 = scmp.eq.s32.totalorder %s11, 1
      %p28 = por %p26, %p27
      %p29 = scmp.ne.s32.totalorder %s21, %s24
      %p30 = scmp.eq.s32.totalorder %s11, 0
      %p31 = por %p29, %p30
      %p32 = scmp.ne.s32.totalorder %s21, %s24
      %p33 = scmp.eq.s32.totalorder %s16, 1
      %p34 = por %p32, %p33
      %p35 = scmp.ne.s32.totalorder %s24, %s25
      %p36 = scmp.eq.s32.totalorder %s16, 0
      %p37 = por %p35, %p36
      %p38 = scmp.ne.s32.totalorder %s24, %s25
      %p39 = scmp.eq.s32.totalorder %s17, 1
      %p40 = por %p38, %p39
      %p42 = scmp.ne.s32.totalorder %s25, %s41
      %p43 = scmp.eq.s32.totalorder %s17, 0
      %p44 = por %p42, %p43
      %s45 = ssub.s32 %s11, %s18
      %p46 = scmp.eq.s32.totalorder %s45, 0
      %s48 = sadd.s32 %s47, 1
      %s49 = scalar_select %p46, %s47, %s48
      %p52 = pneg %p46
      %p53 = scmp.eq.s32.totalorder %s11, 1
      %p54 = por %p52, %p53
      %p55 = scmp.ne.s32.totalorder %s47, %s50
      %p56 = scmp.eq.s32.totalorder %s11, 0
      %p57 = por %p55, %p56
      %p58 = scmp.ne.s32.totalorder %s47, %s50
      %p59 = scmp.eq.s32.totalorder %s16, 1
      %p60 = por %p58, %p59
      %p61 = scmp.ne.s32.totalorder %s50, %s51
      %p62 = scmp.eq.s32.totalorder %s16, 0
      %p63 = por %p61, %p62
      %p64 = scmp.ne.s32.totalorder %s50, %s51
      %p65 = scmp.eq.s32.totalorder %s17, 1
      %p66 = por %p64, %p65
      %p68 = scmp.ne.s32.totalorder %s51, %s67
      %p69 = scmp.eq.s32.totalorder %s17, 0
      %p70 = por %p68, %p69
      %s71 = ssub.s32 %s11, %s18
      %p72 = scmp.eq.s32.totalorder %s71, 0
      %s74 = sadd.s32 %s73, 1
      %s75 = scalar_select %p72, %s73, %s74
      %p78 = pneg %p72
      %p79 = scmp.eq.s32.totalorder %s11, 1
      %p80 = por %p78, %p79
      %p81 = scmp.ne.s32.totalorder %s73, %s76
      %p82 = scmp.eq.s32.totalorder %s11, 0
      %p83 = por %p81, %p82
      %p84 = scmp.ne.s32.totalorder %s73, %s76
      %p85 = scmp.eq.s32.totalorder %s16, 1
      %p86 = por %p84, %p85
      %p87 = scmp.ne.s32.totalorder %s76, %s77
      %p88 = scmp.eq.s32.totalorder %s16, 0
      %p89 = por %p87, %p88
      %p90 = scmp.ne.s32.totalorder %s76, %s77
      %p91 = scmp.eq.s32.totalorder %s17, 1
      %p92 = por %p90, %p91
      %p94 = scmp.ne.s32.totalorder %s77, %s93
      %p95 = scmp.eq.s32.totalorder %s17, 0
      %p96 = por %p94, %p95
      %p97 = scmp.le.s32.totalorder 1, %s11
      %p98 = scmp.lt.s32.totalorder %s11, 3
      %p99 = pnand %p97, %p98
      %p100 = pneg %p99
      // Predicated region
      $region9: #{decoder_forward.20} parent=5 // pred_check
        _
      $region10: #{decoder_forward.20} parent=5 // pred_check_branch
        %102 = sbr.rel (%p99) target = $region12
      $region11: #{decoder_forward.20} parent=5 // pred_region
        %s103 = ssub.s32 %s11, 1
      $region12: #{decoder_forward.20} parent=5 // pred_fallthru
        _
      %p104 = scmp.lt.s32.totalorder %s11, 2
      // Predicated region
      $region13: #{decoder_forward.20} parent=5 // pred_check
        %p105 = pneg %p104
      $region14: #{decoder_forward.20} parent=5 // pred_check_branch
        %107 = sbr.rel (%p105) target = $region16
      $region15: #{decoder_forward.20} parent=5 // pred_region
        // Predicated region
        $region17: #{decoder_forward.20} parent=15 // pred_check
          %p108 = pneg %p31
        $region18: #{decoder_forward.20} parent=15 // pred_check_branch
          %110 = sbr.rel (%p108) target = $region20
        $region19: #{decoder_forward.20} parent=15 // pred_region
          %p111 = scmp.lt.s32.totalorder %s11, 1
          %s112 = scalar_select %p111, %s11, 1
          %s113 = smul.addr %s112, 8
          %s114 = scalar_lea.vmem %s0, %s113
        $region20: #{decoder_forward.20} parent=15 // pred_fallthru
          _
        // Predicated region
        $region21: #{decoder_forward.20} parent=15 // pred_check
          %p115 = pneg %p57
        $region22: #{decoder_forward.20} parent=15 // pred_check_branch
          %117 = sbr.rel (%p115) target = $region24
        $region23: #{decoder_forward.20} parent=15 // pred_region
          %s118 = sand.u32 %s47, 1
          %s119 = scalar_lea.sflag [#allocation3], %s118
          %s120 = sand.u32 %s47, 1
          %s121 = smul.addr %s120, 8
          %s122 = scalar_lea.vmem [#allocation2], %s121
          %124 = vsyncadd %s119, 0
          %s125 = smul.addr %s11, 8
          %s126 = scalar_lea.hbm %s1, %s125
          %s128 = sshll.u32 %s126, 4
          %s129 = int_to_ptr.hbm [resolvable:$true] %s128
          %s130 = sshll.u32 %s122, 4
          %s131 = int_to_ptr.vmem [resolvable:$true] %s130
          %133 = dma.hbm_to_vmem [thread:$0]  %s129, 128, %s131, %s119
        $region24: #{decoder_forward.20} parent=15 // pred_fallthru
          _
      $region16: #{decoder_forward.20} parent=5 // pred_fallthru
        _
      %p134 = scmp.le.s32.totalorder 1, %s11
      %p135 = scmp.lt.s32.totalorder %s11, 3
      %p136 = pnand %p134, %p135
      %p137 = pneg %p136
      // Predicated region
      $region25: #{decoder_forward.20} parent=5 // pred_check
        _
      $region26: #{decoder_forward.20} parent=5 // pred_check_branch
        %139 = sbr.rel (%p136) target = $region28
      $region27: #{decoder_forward.20} parent=5 // pred_region
        %s140 = ssub.s32 %s11, 1
        %s141 = sand.u32 %s50, 1
        %s142 = scalar_lea.sflag [#allocation3], %s141
        %s143 = sand.u32 %s50, 1
        %s144 = smul.addr %s143, 8
        %s145 = scalar_lea.vmem [#allocation2], %s144
        // Predicated region
        $region29: #{decoder_forward.20} parent=27 // pred_check
          %p146 = pneg %p63
        $region30: #{decoder_forward.20} parent=27 // pred_check_branch
          %148 = sbr.rel (%p146) target = $region32
        $region31: #{decoder_forward.20} parent=27 // pred_region
          %150 = dma.done %s142, 128
        $region32: #{decoder_forward.20} parent=27 // pred_fallthru
          _
        %p151 = scmp.lt.s32.totalorder %s16, 1
        %s152 = scalar_select %p151, %s16, 1
        %s153 = smul.addr %s152, 8
        %s154 = scalar_lea.vmem %s0, %s153
        %p155 = pneg %p37
        %p156 = pneg %p34
        %s157 = sand.u32 %s50, 1
        %s158 = scalar_lea.sflag [#allocation3], %s157
        %s159 = sand.u32 %s50, 1
        %s160 = smul.addr %s159, 8
        %s161 = scalar_lea.vmem [#allocation2], %s160
        %p162 = pneg %p63
        %p163 = pneg %p60
        %p164 = pneg %p89
        %p165 = pneg %p86
        %p166 = scmp.lt.s32.totalorder %s16, 1
        %s167 = scalar_select %p166, %s16, 1
        %s168 = smul.addr %s167, 8
        %s169 = scalar_lea.vmem %s2, %s168
        %p170 = scmp.lt.s32.totalorder %s16, 1
        %s171 = scalar_select %p170, %s16, 1
        %s172 = smul.addr %s171, 8
        %s173 = scalar_lea.vmem %s0, %s172
        %p174 = scmp.lt.s32.totalorder %s16, 1
        %s175 = scalar_select %p174, %s16, 1
        %s176 = smul.addr %s175, 8
        %s177 = scalar_lea.vmem %s2, %s176
        %v178 = vld [vmem:[%s173] sm:$0xff]
        %v179 = vld [vmem:[%s145] sm:$0xff]
        %181 = vrot.lane.b32.xlu0 %v178, 96
        %v182 = vpop.permute.xlu0 %181
        %vm183 = vcmask 64512
        %v184 = vsel %vm183, %v178, 0
        %v186 = vsel %vm183, %v182, 0
        %188 = vmatpush.xpose.msra.mxu0 0.0
        %189 = vmatpush.xpose.msra.mxu0 0.0
        %190 = vmatpush.xpose.msra.mxu0 0.0
        %191 = vmatpush.xpose.msra.mxu0 0.0
        %192 = vmatpush.xpose.msra.mxu0 0.0
        %193 = vmatpush.xpose.msra.mxu0 0.0
        %194 = vmatpush.xpose.msra.mxu0 0.0
        %195 = vmatpush.xpose.msra.mxu0 0.0
        %196 = vmatpush.xpose.msra.mxu0 0.0
        %197 = vmatpush.xpose.msra.mxu0 0.0
        %198 = vmatpush.xpose.msra.mxu0 0.0
        %199 = vmatpush.xpose.msra.mxu0 0.0
        %200 = vmatpush.xpose.msra.mxu0 0.0
        %201 = vmatpush.xpose.msra.mxu0 0.0
        %202 = vmatpush.xpose.msra.mxu0 0.0
        %203 = vmatpush.xpose.msra.mxu0 %v186
        %204 = vmatmul.f32.gmra.mxu0 %v184
        %v205 = vpop.f32.mrf.mxu0
        %v206 = vadd.f32 0.0, %v205
        %207 = vdwg.mxu0
        %v208 = vmul.f32 %v206, 0.35355338
        %vm209 = vcmp.eq.s32.totalorder %v179, 0
        %v210 = vsel %vm209, -1e+09, %v208
        %v211 = vsel %vm183, %v210, -inf
        %212 = vmax.xlane.f32.xlu0 %v211
        %v213 = vpop.xlane.xlu0 %212
        %v214 = vsub.f32 %v210, %v213
        %v215 = vmul.f32 %v214, 1.442695
        %v216 = vpow.pop %v215
        %v217 = vsel %vm183, %v216, 0.0
        %218 = vadd.xlane.f32.xlu0 %v217
        %v219 = vpop.xlane.xlu0 %218
        %v220 = vmax.f32 %v219, 1e-30
        %v221 = vrcp.pop %v220
        %v222 = vmul.f32 %v216, %v221
        %223 = vrot.lane.b32.xlu0 %v178, 64
        %v224 = vpop.permute.xlu0 %223
        %v227 = vsel %vm183, %v222, 0
        %229 = vmatpush.msra.mxu0 0.0
        %230 = vmatpush.msra.mxu0 0.0
        %231 = vmatpush.msra.mxu0 0.0
        %232 = vmatpush.msra.mxu0 0.0
        %233 = vmatpush.msra.mxu0 0.0
        %234 = vmatpush.msra.mxu0 0.0
        %235 = vmatpush.msra.mxu0 0.0
        %236 = vmatpush.msra.mxu0 0.0
        %237 = vmatpush.msra.mxu0 0.0
        %238 = vmatpush.msra.mxu0 0.0
        %239 = vmatpush.msra.mxu0 0.0
        %240 = vmatpush.msra.mxu0 0.0
        %241 = vmatpush.msra.mxu0 0.0
        %242 = vmatpush.msra.mxu0 0.0
        %243 = vmatpush.msra.mxu0 0.0
        %244 = vmatpush.msra.mxu0 %v224
        %245 = vmatmul.f32.gmra.mxu0 %v227
        %v246 = vpop.f32.mrf.mxu0
        %v247 = vadd.f32 0.0, %v246
        %248 = vdwg.mxu0
        %249 = vrot.lane.b32.xlu0 %v178, 120
        %v250 = vpop.permute.xlu0 %249
        %251 = vrot.lane.b32.xlu0 %v178, 88
        %v252 = vpop.permute.xlu0 %251
        %v253 = vsel %vm183, %v250, 0
        %v255 = vsel %vm183, %v252, 0
        %257 = vmatpush.xpose.msra.mxu0 0.0
        %258 = vmatpush.xpose.msra.mxu0 0.0
        %259 = vmatpush.xpose.msra.mxu0 0.0
        %260 = vmatpush.xpose.msra.mxu0 0.0
        %261 = vmatpush.xpose.msra.mxu0 0.0
        %262 = vmatpush.xpose.msra.mxu0 0.0
        %263 = vmatpush.xpose.msra.mxu0 0.0
        %264 = vmatpush.xpose.msra.mxu0 0.0
        %265 = vmatpush.xpose.msra.mxu0 0.0
        %266 = vmatpush.xpose.msra.mxu0 0.0
        %267 = vmatpush.xpose.msra.mxu0 0.0
        %268 = vmatpush.xpose.msra.mxu0 0.0
        %269 = vmatpush.xpose.msra.mxu0 0.0
        %270 = vmatpush.xpose.msra.mxu0 0.0
        %271 = vmatpush.xpose.msra.mxu0 0.0
        %272 = vmatpush.xpose.msra.mxu0 %v255
        %273 = vmatmul.f32.gmra.mxu0 %v253
        %v274 = vpop.f32.mrf.mxu0
        %v275 = vadd.f32 0.0, %v274
        %276 = vdwg.mxu0
        %v277 = vmul.f32 %v275, 0.35355338
        %v278 = vsel %vm209, -1e+09, %v277
        %v279 = vsel %vm183, %v278, -inf
        %280 = vmax.xlane.f32.xlu0 %v279
        %v281 = vpop.xlane.xlu0 %280
        %v282 = vsub.f32 %v278, %v281
        %v283 = vmul.f32 %v282, 1.442695
        %v284 = vpow.pop %v283
        %v285 = vsel %vm183, %v284, 0.0
        %286 = vadd.xlane.f32.xlu0 %v285
        %v287 = vpop.xlane.xlu0 %286
        %v288 = vmax.f32 %v287, 1e-30
        %v289 = vrcp.pop %v288
        %v290 = vmul.f32 %v284, %v289
        %291 = vrot.lane.b32.xlu0 %v178, 56
        %v292 = vpop.permute.xlu0 %291
        %v295 = vsel %vm183, %v290, 0
        %297 = vmatpush.msra.mxu0 0.0
        %298 = vmatpush.msra.mxu0 0.0
        %299 = vmatpush.msra.mxu0 0.0
        %300 = vmatpush.msra.mxu0 0.0
        %301 = vmatpush.msra.mxu0 0.0
        %302 = vmatpush.msra.mxu0 0.0
        %303 = vmatpush.msra.mxu0 0.0
        %304 = vmatpush.msra.mxu0 0.0
        %305 = vmatpush.msra.mxu0 0.0
        %306 = vmatpush.msra.mxu0 0.0
        %307 = vmatpush.msra.mxu0 0.0
        %308 = vmatpush.msra.mxu0 0.0
        %309 = vmatpush.msra.mxu0 0.0
        %310 = vmatpush.msra.mxu0 0.0
        %311 = vmatpush.msra.mxu0 0.0
        %312 = vmatpush.msra.mxu0 %v292
        %313 = vmatmul.f32.gmra.mxu0 %v295
        %v314 = vpop.f32.mrf.mxu0
        %v315 = vadd.f32 0.0, %v314
        %316 = vdwg.mxu0
        %317 = vrot.lane.b32.xlu0 %v178, 112
        %v318 = vpop.permute.xlu0 %317
        %319 = vrot.lane.b32.xlu0 %v178, 80
        %v320 = vpop.permute.xlu0 %319
        %v321 = vsel %vm183, %v318, 0
        %v323 = vsel %vm183, %v320, 0
        %325 = vmatpush.xpose.msra.mxu0 0.0
        %326 = vmatpush.xpose.msra.mxu0 0.0
        %327 = vmatpush.xpose.msra.mxu0 0.0
        %328 = vmatpush.xpose.msra.mxu0 0.0
        %329 = vmatpush.xpose.msra.mxu0 0.0
        %330 = vmatpush.xpose.msra.mxu0 0.0
        %331 = vmatpush.xpose.msra.mxu0 0.0
        %332 = vmatpush.xpose.msra.mxu0 0.0
        %333 = vmatpush.xpose.msra.mxu0 0.0
        %334 = vmatpush.xpose.msra.mxu0 0.0
        %335 = vmatpush.xpose.msra.mxu0 0.0
        %336 = vmatpush.xpose.msra.mxu0 0.0
        %337 = vmatpush.xpose.msra.mxu0 0.0
        %338 = vmatpush.xpose.msra.mxu0 0.0
        %339 = vmatpush.xpose.msra.mxu0 0.0
        %340 = vmatpush.xpose.msra.mxu0 %v323
        %341 = vmatmul.f32.gmra.mxu0 %v321
        %v342 = vpop.f32.mrf.mxu0
        %v343 = vadd.f32 0.0, %v342
        %344 = vdwg.mxu0
        %v345 = vmul.f32 %v343, 0.35355338
        %v346 = vsel %vm209, -1e+09, %v345
        %v347 = vsel %vm183, %v346, -inf
        %348 = vmax.xlane.f32.xlu0 %v347
        %v349 = vpop.xlane.xlu0 %348
        %v350 = vsub.f32 %v346, %v349
        %v351 = vmul.f32 %v350, 1.442695
        %v352 = vpow.pop %v351
        %v353 = vsel %vm183, %v352, 0.0
        %354 = vadd.xlane.f32.xlu0 %v353
        %v355 = vpop.xlane.xlu0 %354
        %v356 = vmax.f32 %v355, 1e-30
        %v357 = vrcp.pop %v356
        %v358 = vmul.f32 %v352, %v357
        %359 = vrot.lane.b32.xlu0 %v178, 48
        %v360 = vpop.permute.xlu0 %359
        %v363 = vsel %vm183, %v358, 0
        %365 = vmatpush.msra.mxu0 0.0
        %366 = vmatpush.msra.mxu0 0.0
        %367 = vmatpush.msra.mxu0 0.0
        %368 = vmatpush.msra.mxu0 0.0
        %369 = vmatpush.msra.mxu0 0.0
        %370 = vmatpush.msra.mxu0 0.0
        %371 = vmatpush.msra.mxu0 0.0
        %372 = vmatpush.msra.mxu0 0.0
        %373 = vmatpush.msra.mxu0 0.0
        %374 = vmatpush.msra.mxu0 0.0
        %375 = vmatpush.msra.mxu0 0.0
        %376 = vmatpush.msra.mxu0 0.0
        %377 = vmatpush.msra.mxu0 0.0
        %378 = vmatpush.msra.mxu0 0.0
        %379 = vmatpush.msra.mxu0 0.0
        %380 = vmatpush.msra.mxu0 %v360
        %381 = vmatmul.f32.gmra.mxu0 %v363
        %v382 = vpop.f32.mrf.mxu0
        %v383 = vadd.f32 0.0, %v382
        %384 = vdwg.mxu0
        %385 = vrot.lane.b32.xlu0 %v178, 104
        %v386 = vpop.permute.xlu0 %385
        %387 = vrot.lane.b32.xlu0 %v178, 72
        %v388 = vpop.permute.xlu0 %387
        %v389 = vsel %vm183, %v386, 0
        %v391 = vsel %vm183, %v388, 0
        %393 = vmatpush.xpose.msra.mxu0 0.0
        %394 = vmatpush.xpose.msra.mxu0 0.0
        %395 = vmatpush.xpose.msra.mxu0 0.0
        %396 = vmatpush.xpose.msra.mxu0 0.0
        %397 = vmatpush.xpose.msra.mxu0 0.0
        %398 = vmatpush.xpose.msra.mxu0 0.0
        %399 = vmatpush.xpose.msra.mxu0 0.0
        %400 = vmatpush.xpose.msra.mxu0 0.0
        %401 = vmatpush.xpose.msra.mxu0 0.0
        %402 = vmatpush.xpose.msra.mxu0 0.0
        %403 = vmatpush.xpose.msra.mxu0 0.0
        %404 = vmatpush.xpose.msra.mxu0 0.0
        %405 = vmatpush.xpose.msra.mxu0 0.0
        %406 = vmatpush.xpose.msra.mxu0 0.0
        %407 = vmatpush.xpose.msra.mxu0 0.0
        %408 = vmatpush.xpose.msra.mxu0 %v391
        %409 = vmatmul.f32.gmra.mxu0 %v389
        %v410 = vpop.f32.mrf.mxu0
        %v411 = vadd.f32 0.0, %v410
        %412 = vdwg.mxu0
        %v413 = vmul.f32 %v411, 0.35355338
        %v414 = vsel %vm209, -1e+09, %v413
        %v415 = vsel %vm183, %v414, -inf
        %416 = vmax.xlane.f32.xlu0 %v415
        %v417 = vpop.xlane.xlu0 %416
        %v418 = vsub.f32 %v414, %v417
        %v419 = vmul.f32 %v418, 1.442695
        %v420 = vpow.pop %v419
        %v421 = vsel %vm183, %v420, 0.0
        %422 = vadd.xlane.f32.xlu0 %v421
        %v423 = vpop.xlane.xlu0 %422
        %v424 = vmax.f32 %v423, 1e-30
        %v425 = vrcp.pop %v424
        %v426 = vmul.f32 %v420, %v425
        %427 = vrot.lane.b32.xlu0 %v178, 40
        %v428 = vpop.permute.xlu0 %427
        %v431 = vsel %vm183, %v426, 0
        %433 = vmatpush.msra.mxu0 0.0
        %434 = vmatpush.msra.mxu0 0.0
        %435 = vmatpush.msra.mxu0 0.0
        %436 = vmatpush.msra.mxu0 0.0
        %437 = vmatpush.msra.mxu0 0.0
        %438 = vmatpush.msra.mxu0 0.0
        %439 = vmatpush.msra.mxu0 0.0
        %440 = vmatpush.msra.mxu0 0.0
        %441 = vmatpush.msra.mxu0 0.0
        %442 = vmatpush.msra.mxu0 0.0
        %443 = vmatpush.msra.mxu0 0.0
        %444 = vmatpush.msra.mxu0 0.0
        %445 = vmatpush.msra.mxu0 0.0
        %446 = vmatpush.msra.mxu0 0.0
        %447 = vmatpush.msra.mxu0 0.0
        %448 = vmatpush.msra.mxu0 %v428
        %449 = vmatmul.f32.gmra.mxu0 %v431
        %v450 = vpop.f32.mrf.mxu0
        %v451 = vadd.f32 0.0, %v450
        %452 = vdwg.mxu0
        %454 = vrot.lane.b32.xlu0 %v315, 8
        %v455 = vpop.permute.xlu0 %454
        %458 = vrot.lane.b32.xlu0 %v383, 16
        %v459 = vpop.permute.xlu0 %458
        %462 = vrot.lane.b32.xlu0 %v451, 24
        %v463 = vpop.permute.xlu0 %462
        %v465 = vsel %vm183, %v247, %v455
        %vm466 = vcmask 130048
        %v467 = vsel %vm466, %v465, %v459
        %vm468 = vcmask 195584
        %v469 = vsel %vm468, %v467, %v463
        %vm470 = vcmask 261120
        %471 = vst.msk [vmem:[%s177] sm:$0xff] %vm470, %v469
        %p472 = scmp.lt.s32.totalorder %s16, 1
        %s473 = scalar_select %p472, %s16, 1
        %s474 = smul.addr %s473, 8
        %s475 = scalar_lea.vmem %s2, %s474
        // Predicated region
        $region33: #{decoder_forward.20} parent=27 // pred_check
          %p476 = pneg %p86
        $region34: #{decoder_forward.20} parent=27 // pred_check_branch
          %478 = sbr.rel (%p476) target = $region36
        $region35: #{decoder_forward.20} parent=27 // pred_region
          _
        $region36: #{decoder_forward.20} parent=27 // pred_fallthru
          _
      $region28: #{decoder_forward.20} parent=5 // pred_fallthru
        _
      %p479 = scmp.le.s32.totalorder 2, %s11
      // Predicated region
      $region37: #{decoder_forward.20} parent=5 // pred_check
        %p480 = pneg %p479
      $region38: #{decoder_forward.20} parent=5 // pred_check_branch
        %482 = sbr.rel (%p480) target = $region40
      $region39: #{decoder_forward.20} parent=5 // pred_region
        %s483 = ssub.s32 %s11, 2
        // Predicated region
        $region41: #{decoder_forward.20} parent=39 // pred_check
          %p484 = pneg %p92
        $region42: #{decoder_forward.20} parent=39 // pred_check_branch
          %486 = sbr.rel (%p484) target = $region44
        $region43: #{decoder_forward.20} parent=39 // pred_region
          %p487 = scmp.lt.s32.totalorder %s17, 1
          %s488 = scalar_select %p487, %s17, 1
          %s489 = smul.addr %s488, 8
          %s490 = scalar_lea.vmem %s2, %s489
        $region44: #{decoder_forward.20} parent=39 // pred_fallthru
          _
      $region40: #{decoder_forward.20} parent=5 // pred_fallthru
        _
    $region6: #{decoder_forward.20} parent=1 // loop_footer
      %s15 = sadd.s32 1, %s11
    $region7: #{decoder_forward.20} parent=1 // loop_footer_branch
      %10 = sbr.rel target = $region3
    $region8: #{decoder_forward.20} parent=1 // loop_exit
      _
    %491 = vsyncpa [#allocation3], 1
    %s492 = scalar_lea.sflag [#allocation3], 1
    %493 = vsyncpa %s492, 1

// kernel: decoder_forward.23
$region0: #{decoder_forward.23}
  #allocation0 [shape = 'u32[]', space=smem, size = 0x4, offset = 0x4, fixed_abs, tag = 'smem constant byte address 0x4 - core index']
  #allocation1 [shape = 'u32[72,128]{1,0:T(1,128)}', space=vmem, size = 0x9000, scoped, tag = 'internal scratch']
  %s0 = inlined_call_operand.hbm [shape: f32[16,32], index: 0, kind: input, shape index: {}]
  %s1 = inlined_call_operand.vmem [shape: f32[32,64], index: 1, kind: input, shape index: {}]
  %s2 = inlined_call_operand.vmem [shape: f32[1,64], index: 2, kind: input, shape index: {}]
  %s3 = inlined_call_operand.vmem [shape: f32[16,64], index: 3, kind: output, shape index: {}]
  %s4 = sld [smem:[#allocation0]]
  $region26: #{decoder_forward.23} parent=0
    _
  %s6 = ssub.s32 1, %s4
  %s7 = scalar_select 0, %s6, %s4
  $region1: #{decoder_forward.23} parent=0
    #allocation2 [shape = 'u8[8192]{0}', space=vmem, size = 0x2000, scoped, tag = 'input window, operand 0, single buffered']
    #allocation3 [shape = 's32[1]{0}', space=sflag, size = 0x4, scoped, tag = 'scoped memory for decoder_forward.23']
    %8 = vsyncpa [#allocation3], 0
    // Predicated region
    $region2: #{decoder_forward.23} parent=1 // pred_check
      _
    $region3: #{decoder_forward.23} parent=1 // pred_check_branch
      %10 = sbr.rel (0) target = $region5
    $region4: #{decoder_forward.23} parent=1 // pred_region
      %12 = vsyncadd [#allocation3], 0
      %s13 = sshll.u32 %s0, 4
      %s14 = int_to_ptr.hbm [resolvable:$true] %s13
      %s15 = sshll.u32 [#allocation2], 4
      %s16 = int_to_ptr.vmem [resolvable:$true] %s15
      %21 = dma.hbm_to_vmem [thread:$0]  %s14, 256, %s16, [#allocation3], 128, 128, 8
    $region5: #{decoder_forward.23} parent=1 // pred_fallthru
      _
    // Predicated region
    $region6: #{decoder_forward.23} parent=1 // pred_check
      _
    $region7: #{decoder_forward.23} parent=1 // pred_check_branch
      %23 = sbr.rel (0) target = $region9
    $region8: #{decoder_forward.23} parent=1 // pred_region
      _
    $region9: #{decoder_forward.23} parent=1 // pred_fallthru
      _
    // Predicated region
    $region10: #{decoder_forward.23} parent=1 // pred_check
      _
    $region11: #{decoder_forward.23} parent=1 // pred_check_branch
      %25 = sbr.rel (0) target = $region13
    $region12: #{decoder_forward.23} parent=1 // pred_region
      _
    $region13: #{decoder_forward.23} parent=1 // pred_fallthru
      _
    // Predicated region
    $region14: #{decoder_forward.23} parent=1 // pred_check
      _
    $region15: #{decoder_forward.23} parent=1 // pred_check_branch
      %27 = sbr.rel (0) target = $region17
    $region16: #{decoder_forward.23} parent=1 // pred_region
      %29 = dma.done [#allocation3], 256
    $region17: #{decoder_forward.23} parent=1 // pred_fallthru
      _
    %v30 = vld [vmem:[#allocation2] sm:$0xff]
    %v31 = vld [vmem:[#allocation2 + $0x8] sm:$0xff]
    %v32 = vld [vmem:[%s1] sm:$0xff]
    %v33 = vld [vmem:[%s1 + $0x8] sm:$0xff]
    %v34 = vld [vmem:[%s1 + $0x10] sm:$0xff]
    %v35 = vld [vmem:[%s1 + $0x18] sm:$0xff]
    %v36 = vld [vmem:[%s2] sm:$0x1]
    %v38 = vperm.slane %v36, 0
    %vm40 = vcmask 261120
    %v42 = vsel %vm40, %v30, 0
    %v45 = vsel %vm40, %v31, 0
    %47 = vmatpush.msra.mxu0 0.0
    %48 = vmatpush.msra.mxu0 0.0
    %49 = vmatpush.msra.mxu0 0.0
    %50 = vmatpush.msra.mxu0 0.0
    %51 = vmatpush.msra.mxu0 0.0
    %52 = vmatpush.msra.mxu0 0.0
    %53 = vmatpush.msra.mxu0 0.0
    %54 = vmatpush.msra.mxu0 0.0
    %55 = vmatpush.msra.mxu0 0.0
    %56 = vmatpush.msra.mxu0 0.0
    %57 = vmatpush.msra.mxu0 0.0
    %58 = vmatpush.msra.mxu0 0.0
    %59 = vmatpush.msra.mxu0 %v35
    %60 = vmatpush.msra.mxu0 %v34
    %61 = vmatpush.msra.mxu0 %v33
    %62 = vmatpush.msra.mxu0 %v32
    %63 = vmatmul.f32.gmra.mxu0 %v42
    %v64 = vpop.f32.mrf.mxu0
    %v65 = vadd.f32 %v38, %v64
    %66 = vmatmul.f32.gmra.mxu0 %v45
    %v67 = vpop.f32.mrf.mxu0
    %v68 = vadd.f32 %v38, %v67
    %69 = vdwg.mxu0
    %vm70 = vcmask 523264
    %71 = vst.msk [vmem:[%s3] sm:$0xff] %vm70, %v65
    %72 = vst.msk [vmem:[%s3 + $0x8] sm:$0xff] %vm70, %v68
    // Predicated region
    $region18: #{decoder_forward.23} parent=1 // pred_check
      _
    $region19: #{decoder_forward.23} parent=1 // pred_check_branch
      %74 = sbr.rel (0) target = $region21
    $region20: #{decoder_forward.23} parent=1 // pred_region
      _
    $region21: #{decoder_forward.23} parent=1 // pred_fallthru
      _
    // Predicated region
    $region22: #{decoder_forward.23} parent=1 // pred_check
      _
    $region23: #{decoder_forward.23} parent=1 // pred_check_branch
      %76 = sbr.rel (0) target = $region25
    $region24: #{decoder_forward.23} parent=1 // pred_region
      _
    $region25: #{decoder_forward.23} parent=1 // pred_fallthru
      _
    %77 = vsyncpa [#allocation3], 1

// kernel: decoder_forward.22
$region0: #{decoder_forward.22}
  #allocation0 [shape = 'u32[]', space=smem, size = 0x4, offset = 0x4, fixed_abs, tag = 'smem constant byte address 0x4 - core index']
  #allocation1 [shape = 'u32[72,128]{1,0:T(1,128)}', space=vmem, size = 0x9000, scoped, tag = 'internal scratch']
  %s0 = inlined_call_operand.vmem [shape: f32[16,32], index: 0, kind: input, shape index: {}]
  %s1 = inlined_call_operand.vmem [shape: f32[1,32], index: 1, kind: input, shape index: {}]
  %s2 = inlined_call_operand.vmem [shape: f32[1,32], index: 2, kind: input, shape index: {}]
  %s3 = inlined_call_operand.vmem [shape: f32[32,32], index: 3, kind: input, shape index: {}]
  %s4 = inlined_call_operand.vmem [shape: f32[1,32], index: 4, kind: input, shape index: {}]
  %s5 = inlined_call_operand.vmem [shape: f32[16,32], index: 5, kind: output, shape index: {}]
  %s6 = sld [smem:[#allocation0]]
  $region30: #{decoder_forward.22} parent=0
    _
  %s8 = ssub.s32 1, %s6
  %s9 = scalar_select 0, %s8, %s6
  // Predicated region
  $region2: #{decoder_forward.22} parent=0 // pred_check
    _
  $region3: #{decoder_forward.22} parent=0 // pred_check_branch
    %11 = sbr.rel (0) target = $region5
  $region4: #{decoder_forward.22} parent=0 // pred_region
    _
  $region5: #{decoder_forward.22} parent=0 // pred_fallthru
    _
  // Predicated region
  $region6: #{decoder_forward.22} parent=0 // pred_check
    _
  $region7: #{decoder_forward.22} parent=0 // pred_check_branch
    %13 = sbr.rel (0) target = $region9
  $region8: #{decoder_forward.22} parent=0 // pred_region
    _
  $region9: #{decoder_forward.22} parent=0 // pred_fallthru
    _
  // Predicated region
  $region10: #{decoder_forward.22} parent=0 // pred_check
    _
  $region11: #{decoder_forward.22} parent=0 // pred_check_branch
    %15 = sbr.rel (0) target = $region13
  $region12: #{decoder_forward.22} parent=0 // pred_region
    _
  $region13: #{decoder_forward.22} parent=0 // pred_fallthru
    _
  // Predicated region
  $region14: #{decoder_forward.22} parent=0 // pred_check
    _
  $region15: #{decoder_forward.22} parent=0 // pred_check_branch
    %17 = sbr.rel (0) target = $region17
  $region16: #{decoder_forward.22} parent=0 // pred_region
    _
  $region17: #{decoder_forward.22} parent=0 // pred_fallthru
    _
  // Predicated region
  $region18: #{decoder_forward.22} parent=0 // pred_check
    _
  $region19: #{decoder_forward.22} parent=0 // pred_check_branch
    %19 = sbr.rel (0) target = $region21
  $region20: #{decoder_forward.22} parent=0 // pred_region
    _
  $region21: #{decoder_forward.22} parent=0 // pred_fallthru
    _
  %v20 = vld [vmem:[%s0] sm:$0xff]
  %v21 = vld [vmem:[%s0 + $0x8] sm:$0xff]
  %v22 = vld [vmem:[%s1] sm:$0x1]
  %v23 = vld [vmem:[%s2] sm:$0x1]
  %vm24 = vcmask 261120
  %v25 = vsel %vm24, %v20, 0.0
  %26 = vadd.xlane.f32.xlu0 %v25
  %v27 = vpop.xlane.xlu0 %26
  %v28 = vsel %vm24, %v21, 0.0
  %29 = vadd.xlane.f32.xlu0 %v28
  %v30 = vpop.xlane.xlu0 %29
  %v31 = vrcp.pop 32.0
  %v32 = vmul.f32 32.0, %v31
  %v33 = vsub.f32 1.0, %v32
  %v34 = vmul.f32 %v31, %v33
  %v35 = vadd.f32 %v31, %v34
  %vm36 = vweird.f32 %v31
  %v37 = vsel %vm36, %v31, %v35
  %v38 = vmul.f32 %v27, %v37
  %v39 = vmul.f32 %v30, %v37
  %v40 = vsub.f32 %v20, %v38
  %v41 = vsub.f32 %v21, %v39
  %v42 = vmul.f32 %v40, %v40
  %v43 = vmul.f32 %v41, %v41
  %v44 = vsel %vm24, %v42, 0.0
  %45 = vadd.xlane.f32.xlu0 %v44
  %v46 = vpop.xlane.xlu0 %45
  %v47 = vsel %vm24, %v43, 0.0
  %48 = vadd.xlane.f32.xlu0 %v47
  %v49 = vpop.xlane.xlu0 %48
  %v50 = vmul.f32 %v46, 0.032258064
  %v51 = vmul.f32 %v49, 0.032258064
  %v52 = vrsqrt.pop %v50
  %v53 = vmul.f32 %v52, %v50
  %v54 = vmul.f32 %v53, %v52
  %v55 = vmul.f32 0.5, %v54
  %v56 = vsub.f32 1.5, %v55
  %v57 = vmul.f32 %v52, %v56
  %v58 = vmul.f32 %v50, %v57
  %vm59 = vcmp.eq.f32.partialorder %v50, inf
  %v60 = vsel %vm59, %v50, %v58
  %vm61 = vcmp.eq.f32.partialorder %v50, 0.0
  %v62 = vand.u32 %v50, 2147483648
  %v63 = vsel %vm61, %v62, %v60
  %v64 = vrsqrt.pop %v51
  %v65 = vmul.f32 %v64, %v51
  %v66 = vmul.f32 %v65, %v64
  %v67 = vmul.f32 0.5, %v66
  %v68 = vsub.f32 1.5, %v67
  %v69 = vmul.f32 %v64, %v68
  %v70 = vmul.f32 %v51, %v69
  %vm71 = vcmp.eq.f32.partialorder %v51, inf
  %v72 = vsel %vm71, %v51, %v70
  %vm73 = vcmp.eq.f32.partialorder %v51, 0.0
  %v74 = vand.u32 %v51, 2147483648
  %v75 = vsel %vm73, %v74, %v72
  %v77 = vperm.slane %v22, 0
  %v79 = vmul.f32 %v77, %v40
  %v80 = vmul.f32 %v77, %v41
  %v81 = vadd.f32 %v63, 1e-06
  %v82 = vadd.f32 %v75, 1e-06
  %v83 = vrcp.pop %v81
  %v84 = vmul.f32 %v81, %v83
  %v85 = vsub.f32 1.0, %v84
  %v86 = vmul.f32 %v83, %v85
  %v87 = vadd.f32 %v83, %v86
  %vm88 = vweird.f32 %v81
  %vm89 = vweird.f32 %v83
  %vm90 = vmor %vm88, %vm89
  %v91 = vsel %vm90, %v83, %v87
  %v92 = vand.u32 2147483647, %v81
  %vm93 = vcmp.eq.f32.partialorder %v92, 8.507059e+37
  %v94 = vand.u32 %v81, 2147483648
  %v95 = vor.u32 1.1754944e-38, %v94
  %v96 = vsel %vm93, %v95, %v91
  %v97 = vmul.f32 %v79, %v96
  %v98 = vrcp.pop %v82
  %v99 = vmul.f32 %v82, %v98
  %v100 = vsub.f32 1.0, %v99
  %v101 = vmul.f32 %v98, %v100
  %v102 = vadd.f32 %v98, %v101
  %vm103 = vweird.f32 %v82
  %vm104 = vweird.f32 %v98
  %vm105 = vmor %vm103, %vm104
  %v106 = vsel %vm105, %v98, %v102
  %v107 = vand.u32 2147483647, %v82
  %vm108 = vcmp.eq.f32.partialorder %v107, 8.507059e+37
  %v109 = vand.u32 %v82, 2147483648
  %v110 = vor.u32 1.1754944e-38, %v109
  %v111 = vsel %vm108, %v110, %v106
  %v112 = vmul.f32 %v80, %v111
  %v114 = vperm.slane %v23, 0
  %v116 = vadd.f32 %v97, %v114
  %v117 = vadd.f32 %v112, %v114
  %v118 = vld [vmem:[%s3] sm:$0xff]
  %v119 = vld [vmem:[%s3 + $0x8] sm:$0xff]
  %v120 = vld [vmem:[%s3 + $0x10] sm:$0xff]
  %v121 = vld [vmem:[%s3 + $0x18] sm:$0xff]
  %v122 = vld [vmem:[%s4] sm:$0x1]
  %v124 = vperm.slane %v122, 0
  %v127 = vsel %vm24, %v116, 0
  %v130 = vsel %vm24, %v117, 0
  %132 = vmatpush.msra.mxu0 0.0
  %133 = vmatpush.msra.mxu0 0.0
  %134 = vmatpush.msra.mxu0 0.0
  %135 = vmatpush.msra.mxu0 0.0
  %136 = vmatpush.msra.mxu0 0.0
  %137 = vmatpush.msra.mxu0 0.0
  %138 = vmatpush.msra.mxu0 0.0
  %139 = vmatpush.msra.mxu0 0.0
  %140 = vmatpush.msra.mxu0 0.0
  %141 = vmatpush.msra.mxu0 0.0
  %142 = vmatpush.msra.mxu0 0.0
  %143 = vmatpush.msra.mxu0 0.0
  %144 = vmatpush.msra.mxu0 %v121
  %145 = vmatpush.msra.mxu0 %v120
  %146 = vmatpush.msra.mxu0 %v119
  %147 = vmatpush.msra.mxu0 %v118
  %148 = vmatmul.f32.gmra.mxu0 %v127
  %v149 = vpop.f32.mrf.mxu0
  %v150 = vadd.f32 %v124, %v149
  %151 = vmatmul.f32.gmra.mxu0 %v130
  %v152 = vpop.f32.mrf.mxu0
  %v153 = vadd.f32 %v124, %v152
  %154 = vdwg.mxu0
  %155 = vst.msk [vmem:[%s5] sm:$0xff] %vm24, %v150
  %156 = vst.msk [vmem:[%s5 + $0x8] sm:$0xff] %vm24, %v153
  // Predicated region
  $region22: #{decoder_forward.22} parent=0 // pred_check
    _
  $region23: #{decoder_forward.22} parent=0 // pred_check_branch
    %158 = sbr.rel (0) target = $region25
  $region24: #{decoder_forward.22} parent=0 // pred_region
    _
  $region25: #{decoder_forward.22} parent=0 // pred_fallthru
    _
  // Predicated region
  $region26: #{decoder_forward.22} parent=0 // pred_check
    _
  $region27: #{decoder_forward.22} parent=0 // pred_check_branch
    %160 = sbr.rel (0) target = $region29
  $region28: #{decoder_forward.22} parent=0 // pred_region
    _
  $region29: #{decoder_forward.22} parent=0 // pred_fallthru
    _

// kernel: decoder_forward.24
$region0: #{decoder_forward.24}
  #allocation0 [shape = 'u32[]', space=smem, size = 0x4, offset = 0x4, fixed_abs, tag = 'smem constant byte address 0x4 - core index']
  #allocation1 [shape = 'u32[72,128]{1,0:T(1,128)}', space=vmem, size = 0x9000, scoped, tag = 'internal scratch']
  %s0 = inlined_call_operand.vmem [shape: f32[2,8,32], index: 0, kind: input, shape index: {}]
  %s1 = inlined_call_operand.vmem [shape: f32[2,8,64], index: 1, kind: input, shape index: {}]
  %s2 = inlined_call_operand.vmem [shape: s32[2,1,8], index: 2, kind: input, shape index: {}]
  %s3 = inlined_call_operand.vmem [shape: f32[2,8,32], index: 3, kind: output, shape index: {}]
  %s4 = sld [smem:[#allocation0]]
  $region45: #{decoder_forward.24} parent=0
    _
  %s6 = ssub.s32 1, %s4
  %s7 = scalar_select 0, %s6, %s4
  loop: start=0, step=1, limit=4
  $region2: #{decoder_forward.24} parent=0 // loop_pre_header
    _
  $region3: #{decoder_forward.24} parent=0 // loop_header
    %s9 = sphi 0, %s13
    %p10 = scmp.ge.s32.totalorder %s9, 4
    %s19 = sphi 0, %s21
    %s22 = sphi 0, %s19
    %s23 = sphi 0, %s22
    %s39 = sphi 0, %s23
    %s45 = sphi 0, %s47
    %s48 = sphi 0, %s45
    %s49 = sphi 0, %s48
    %s65 = sphi 0, %s49
    %s71 = sphi 0, %s73
    %s74 = sphi 0, %s71
    %s75 = sphi 0, %s74
    %s91 = sphi 0, %s75
    %s97 = sphi 0, %s99
    %s100 = sphi 0, %s97
    %s101 = sphi 0, %s100
    %s117 = sphi 0, %s101
  $region4: #{decoder_forward.24} parent=0 // loop_header_branch
    %12 = sbr.rel (%p10) target = $region8
  $region5: #{decoder_forward.24} parent=0 // loop_body
    %s14 = ssub.s32 %s9, 1
    %s15 = ssub.s32 %s9, 2
    %s16 = sadd.s32 %s9, 1
    %s17 = ssub.s32 %s9, %s16
    %p18 = scmp.eq.s32.totalorder %s17, 0
    %s20 = sadd.s32 %s19, 1
    %s21 = scalar_select %p18, %s19, %s20
    %p24 = pneg %p18
    %p25 = scmp.eq.s32.totalorder %s9, 1
    %p26 = por %p24, %p25
    %p27 = scmp.ne.s32.totalorder %s19, %s22
    %p28 = scmp.eq.s32.totalorder %s9, 0
    %p29 = por %p27, %p28
    %p30 = scmp.ne.s32.totalorder %s19, %s22
    %p31 = scmp.eq.s32.totalorder %s14, 1
    %p32 = por %p30, %p31
    %p33 = scmp.ne.s32.totalorder %s22, %s23
    %p34 = scmp.eq.s32.totalorder %s14, 0
    %p35 = por %p33, %p34
    %p36 = scmp.ne.s32.totalorder %s22, %s23
    %p37 = scmp.eq.s32.totalorder %s15, 1
    %p38 = por %p36, %p37
    %p40 = scmp.ne.s32.totalorder %s23, %s39
    %p41 = scmp.eq.s32.totalorder %s15, 0
    %p42 = por %p40, %p41
    %s43 = ssub.s32 %s9, %s16
    %p44 = scmp.eq.s32.totalorder %s43, 0
    %s46 = sadd.s32 %s45, 1
    %s47 = scalar_select %p44, %s45, %s46
    %p50 = pneg %p44
    %p51 = scmp.eq.s32.totalorder %s9, 1
    %p52 = por %p50, %p51
    %p53 = scmp.ne.s32.totalorder %s45, %s48
    %p54 = scmp.eq.s32.totalorder %s9, 0
    %p55 = por %p53, %p54
    %p56 = scmp.ne.s32.totalorder %s45, %s48
    %p57 = scmp.eq.s32.totalorder %s14, 1
    %p58 = por %p56, %p57
    %p59 = scmp.ne.s32.totalorder %s48, %s49
    %p60 = scmp.eq.s32.totalorder %s14, 0
    %p61 = por %p59, %p60
    %p62 = scmp.ne.s32.totalorder %s48, %s49
    %p63 = scmp.eq.s32.totalorder %s15, 1
    %p64 = por %p62, %p63
    %p66 = scmp.ne.s32.totalorder %s49, %s65
    %p67 = scmp.eq.s32.totalorder %s15, 0
    %p68 = por %p66, %p67
    %s69 = ssub.s32 %s9, %s16
    %p70 = scmp.eq.s32.totalorder %s69, 0
    %s72 = sadd.s32 %s71, 1
    %s73 = scalar_select %p70, %s71, %s72
    %p76 = pneg %p70
    %p77 = scmp.eq.s32.totalorder %s9, 1
    %p78 = por %p76, %p77
    %p79 = scmp.ne.s32.totalorder %s71, %s74
    %p80 = scmp.eq.s32.totalorder %s9, 0
    %p81 = por %p79, %p80
    %p82 = scmp.ne.s32.totalorder %s71, %s74
    %p83 = scmp.eq.s32.totalorder %s14, 1
    %p84 = por %p82, %p83
    %p85 = scmp.ne.s32.totalorder %s74, %s75
    %p86 = scmp.eq.s32.totalorder %s14, 0
    %p87 = por %p85, %p86
    %p88 = scmp.ne.s32.totalorder %s74, %s75
    %p89 = scmp.eq.s32.totalorder %s15, 1
    %p90 = por %p88, %p89
    %p92 = scmp.ne.s32.totalorder %s75, %s91
    %p93 = scmp.eq.s32.totalorder %s15, 0
    %p94 = por %p92, %p93
    %s95 = ssub.s32 %s9, %s16
    %p96 = scmp.eq.s32.totalorder %s95, 0
    %s98 = sadd.s32 %s97, 1
    %s99 = scalar_select %p96, %s97, %s98
    %p102 = pneg %p96
    %p103 = scmp.eq.s32.totalorder %s9, 1
    %p104 = por %p102, %p103
    %p105 = scmp.ne.s32.totalorder %s97, %s100
    %p106 = scmp.eq.s32.totalorder %s9, 0
    %p107 = por %p105, %p106
    %p108 = scmp.ne.s32.totalorder %s97, %s100
    %p109 = scmp.eq.s32.totalorder %s14, 1
    %p110 = por %p108, %p109
    %p111 = scmp.ne.s32.totalorder %s100, %s101
    %p112 = scmp.eq.s32.totalorder %s14, 0
    %p113 = por %p111, %p112
    %p114 = scmp.ne.s32.totalorder %s100, %s101
    %p115 = scmp.eq.s32.totalorder %s15, 1
    %p116 = por %p114, %p115
    %p118 = scmp.ne.s32.totalorder %s101, %s117
    %p119 = scmp.eq.s32.totalorder %s15, 0
    %p120 = por %p118, %p119
    %p121 = scmp.le.s32.totalorder 1, %s9
    %p122 = scmp.lt.s32.totalorder %s9, 3
    %p123 = pnand %p121, %p122
    %p124 = pneg %p123
    // Predicated region
    $region9: #{decoder_forward.24} parent=5 // pred_check
      _
    $region10: #{decoder_forward.24} parent=5 // pred_check_branch
      %126 = sbr.rel (%p123) target = $region12
    $region11: #{decoder_forward.24} parent=5 // pred_region
      %s127 = ssub.s32 %s9, 1
    $region12: #{decoder_forward.24} parent=5 // pred_fallthru
      _
    %p128 = scmp.lt.s32.totalorder %s9, 2
    // Predicated region
    $region13: #{decoder_forward.24} parent=5 // pred_check
      %p129 = pneg %p128
    $region14: #{decoder_forward.24} parent=5 // pred_check_branch
      %131 = sbr.rel (%p129) target = $region16
    $region15: #{decoder_forward.24} parent=5 // pred_region
      // Predicated region
      $region17: #{decoder_forward.24} parent=15 // pred_check
        %p132 = pneg %p29
      $region18: #{decoder_forward.24} parent=15 // pred_check_branch
        %134 = sbr.rel (%p132) target = $region20
      $region19: #{decoder_forward.24} parent=15 // pred_region
        %p135 = scmp.lt.s32.totalorder %s9, 1
        %s136 = scalar_select %p135, %s9, 1
        %s137 = smul.addr %s136, 8
        %s138 = scalar_lea.vmem %s0, %s137
      $region20: #{decoder_forward.24} parent=15 // pred_fallthru
        _
      // Predicated region
      $region21: #{decoder_forward.24} parent=15 // pred_check
        %p139 = pneg %p55
      $region22: #{decoder_forward.24} parent=15 // pred_check_branch
        %141 = sbr.rel (%p139) target = $region24
      $region23: #{decoder_forward.24} parent=15 // pred_region
        %p142 = scmp.lt.s32.totalorder %s9, 1
        %s143 = scalar_select %p142, %s9, 1
        %s144 = smul.addr %s143, 8
        %s145 = scalar_lea.vmem %s1, %s144
      $region24: #{decoder_forward.24} parent=15 // pred_fallthru
        _
      // Predicated region
      $region25: #{decoder_forward.24} parent=15 // pred_check
        %p146 = pneg %p81
      $region26: #{decoder_forward.24} parent=15 // pred_check_branch
        %148 = sbr.rel (%p146) target = $region28
      $region27: #{decoder_forward.24} parent=15 // pred_region
        %p149 = scmp.lt.s32.totalorder %s9, 1
        %s150 = scalar_select %p149, %s9, 1
        %s151 = scalar_lea.vmem %s2, %s150
      $region28: #{decoder_forward.24} parent=15 // pred_fallthru
        _
    $region16: #{decoder_forward.24} parent=5 // pred_fallthru
      _
    %p152 = scmp.le.s32.totalorder 1, %s9
    %p153 = scmp.lt.s32.totalorder %s9, 3
    %p154 = pnand %p152, %p153
    %p155 = pneg %p154
    // Predicated region
    $region29: #{decoder_forward.24} parent=5 // pred_check
      _
    $region30: #{decoder_forward.24} parent=5 // pred_check_branch
      %157 = sbr.rel (%p154) target = $region32
    $region31: #{decoder_forward.24} parent=5 // pred_region
      %s158 = ssub.s32 %s9, 1
      %p159 = scmp.lt.s32.totalorder %s14, 1
      %s160 = scalar_select %p159, %s14, 1
      %s161 = smul.addr %s160, 8
      %s162 = scalar_lea.vmem %s0, %s161
      %p163 = pneg %p35
      %p164 = pneg %p32
      %p165 = scmp.lt.s32.totalorder %s14, 1
      %s166 = scalar_select %p165, %s14, 1
      %s167 = smul.addr %s166, 8
      %s168 = scalar_lea.vmem %s1, %s167
      %p169 = pneg %p61
      %p170 = pneg %p58
      %p171 = scmp.lt.s32.totalorder %s14, 1
      %s172 = scalar_select %p171, %s14, 1
      %s173 = scalar_lea.vmem %s2, %s172
      %p174 = pneg %p87
      %p175 = pneg %p84
      %p176 = pneg %p113
      %p177 = pneg %p110
      %p178 = scmp.lt.s32.totalorder %s14, 1
      %s179 = scalar_select %p178, %s14, 1
      %s180 = smul.addr %s179, 8
      %s181 = scalar_lea.vmem %s3, %s180
      %p182 = scmp.lt.s32.totalorder %s14, 1
      %s183 = scalar_select %p182, %s14, 1
      %s184 = smul.addr %s183, 8
      %s185 = scalar_lea.vmem %s0, %s184
      %p186 = scmp.lt.s32.totalorder %s14, 1
      %s187 = scalar_select %p186, %s14, 1
      %s188 = smul.addr %s187, 8
      %s189 = scalar_lea.vmem %s1, %s188
      %p190 = scmp.lt.s32.totalorder %s14, 1
      %s191 = scalar_select %p190, %s14, 1
      %s192 = scalar_lea.vmem %s2, %s191
      %p193 = scmp.lt.s32.totalorder %s14, 1
      %s194 = scalar_select %p193, %s14, 1
      %s195 = smul.addr %s194, 8
      %s196 = scalar_lea.vmem %s3, %s195
      %v197 = vld [vmem:[%s185] sm:$0xff]
      %v198 = vld [vmem:[%s189] sm:$0xff]
      %v199 = vld [vmem:[%s192] sm:$0x1]
      %vm200 = vcmask 64512
      %v202 = vsel %vm200, %v197, 0
      %v205 = vsel %vm200, %v198, 0
      %207 = vmatpush.xpose.msra.mxu0 0.0
      %208 = vmatpush.xpose.msra.mxu0 0.0
      %209 = vmatpush.xpose.msra.mxu0 0.0
      %210 = vmatpush.xpose.msra.mxu0 0.0
      %211 = vmatpush.xpose.msra.mxu0 0.0
      %212 = vmatpush.xpose.msra.mxu0 0.0
      %213 = vmatpush.xpose.msra.mxu0 0.0
      %214 = vmatpush.xpose.msra.mxu0 0.0
      %215 = vmatpush.xpose.msra.mxu0 0.0
      %216 = vmatpush.xpose.msra.mxu0 0.0
      %217 = vmatpush.xpose.msra.mxu0 0.0
      %218 = vmatpush.xpose.msra.mxu0 0.0
      %219 = vmatpush.xpose.msra.mxu0 0.0
      %220 = vmatpush.xpose.msra.mxu0 0.0
      %221 = vmatpush.xpose.msra.mxu0 0.0
      %222 = vmatpush.xpose.msra.mxu0 %v205
      %223 = vmatmul.f32.gmra.mxu0 %v202
      %v224 = vpop.f32.mrf.mxu0
      %v225 = vadd.f32 0.0, %v224
      %226 = vdwg.mxu0
      %v227 = vmul.f32 %v225, 0.35355338
      %vm228 = vcmp.eq.s32.totalorder %v199, 0
      %v229 = vsel %vm228, 1, 0
      %v230 = vperm.slane %v229, 0
      %vm231 = vcmp.eq.s32.totalorder %v230, 1
      %v232 = vsel %vm231, -1e+09, %v227
      %v233 = vsel %vm200, %v232, -inf
      %234 = vmax.xlane.f32.xlu0 %v233
      %v235 = vpop.xlane.xlu0 %234
      %v236 = vsub.f32 %v232, %v235
      %v237 = vmul.f32 %v236, 1.442695
      %v238 = vpow.pop %v237
      %v239 = vsel %vm200, %v238, 0.0
      %240 = vadd.xlane.f32.xlu0 %v239
      %v241 = vpop.xlane.xlu0 %240
      %v242 = vmax.f32 %v241, 1e-30
      %v243 = vrcp.pop %v242
      %v244 = vmul.f32 %v238, %v243
      %245 = vrot.lane.b32.xlu0 %v198, 96
      %v246 = vpop.permute.xlu0 %245
      %v249 = vsel %vm200, %v244, 0
      %251 = vmatpush.msra.mxu0 0.0
      %252 = vmatpush.msra.mxu0 0.0
      %253 = vmatpush.msra.mxu0 0.0
      %254 = vmatpush.msra.mxu0 0.0
      %255 = vmatpush.msra.mxu0 0.0
      %256 = vmatpush.msra.mxu0 0.0
      %257 = vmatpush.msra.mxu0 0.0
      %258 = vmatpush.msra.mxu0 0.0
      %259 = vmatpush.msra.mxu0 0.0
      %260 = vmatpush.msra.mxu0 0.0
      %261 = vmatpush.msra.mxu0 0.0
      %262 = vmatpush.msra.mxu0 0.0
      %263 = vmatpush.msra.mxu0 0.0
      %264 = vmatpush.msra.mxu0 0.0
      %265 = vmatpush.msra.mxu0 0.0
      %266 = vmatpush.msra.mxu0 %v246
      %267 = vmatmul.f32.gmra.mxu0 %v249
      %v268 = vpop.f32.mrf.mxu0
      %v269 = vadd.f32 0.0, %v268
      %270 = vdwg.mxu0
      %271 = vrot.lane.b32.xlu0 %v197, 120
      %v272 = vpop.permute.xlu0 %271
      %273 = vrot.lane.b32.xlu0 %v198, 120
      %v274 = vpop.permute.xlu0 %273
      %v275 = vsel %vm200, %v272, 0
      %v277 = vsel %vm200, %v274, 0
      %279 = vmatpush.xpose.msra.mxu0 0.0
      %280 = vmatpush.xpose.msra.mxu0 0.0
      %281 = vmatpush.xpose.msra.mxu0 0.0
      %282 = vmatpush.xpose.msra.mxu0 0.0
      %283 = vmatpush.xpose.msra.mxu0 0.0
      %284 = vmatpush.xpose.msra.mxu0 0.0
      %285 = vmatpush.xpose.msra.mxu0 0.0
      %286 = vmatpush.xpose.msra.mxu0 0.0
      %287 = vmatpush.xpose.msra.mxu0 0.0
      %288 = vmatpush.xpose.msra.mxu0 0.0
      %289 = vmatpush.xpose.msra.mxu0 0.0
      %290 = vmatpush.xpose.msra.mxu0 0.0
      %291 = vmatpush.xpose.msra.mxu0 0.0
      %292 = vmatpush.xpose.msra.mxu0 0.0
      %293 = vmatpush.xpose.msra.mxu0 0.0
      %294 = vmatpush.xpose.msra.mxu0 %v277
      %295 = vmatmul.f32.gmra.mxu0 %v275
      %v296 = vpop.f32.mrf.mxu0
      %v297 = vadd.f32 0.0, %v296
      %298 = vdwg.mxu0
      %v299 = vmul.f32 %v297, 0.35355338
      %v300 = vsel %vm231, -1e+09, %v299
      %v301 = vsel %vm200, %v300, -inf
      %302 = vmax.xlane.f32.xlu0 %v301
      %v303 = vpop.xlane.xlu0 %302
      %v304 = vsub.f32 %v300, %v303
      %v305 = vmul.f32 %v304, 1.442695
      %v306 = vpow.pop %v305
      %v307 = vsel %vm200, %v306, 0.0
      %308 = vadd.xlane.f32.xlu0 %v307
      %v309 = vpop.xlane.xlu0 %308
      %v310 = vmax.f32 %v309, 1e-30
      %v311 = vrcp.pop %v310
      %v312 = vmul.f32 %v306, %v311
      %313 = vrot.lane.b32.xlu0 %v198, 88
      %v314 = vpop.permute.xlu0 %313
      %v317 = vsel %vm200, %v312, 0
      %319 = vmatpush.msra.mxu0 0.0
      %320 = vmatpush.msra.mxu0 0.0
      %321 = vmatpush.msra.mxu0 0.0
      %322 = vmatpush.msra.mxu0 0.0
      %323 = vmatpush.msra.mxu0 0.0
      %324 = vmatpush.msra.mxu0 0.0
      %325 = vmatpush.msra.mxu0 0.0
      %326 = vmatpush.msra.mxu0 0.0
      %327 = vmatpush.msra.mxu0 0.0
      %328 = vmatpush.msra.mxu0 0.0
      %329 = vmatpush.msra.mxu0 0.0
      %330 = vmatpush.msra.mxu0 0.0
      %331 = vmatpush.msra.mxu0 0.0
      %332 = vmatpush.msra.mxu0 0.0
      %333 = vmatpush.msra.mxu0 0.0
      %334 = vmatpush.msra.mxu0 %v314
      %335 = vmatmul.f32.gmra.mxu0 %v317
      %v336 = vpop.f32.mrf.mxu0
      %v337 = vadd.f32 0.0, %v336
      %338 = vdwg.mxu0
      %339 = vrot.lane.b32.xlu0 %v197, 112
      %v340 = vpop.permute.xlu0 %339
      %341 = vrot.lane.b32.xlu0 %v198, 112
      %v342 = vpop.permute.xlu0 %341
      %v343 = vsel %vm200, %v340, 0
      %v345 = vsel %vm200, %v342, 0
      %347 = vmatpush.xpose.msra.mxu0 0.0
      %348 = vmatpush.xpose.msra.mxu0 0.0
      %349 = vmatpush.xpose.msra.mxu0 0.0
      %350 = vmatpush.xpose.msra.mxu0 0.0
      %351 = vmatpush.xpose.msra.mxu0 0.0
      %352 = vmatpush.xpose.msra.mxu0 0.0
      %353 = vmatpush.xpose.msra.mxu0 0.0
      %354 = vmatpush.xpose.msra.mxu0 0.0
      %355 = vmatpush.xpose.msra.mxu0 0.0
      %356 = vmatpush.xpose.msra.mxu0 0.0
      %357 = vmatpush.xpose.msra.mxu0 0.0
      %358 = vmatpush.xpose.msra.mxu0 0.0
      %359 = vmatpush.xpose.msra.mxu0 0.0
      %360 = vmatpush.xpose.msra.mxu0 0.0
      %361 = vmatpush.xpose.msra.mxu0 0.0
      %362 = vmatpush.xpose.msra.mxu0 %v345
      %363 = vmatmul.f32.gmra.mxu0 %v343
      %v364 = vpop.f32.mrf.mxu0
      %v365 = vadd.f32 0.0, %v364
      %366 = vdwg.mxu0
      %v367 = vmul.f32 %v365, 0.35355338
      %v368 = vsel %vm231, -1e+09, %v367
      %v369 = vsel %vm200, %v368, -inf
      %370 = vmax.xlane.f32.xlu0 %v369
      %v371 = vpop.xlane.xlu0 %370
      %v372 = vsub.f32 %v368, %v371
      %v373 = vmul.f32 %v372, 1.442695
      %v374 = vpow.pop %v373
      %v375 = vsel %vm200, %v374, 0.0
      %376 = vadd.xlane.f32.xlu0 %v375
      %v377 = vpop.xlane.xlu0 %376
      %v378 = vmax.f32 %v377, 1e-30
      %v379 = vrcp.pop %v378
      %v380 = vmul.f32 %v374, %v379
      %381 = vrot.lane.b32.xlu0 %v198, 80
      %v382 = vpop.permute.xlu0 %381
      %v385 = vsel %vm200, %v380, 0
      %387 = vmatpush.msra.mxu0 0.0
      %388 = vmatpush.msra.mxu0 0.0
      %389 = vmatpush.msra.mxu0 0.0
      %390 = vmatpush.msra.mxu0 0.0
      %391 = vmatpush.msra.mxu0 0.0
      %392 = vmatpush.msra.mxu0 0.0
      %393 = vmatpush.msra.mxu0 0.0
      %394 = vmatpush.msra.mxu0 0.0
      %395 = vmatpush.msra.mxu0 0.0
      %396 = vmatpush.msra.mxu0 0.0
      %397 = vmatpush.msra.mxu0 0.0
      %398 = vmatpush.msra.mxu0 0.0
      %399 = vmatpush.msra.mxu0 0.0
      %400 = vmatpush.msra.mxu0 0.0
      %401 = vmatpush.msra.mxu0 0.0
      %402 = vmatpush.msra.mxu0 %v382
      %403 = vmatmul.f32.gmra.mxu0 %v385
      %v404 = vpop.f32.mrf.mxu0
      %v405 = vadd.f32 0.0, %v404
      %406 = vdwg.mxu0
      %407 = vrot.lane.b32.xlu0 %v197, 104
      %v408 = vpop.permute.xlu0 %407
      %409 = vrot.lane.b32.xlu0 %v198, 104
      %v410 = vpop.permute.xlu0 %409
      %v411 = vsel %vm200, %v408, 0
      %v413 = vsel %vm200, %v410, 0
      %415 = vmatpush.xpose.msra.mxu0 0.0
      %416 = vmatpush.xpose.msra.mxu0 0.0
      %417 = vmatpush.xpose.msra.mxu0 0.0
      %418 = vmatpush.xpose.msra.mxu0 0.0
      %419 = vmatpush.xpose.msra.mxu0 0.0
      %420 = vmatpush.xpose.msra.mxu0 0.0
      %421 = vmatpush.xpose.msra.mxu0 0.0
      %422 = vmatpush.xpose.msra.mxu0 0.0
      %423 = vmatpush.xpose.msra.mxu0 0.0
      %424 = vmatpush.xpose.msra.mxu0 0.0
      %425 = vmatpush.xpose.msra.mxu0 0.0
      %426 = vmatpush.xpose.msra.mxu0 0.0
      %427 = vmatpush.xpose.msra.mxu0 0.0
      %428 = vmatpush.xpose.msra.mxu0 0.0
      %429 = vmatpush.xpose.msra.mxu0 0.0
      %430 = vmatpush.xpose.msra.mxu0 %v413
      %431 = vmatmul.f32.gmra.mxu0 %v411
      %v432 = vpop.f32.mrf.mxu0
      %v433 = vadd.f32 0.0, %v432
      %434 = vdwg.mxu0
      %v435 = vmul.f32 %v433, 0.35355338
      %v436 = vsel %vm231, -1e+09, %v435
      %v437 = vsel %vm200, %v436, -inf
      %438 = vmax.xlane.f32.xlu0 %v437
      %v439 = vpop.xlane.xlu0 %438
      %v440 = vsub.f32 %v436, %v439
      %v441 = vmul.f32 %v440, 1.442695
      %v442 = vpow.pop %v441
      %v443 = vsel %vm200, %v442, 0.0
      %444 = vadd.xlane.f32.xlu0 %v443
      %v445 = vpop.xlane.xlu0 %444
      %v446 = vmax.f32 %v445, 1e-30
      %v447 = vrcp.pop %v446
      %v448 = vmul.f32 %v442, %v447
      %449 = vrot.lane.b32.xlu0 %v198, 72
      %v450 = vpop.permute.xlu0 %449
      %v453 = vsel %vm200, %v448, 0
      %455 = vmatpush.msra.mxu0 0.0
      %456 = vmatpush.msra.mxu0 0.0
      %457 = vmatpush.msra.mxu0 0.0
      %458 = vmatpush.msra.mxu0 0.0
      %459 = vmatpush.msra.mxu0 0.0
      %460 = vmatpush.msra.mxu0 0.0
      %461 = vmatpush.msra.mxu0 0.0
      %462 = vmatpush.msra.mxu0 0.0
      %463 = vmatpush.msra.mxu0 0.0
      %464 = vmatpush.msra.mxu0 0.0
      %465 = vmatpush.msra.mxu0 0.0
      %466 = vmatpush.msra.mxu0 0.0
      %467 = vmatpush.msra.mxu0 0.0
      %468 = vmatpush.msra.mxu0 0.0
      %469 = vmatpush.msra.mxu0 0.0
      %470 = vmatpush.msra.mxu0 %v450
      %471 = vmatmul.f32.gmra.mxu0 %v453
      %v472 = vpop.f32.mrf.mxu0
      %v473 = vadd.f32 0.0, %v472
      %474 = vdwg.mxu0
      %476 = vrot.lane.b32.xlu0 %v337, 8
      %v477 = vpop.permute.xlu0 %476
      %480 = vrot.lane.b32.xlu0 %v405, 16
      %v481 = vpop.permute.xlu0 %480
      %484 = vrot.lane.b32.xlu0 %v473, 24
      %v485 = vpop.permute.xlu0 %484
      %v487 = vsel %vm200, %v269, %v477
      %vm488 = vcmask 130048
      %v489 = vsel %vm488, %v487, %v481
      %vm490 = vcmask 195584
      %v491 = vsel %vm490, %v489, %v485
      %vm492 = vcmask 261120
      %493 = vst.msk [vmem:[%s196] sm:$0xff] %vm492, %v491
      %p494 = scmp.lt.s32.totalorder %s14, 1
      %s495 = scalar_select %p494, %s14, 1
      %s496 = smul.addr %s495, 8
      %s497 = scalar_lea.vmem %s3, %s496
      // Predicated region
      $region33: #{decoder_forward.24} parent=31 // pred_check
        %p498 = pneg %p110
      $region34: #{decoder_forward.24} parent=31 // pred_check_branch
        %500 = sbr.rel (%p498) target = $region36
      $region35: #{decoder_forward.24} parent=31 // pred_region
        _
      $region36: #{decoder_forward.24} parent=31 // pred_fallthru
        _
    $region32: #{decoder_forward.24} parent=5 // pred_fallthru
      _
    %p501 = scmp.le.s32.totalorder 2, %s9
    // Predicated region
    $region37: #{decoder_forward.24} parent=5 // pred_check
      %p502 = pneg %p501
    $region38: #{decoder_forward.24} parent=5 // pred_check_branch
      %504 = sbr.rel (%p502) target = $region40
    $region39: #{decoder_forward.24} parent=5 // pred_region
      %s505 = ssub.s32 %s9, 2
      // Predicated region
      $region41: #{decoder_forward.24} parent=39 // pred_check
        %p506 = pneg %p116
      $region42: #{decoder_forward.24} parent=39 // pred_check_branch
        %508 = sbr.rel (%p506) target = $region44
      $region43: #{decoder_forward.24} parent=39 // pred_region
        %p509 = scmp.lt.s32.totalorder %s15, 1
        %s510 = scalar_select %p509, %s15, 1
        %s511 = smul.addr %s510, 8
        %s512 = scalar_lea.vmem %s3, %s511
      $region44: #{decoder_forward.24} parent=39 // pred_fallthru
        _
    $region40: #{decoder_forward.24} parent=5 // pred_fallthru
      _
  $region6: #{decoder_forward.24} parent=0 // loop_footer
    %s13 = sadd.s32 1, %s9
  $region7: #{decoder_forward.24} parent=0 // loop_footer_branch
    %8 = sbr.rel target = $region3
  $region8: #{decoder_forward.24} parent=0 // loop_exit
    _

// kernel: decoder_forward.27
$region0: #{decoder_forward.27}
  #allocation0 [shape = 'u32[]', space=smem, size = 0x4, offset = 0x4, fixed_abs, tag = 'smem constant byte address 0x4 - core index']
  #allocation1 [shape = 'u32[72,128]{1,0:T(1,128)}', space=vmem, size = 0x9000, scoped, tag = 'internal scratch']
  %s0 = inlined_call_operand.vmem [shape: f32[16,32], index: 0, kind: input, shape index: {}]
  %s1 = inlined_call_operand.hbm [shape: f32[1,32], index: 1, kind: input, shape index: {}]
  %s2 = inlined_call_operand.hbm [shape: f32[1,32], index: 2, kind: input, shape index: {}]
  %s3 = inlined_call_operand.vmem [shape: f32[32,96], index: 3, kind: input, shape index: {}]
  %s4 = inlined_call_operand.hbm [shape: f32[1,96], index: 4, kind: input, shape index: {}]
  %s5 = inlined_call_operand.vmem [shape: f32[16,96], index: 5, kind: output, shape index: {}]
  %s6 = sld [smem:[#allocation0]]
  $region42: #{decoder_forward.27} parent=0
    _
  %s8 = ssub.s32 1, %s6
  %s9 = scalar_select 0, %s8, %s6
  $region1: #{decoder_forward.27} parent=0
    #allocation2 [shape = 'u8[512]{0}', space=vmem, size = 0x400, scoped, tag = 'input window, operand 1, single buffered']
    #allocation3 [shape = 's32[1]{0}', space=sflag, size = 0x4, scoped, tag = 'scoped memory for decoder_forward.27']
    #allocation4 [shape = 'u8[512]{0}', space=vmem, size = 0x400, scoped, tag = 'input window, operand 2, single buffered']
    #allocation5 [shape = 's32[1]{0}', space=sflag, size = 0x4, scoped, tag = 'scoped memory for decoder_forward.27']
    #allocation6 [shape = 'u8[512]{0}', space=vmem, size = 0x400, scoped, tag = 'input window, operand 4, single buffered']
    %10 = vsyncpa [#allocation3], 0
    %11 = vsyncpa [#allocation5], 0
    // Predicated region
    $region2: #{decoder_forward.27} parent=1 // pred_check
      _
    $region3: #{decoder_forward.27} parent=1 // pred_check_branch
      %13 = sbr.rel (0) target = $region5
    $region4: #{decoder_forward.27} parent=1 // pred_region
      _
    $region5: #{decoder_forward.27} parent=1 // pred_fallthru
      _
    // Predicated region
    $region6: #{decoder_forward.27} parent=1 // pred_check
      _
    $region7: #{decoder_forward.27} parent=1 // pred_check_branch
      %15 = sbr.rel (0) target = $region9
    $region8: #{decoder_forward.27} parent=1 // pred_region
      %17 = vsyncadd [#allocation3], 0
      %s19 = sshll.u32 %s1, 4
      %s20 = int_to_ptr.hbm [resolvable:$true] %s19
      %s21 = sshll.u32 [#allocation2], 4
      %s22 = int_to_ptr.vmem [resolvable:$true] %s21
      %24 = dma.hbm_to_vmem [thread:$0]  %s20, 16, %s22, [#allocation3]
    $region9: #{decoder_forward.27} parent=1 // pred_fallthru
      _
    // Predicated region
    $region10: #{decoder_forward.27} parent=1 // pred_check
      _
    $region11: #{decoder_forward.27} parent=1 // pred_check_branch
      %26 = sbr.rel (0) target = $region13
    $region12: #{decoder_forward.27} parent=1 // pred_region
      %28 = vsyncadd [#allocation5], 0
      %s30 = sshll.u32 %s2, 4
      %s31 = int_to_ptr.hbm [resolvable:$true] %s30
      %s32 = sshll.u32 [#allocation4], 4
      %s33 = int_to_ptr.vmem [resolvable:$true] %s32
      %35 = dma.hbm_to_vmem [thread:$0]  %s31, 16, %s33, [#allocation5]
    $region13: #{decoder_forward.27} parent=1 // pred_fallthru
      _
    // Predicated region
    $region14: #{decoder_forward.27} parent=1 // pred_check
      _
    $region15: #{decoder_forward.27} parent=1 // pred_check_branch
      %37 = sbr.rel (0) target = $region17
    $region16: #{decoder_forward.27} parent=1 // pred_region
      _
    $region17: #{decoder_forward.27} parent=1 // pred_fallthru
      _
    // Predicated region
    $region18: #{decoder_forward.27} parent=1 // pred_check
      _
    $region19: #{decoder_forward.27} parent=1 // pred_check_branch
      %39 = sbr.rel (0) target = $region21
    $region20: #{decoder_forward.27} parent=1 // pred_region
      %41 = vsyncadd [#allocation5], 0
      %s43 = sshll.u32 %s4, 4
      %s44 = int_to_ptr.hbm [resolvable:$true] %s43
      %s45 = sshll.u32 [#allocation6], 4
      %s46 = int_to_ptr.vmem [resolvable:$true] %s45
      %48 = dma.hbm_to_vmem [thread:$0]  %s44, 16, %s46, [#allocation5]
    $region21: #{decoder_forward.27} parent=1 // pred_fallthru
      _
    // Predicated region
    $region22: #{decoder_forward.27} parent=1 // pred_check
      _
    $region23: #{decoder_forward.27} parent=1 // pred_check_branch
      %50 = sbr.rel (0) target = $region25
    $region24: #{decoder_forward.27} parent=1 // pred_region
      %52 = dma.done [#allocation3], 16
    $region25: #{decoder_forward.27} parent=1 // pred_fallthru
      _
    // Predicated region
    $region26: #{decoder_forward.27} parent=1 // pred_check
      _
    $region27: #{decoder_forward.27} parent=1 // pred_check_branch
      %54 = sbr.rel (0) target = $region29
    $region28: #{decoder_forward.27} parent=1 // pred_region
      %56 = dma.done [#allocation5], 16
    $region29: #{decoder_forward.27} parent=1 // pred_fallthru
      _
    // Predicated region
    $region30: #{decoder_forward.27} parent=1 // pred_check
      _
    $region31: #{decoder_forward.27} parent=1 // pred_check_branch
      %58 = sbr.rel (0) target = $region33
    $region32: #{decoder_forward.27} parent=1 // pred_region
      %60 = dma.done [#allocation5], 16
    $region33: #{decoder_forward.27} parent=1 // pred_fallthru
      _
    %v61 = vld [vmem:[%s0] sm:$0xff]
    %v62 = vld [vmem:[%s0 + $0x8] sm:$0xff]
    %v63 = vld [vmem:[#allocation2] sm:$0x1]
    %v64 = vld [vmem:[#allocation4] sm:$0x1]
    %vm65 = vcmask 261120
    %v66 = vsel %vm65, %v61, 0.0
    %67 = vadd.xlane.f32.xlu0 %v66
    %v68 = vpop.xlane.xlu0 %67
    %v69 = vsel %vm65, %v62, 0.0
    %70 = vadd.xlane.f32.xlu0 %v69
    %v71 = vpop.xlane.xlu0 %70
    %v72 = vrcp.pop 32.0
    %v73 = vmul.f32 32.0, %v72
    %v74 = vsub.f32 1.0, %v73
    %v75 = vmul.f32 %v72, %v74
    %v76 = vadd.f32 %v72, %v75
    %vm77 = vweird.f32 %v72
    %v78 = vsel %vm77, %v72, %v76
    %v79 = vmul.f32 %v68, %v78
    %v80 = vmul.f32 %v71, %v78
    %v81 = vsub.f32 %v61, %v79
    %v82 = vsub.f32 %v62, %v80
    %v83 = vmul.f32 %v81, %v81
    %v84 = vmul.f32 %v82, %v82
    %v85 = vsel %vm65, %v83, 0.0
    %86 = vadd.xlane.f32.xlu0 %v85
    %v87 = vpop.xlane.xlu0 %86
    %v88 = vsel %vm65, %v84, 0.0
    %89 = vadd.xlane.f32.xlu0 %v88
    %v90 = vpop.xlane.xlu0 %89
    %v91 = vmul.f32 %v87, 0.032258064
    %v92 = vmul.f32 %v90, 0.032258064
    %v93 = vrsqrt.pop %v91
    %v94 = vmul.f32 %v93, %v91
    %v95 = vmul.f32 %v94, %v93
    %v96 = vmul.f32 0.5, %v95
    %v97 = vsub.f32 1.5, %v96
    %v98 = vmul.f32 %v93, %v97
    %v99 = vmul.f32 %v91, %v98
    %vm100 = vcmp.eq.f32.partialorder %v91, inf
    %v101 = vsel %vm100, %v91, %v99
    %vm102 = vcmp.eq.f32.partialorder %v91, 0.0
    %v103 = vand.u32 %v91, 2147483648
    %v104 = vsel %vm102, %v103, %v101
    %v105 = vrsqrt.pop %v92
    %v106 = vmul.f32 %v105, %v92
    %v107 = vmul.f32 %v106, %v105
    %v108 = vmul.f32 0.5, %v107
    %v109 = vsub.f32 1.5, %v108
    %v110 = vmul.f32 %v105, %v109
    %v111 = vmul.f32 %v92, %v110
    %vm112 = vcmp.eq.f32.partialorder %v92, inf
    %v113 = vsel %vm112, %v92, %v111
    %vm114 = vcmp.eq.f32.partialorder %v92, 0.0
    %v115 = vand.u32 %v92, 2147483648
    %v116 = vsel %vm114, %v115, %v113
    %v118 = vperm.slane %v63, 0
    %v120 = vmul.f32 %v118, %v81
    %v121 = vmul.f32 %v118, %v82
    %v122 = vadd.f32 %v104, 1e-06
    %v123 = vadd.f32 %v116, 1e-06
    %v124 = vrcp.pop %v122
    %v125 = vmul.f32 %v122, %v124
    %v126 = vsub.f32 1.0, %v125
    %v127 = vmul.f32 %v124, %v126
    %v128 = vadd.f32 %v124, %v127
    %vm129 = vweird.f32 %v122
    %vm130 = vweird.f32 %v124
    %vm131 = vmor %vm129, %vm130
    %v132 = vsel %vm131, %v124, %v128
    %v133 = vand.u32 2147483647, %v122
    %vm134 = vcmp.eq.f32.partialorder %v133, 8.507059e+37
    %v135 = vand.u32 %v122, 2147483648
    %v136 = vor.u32 1.1754944e-38, %v135
    %v137 = vsel %vm134, %v136, %v132
    %v138 = vmul.f32 %v120, %v137
    %v139 = vrcp.pop %v123
    %v140 = vmul.f32 %v123, %v139
    %v141 = vsub.f32 1.0, %v140
    %v142 = vmul.f32 %v139, %v141
    %v143 = vadd.f32 %v139, %v142
    %vm144 = vweird.f32 %v123
    %vm145 = vweird.f32 %v139
    %vm146 = vmor %vm144, %vm145
    %v147 = vsel %vm146, %v139, %v143
    %v148 = vand.u32 2147483647, %v123
    %vm149 = vcmp.eq.f32.partialorder %v148, 8.507059e+37
    %v150 = vand.u32 %v123, 2147483648
    %v151 = vor.u32 1.1754944e-38, %v150
    %v152 = vsel %vm149, %v151, %v147
    %v153 = vmul.f32 %v121, %v152
    %v155 = vperm.slane %v64, 0
    %v157 = vadd.f32 %v138, %v155
    %v158 = vadd.f32 %v153, %v155
    %v159 = vld [vmem:[%s3] sm:$0xff]
    %v160 = vld [vmem:[%s3 + $0x8] sm:$0xff]
    %v161 = vld [vmem:[%s3 + $0x10] sm:$0xff]
    %v162 = vld [vmem:[%s3 + $0x18] sm:$0xff]
    %v163 = vld [vmem:[#allocation6] sm:$0x1]
    %v165 = vperm.slane %v163, 0
    %v168 = vsel %vm65, %v157, 0
    %v171 = vsel %vm65, %v158, 0
    %173 = vmatpush.msra.mxu0 0.0
    %174 = vmatpush.msra.mxu0 0.0
    %175 = vmatpush.msra.mxu0 0.0
    %176 = vmatpush.msra.mxu0 0.0
    %177 = vmatpush.msra.mxu0 0.0
    %178 = vmatpush.msra.mxu0 0.0
    %179 = vmatpush.msra.mxu0 0.0
    %180 = vmatpush.msra.mxu0 0.0
    %181 = vmatpush.msra.mxu0 0.0
    %182 = vmatpush.msra.mxu0 0.0
    %183 = vmatpush.msra.mxu0 0.0
    %184 = vmatpush.msra.mxu0 0.0
    %185 = vmatpush.msra.mxu0 %v162
    %186 = vmatpush.msra.mxu0 %v161
    %187 = vmatpush.msra.mxu0 %v160
    %188 = vmatpush.msra.mxu0 %v159
    %189 = vmatmul.f32.gmra.mxu0 %v168
    %v190 = vpop.f32.mrf.mxu0
    %v191 = vadd.f32 %v165, %v190
    %192 = vmatmul.f32.gmra.mxu0 %v171
    %v193 = vpop.f32.mrf.mxu0
    %v194 = vadd.f32 %v165, %v193
    %195 = vdwg.mxu0
    %vm196 = vcmask 785408
    %197 = vst.msk [vmem:[%s5] sm:$0xff] %vm196, %v191
    %198 = vst.msk [vmem:[%s5 + $0x8] sm:$0xff] %vm196, %v194
    // Predicated region
    $region34: #{decoder_forward.27} parent=1 // pred_check
      _
    $region35: #{decoder_forward.27} parent=1 // pred_check_branch
      %200 = sbr.rel (0) target = $region37
    $region36: #{decoder_forward.27} parent=1 // pred_region
      _
    $region37: #{decoder_forward.27} parent=1 // pred_fallthru
      _
    // Predicated region
    $region38: #{decoder_forward.27} parent=1 // pred_check
      _
    $region39: #{decoder_forward.27} parent=1 // pred_check_branch
      %202 = sbr.rel (0) target = $region41
    $region40: #{decoder_forward.27} parent=1 // pred_region
      _
    $region41: #{decoder_forward.27} parent=1 // pred_fallthru
      _
    %203 = vsyncpa [#allocation3], 1
    %204 = vsyncpa [#allocation5], 1

// kernel: decoder_forward.35
$region0: #{decoder_forward.35}
  #allocation0 [shape = 'u32[]', space=smem, size = 0x4, offset = 0x4, fixed_abs, tag = 'smem constant byte address 0x4 - core index']
  #allocation1 [shape = 'u32[72,128]{1,0:T(1,128)}', space=vmem, size = 0x9000, scoped, tag = 'internal scratch']
  %s0 = inlined_call_operand.vmem [shape: f32[16,32], index: 0, kind: input, shape index: {}]
  %s1 = inlined_call_operand.vmem [shape: f32[1,32], index: 1, kind: input, shape index: {}]
  %s2 = inlined_call_operand.vmem [shape: f32[1,32], index: 2, kind: input, shape index: {}]
  %s3 = inlined_call_operand.hbm [shape: f32[16,32], index: 3, kind: output, shape index: {}]
  %s4 = sld [smem:[#allocation0]]
  $region22: #{decoder_forward.35} parent=0
    _
  %s6 = ssub.s32 1, %s4
  %s7 = scalar_select 0, %s6, %s4
  $region1: #{decoder_forward.35} parent=0
    #allocation2 [shape = 'u8[8192]{0}', space=vmem, size = 0x2000, scoped, tag = 'output window, operand 0, single buffered']
    #allocation3 [shape = 's32[1]{0}', space=sflag, size = 0x4, scoped, tag = 'scoped memory for decoder_forward.35']
    %8 = vsyncpa [#allocation3], 0
    // Predicated region
    $region2: #{decoder_forward.35} parent=1 // pred_check
      _
    $region3: #{decoder_forward.35} parent=1 // pred_check_branch
      %10 = sbr.rel (0) target = $region5
    $region4: #{decoder_forward.35} parent=1 // pred_region
      _
    $region5: #{decoder_forward.35} parent=1 // pred_fallthru
      _
    // Predicated region
    $region6: #{decoder_forward.35} parent=1 // pred_check
      _
    $region7: #{decoder_forward.35} parent=1 // pred_check_branch
      %12 = sbr.rel (0) target = $region9
    $region8: #{decoder_forward.35} parent=1 // pred_region
      _
    $region9: #{decoder_forward.35} parent=1 // pred_fallthru
      _
    // Predicated region
    $region10: #{decoder_forward.35} parent=1 // pred_check
      _
    $region11: #{decoder_forward.35} parent=1 // pred_check_branch
      %14 = sbr.rel (0) target = $region13
    $region12: #{decoder_forward.35} parent=1 // pred_region
      _
    $region13: #{decoder_forward.35} parent=1 // pred_fallthru
      _
    %v15 = vld [vmem:[%s0] sm:$0xff]
    %v16 = vld [vmem:[%s0 + $0x8] sm:$0xff]
    %v17 = vld [vmem:[%s1] sm:$0x1]
    %v18 = vld [vmem:[%s2] sm:$0x1]
    %vm19 = vcmask 261120
    %v20 = vsel %vm19, %v15, 0.0
    %21 = vadd.xlane.f32.xlu0 %v20
    %v22 = vpop.xlane.xlu0 %21
    %v23 = vsel %vm19, %v16, 0.0
    %24 = vadd.xlane.f32.xlu0 %v23
    %v25 = vpop.xlane.xlu0 %24
    %v26 = vrcp.pop 32.0
    %v27 = vmul.f32 32.0, %v26
    %v28 = vsub.f32 1.0, %v27
    %v29 = vmul.f32 %v26, %v28
    %v30 = vadd.f32 %v26, %v29
    %vm31 = vweird.f32 %v26
    %v32 = vsel %vm31, %v26, %v30
    %v33 = vmul.f32 %v22, %v32
    %v34 = vmul.f32 %v25, %v32
    %v35 = vsub.f32 %v15, %v33
    %v36 = vsub.f32 %v16, %v34
    %v37 = vmul.f32 %v35, %v35
    %v38 = vmul.f32 %v36, %v36
    %v39 = vsel %vm19, %v37, 0.0
    %40 = vadd.xlane.f32.xlu0 %v39
    %v41 = vpop.xlane.xlu0 %40
    %v42 = vsel %vm19, %v38, 0.0
    %43 = vadd.xlane.f32.xlu0 %v42
    %v44 = vpop.xlane.xlu0 %43
    %v45 = vmul.f32 %v41, 0.032258064
    %v46 = vmul.f32 %v44, 0.032258064
    %v47 = vrsqrt.pop %v45
    %v48 = vmul.f32 %v47, %v45
    %v49 = vmul.f32 %v48, %v47
    %v50 = vmul.f32 0.5, %v49
    %v51 = vsub.f32 1.5, %v50
    %v52 = vmul.f32 %v47, %v51
    %v53 = vmul.f32 %v45, %v52
    %vm54 = vcmp.eq.f32.partialorder %v45, inf
    %v55 = vsel %vm54, %v45, %v53
    %vm56 = vcmp.eq.f32.partialorder %v45, 0.0
    %v57 = vand.u32 %v45, 2147483648
    %v58 = vsel %vm56, %v57, %v55
    %v59 = vrsqrt.pop %v46
    %v60 = vmul.f32 %v59, %v46
    %v61 = vmul.f32 %v60, %v59
    %v62 = vmul.f32 0.5, %v61
    %v63 = vsub.f32 1.5, %v62
    %v64 = vmul.f32 %v59, %v63
    %v65 = vmul.f32 %v46, %v64
    %vm66 = vcmp.eq.f32.partialorder %v46, inf
    %v67 = vsel %vm66, %v46, %v65
    %vm68 = vcmp.eq.f32.partialorder %v46, 0.0
    %v69 = vand.u32 %v46, 2147483648
    %v70 = vsel %vm68, %v69, %v67
    %v72 = vperm.slane %v17, 0
    %v74 = vmul.f32 %v72, %v35
    %v75 = vmul.f32 %v72, %v36
    %v76 = vadd.f32 %v58, 1e-06
    %v77 = vadd.f32 %v70, 1e-06
    %v78 = vrcp.pop %v76
    %v79 = vmul.f32 %v76, %v78
    %v80 = vsub.f32 1.0, %v79
    %v81 = vmul.f32 %v78, %v80
    %v82 = vadd.f32 %v78, %v81
    %vm83 = vweird.f32 %v76
    %vm84 = vweird.f32 %v78
    %vm85 = vmor %vm83, %vm84
    %v86 = vsel %vm85, %v78, %v82
    %v87 = vand.u32 2147483647, %v76
    %vm88 = vcmp.eq.f32.partialorder %v87, 8.507059e+37
    %v89 = vand.u32 %v76, 2147483648
    %v90 = vor.u32 1.1754944e-38, %v89
    %v91 = vsel %vm88, %v90, %v86
    %v92 = vmul.f32 %v74, %v91
    %v93 = vrcp.pop %v77
    %v94 = vmul.f32 %v77, %v93
    %v95 = vsub.f32 1.0, %v94
    %v96 = vmul.f32 %v93, %v95
    %v97 = vadd.f32 %v93, %v96
    %vm98 = vweird.f32 %v77
    %vm99 = vweird.f32 %v93
    %vm100 = vmor %vm98, %vm99
    %v101 = vsel %vm100, %v93, %v97
    %v102 = vand.u32 2147483647, %v77
    %vm103 = vcmp.eq.f32.partialorder %v102, 8.507059e+37
    %v104 = vand.u32 %v77, 2147483648
    %v105 = vor.u32 1.1754944e-38, %v104
    %v106 = vsel %vm103, %v105, %v101
    %v107 = vmul.f32 %v75, %v106
    %v109 = vperm.slane %v18, 0
    %v111 = vadd.f32 %v92, %v109
    %v112 = vadd.f32 %v107, %v109
    %113 = vst.msk [vmem:[#allocation2] sm:$0xff] %vm19, %v111
    %114 = vst.msk [vmem:[#allocation2 + $0x8] sm:$0xff] %vm19, %v112
    // Predicated region
    $region14: #{decoder_forward.35} parent=1 // pred_check
      _
    $region15: #{decoder_forward.35} parent=1 // pred_check_branch
      %116 = sbr.rel (0) target = $region17
    $region16: #{decoder_forward.35} parent=1 // pred_region
      %118 = vsyncadd [#allocation3], 0
      %s119 = sshll.u32 [#allocation2], 4
      %s120 = int_to_ptr.vmem [resolvable:$true] %s119
      %s121 = sshll.u32 %s3, 4
      %s122 = int_to_ptr.hbm [resolvable:$true] %s121
      %127 = dma.vmem_to_hbm [thread:$0]  %s120, 256, %s122, [#allocation3], 128, 128, 8
    $region17: #{decoder_forward.35} parent=1 // pred_fallthru
      _
    // Predicated region
    $region18: #{decoder_forward.35} parent=1 // pred_check
      _
    $region19: #{decoder_forward.35} parent=1 // pred_check_branch
      %129 = sbr.rel (0) target = $region21
    $region20: #{decoder_forward.35} parent=1 // pred_region
      %131 = dma.done [#allocation3], 256
    $region21: #{decoder_forward.35} parent=1 // pred_fallthru
      _
    %132 = vsyncpa [#allocation3], 1

// kernel: decoder_forward.26
$region0: #{decoder_forward.26}
  #allocation0 [shape = 'u32[]', space=smem, size = 0x4, offset = 0x4, fixed_abs, tag = 'smem constant byte address 0x4 - core index']
  #allocation1 [shape = 'u32[72,128]{1,0:T(1,128)}', space=vmem, size = 0x9000, scoped, tag = 'internal scratch']
  %s0 = inlined_call_operand.vmem [shape: f32[16,32], index: 0, kind: input, shape index: {}]
  %s1 = inlined_call_operand.vmem [shape: f32[1,32], index: 1, kind: input, shape index: {}]
  %s2 = inlined_call_operand.vmem [shape: f32[1,32], index: 2, kind: input, shape index: {}]
  %s3 = inlined_call_operand.vmem [shape: f32[32,64], index: 3, kind: input, shape index: {}]
  %s4 = inlined_call_operand.vmem [shape: f32[1,64], index: 4, kind: input, shape index: {}]
  %s5 = inlined_call_operand.vmem [shape: f32[64,32], index: 5, kind: input, shape index: {}]
  %s6 = inlined_call_operand.vmem [shape: f32[1,32], index: 6, kind: input, shape index: {}]
  %s7 = inlined_call_operand.vmem [shape: f32[16,32], index: 7, kind: output, shape index: {}]
  %s8 = sld [smem:[#allocation0]]
  $region38: #{decoder_forward.26} parent=0
    _
  %s10 = ssub.s32 1, %s8
  %s11 = scalar_select 0, %s10, %s8
  // Predicated region
  $region2: #{decoder_forward.26} parent=0 // pred_check
    _
  $region3: #{decoder_forward.26} parent=0 // pred_check_branch
    %13 = sbr.rel (0) target = $region5
  $region4: #{decoder_forward.26} parent=0 // pred_region
    _
  $region5: #{decoder_forward.26} parent=0 // pred_fallthru
    _
  // Predicated region
  $region6: #{decoder_forward.26} parent=0 // pred_check
    _
  $region7: #{decoder_forward.26} parent=0 // pred_check_branch
    %15 = sbr.rel (0) target = $region9
  $region8: #{decoder_forward.26} parent=0 // pred_region
    _
  $region9: #{decoder_forward.26} parent=0 // pred_fallthru
    _
  // Predicated region
  $region10: #{decoder_forward.26} parent=0 // pred_check
    _
  $region11: #{decoder_forward.26} parent=0 // pred_check_branch
    %17 = sbr.rel (0) target = $region13
  $region12: #{decoder_forward.26} parent=0 // pred_region
    _
  $region13: #{decoder_forward.26} parent=0 // pred_fallthru
    _
  // Predicated region
  $region14: #{decoder_forward.26} parent=0 // pred_check
    _
  $region15: #{decoder_forward.26} parent=0 // pred_check_branch
    %19 = sbr.rel (0) target = $region17
  $region16: #{decoder_forward.26} parent=0 // pred_region
    _
  $region17: #{decoder_forward.26} parent=0 // pred_fallthru
    _
  // Predicated region
  $region18: #{decoder_forward.26} parent=0 // pred_check
    _
  $region19: #{decoder_forward.26} parent=0 // pred_check_branch
    %21 = sbr.rel (0) target = $region21
  $region20: #{decoder_forward.26} parent=0 // pred_region
    _
  $region21: #{decoder_forward.26} parent=0 // pred_fallthru
    _
  // Predicated region
  $region22: #{decoder_forward.26} parent=0 // pred_check
    _
  $region23: #{decoder_forward.26} parent=0 // pred_check_branch
    %23 = sbr.rel (0) target = $region25
  $region24: #{decoder_forward.26} parent=0 // pred_region
    _
  $region25: #{decoder_forward.26} parent=0 // pred_fallthru
    _
  // Predicated region
  $region26: #{decoder_forward.26} parent=0 // pred_check
    _
  $region27: #{decoder_forward.26} parent=0 // pred_check_branch
    %25 = sbr.rel (0) target = $region29
  $region28: #{decoder_forward.26} parent=0 // pred_region
    _
  $region29: #{decoder_forward.26} parent=0 // pred_fallthru
    _
  %v26 = vld [vmem:[%s0] sm:$0xff]
  %v27 = vld [vmem:[%s0 + $0x8] sm:$0xff]
  %v28 = vld [vmem:[%s1] sm:$0x1]
  %v29 = vld [vmem:[%s2] sm:$0x1]
  %vm30 = vcmask 261120
  %v31 = vsel %vm30, %v26, 0.0
  %32 = vadd.xlane.f32.xlu0 %v31
  %v33 = vpop.xlane.xlu0 %32
  %v34 = vsel %vm30, %v27, 0.0
  %35 = vadd.xlane.f32.xlu0 %v34
  %v36 = vpop.xlane.xlu0 %35
  %v37 = vrcp.pop 32.0
  %v38 = vmul.f32 32.0, %v37
  %v39 = vsub.f32 1.0, %v38
  %v40 = vmul.f32 %v37, %v39
  %v41 = vadd.f32 %v37, %v40
  %vm42 = vweird.f32 %v37
  %v43 = vsel %vm42, %v37, %v41
  %v44 = vmul.f32 %v33, %v43
  %v45 = vmul.f32 %v36, %v43
  %v46 = vsub.f32 %v26, %v44
  %v47 = vsub.f32 %v27, %v45
  %v48 = vmul.f32 %v46, %v46
  %v49 = vmul.f32 %v47, %v47
  %v50 = vsel %vm30, %v48, 0.0
  %51 = vadd.xlane.f32.xlu0 %v50
  %v52 = vpop.xlane.xlu0 %51
  %v53 = vsel %vm30, %v49, 0.0
  %54 = vadd.xlane.f32.xlu0 %v53
  %v55 = vpop.xlane.xlu0 %54
  %v56 = vmul.f32 %v52, 0.032258064
  %v57 = vmul.f32 %v55, 0.032258064
  %v58 = vrsqrt.pop %v56
  %v59 = vmul.f32 %v58, %v56
  %v60 = vmul.f32 %v59, %v58
  %v61 = vmul.f32 0.5, %v60
  %v62 = vsub.f32 1.5, %v61
  %v63 = vmul.f32 %v58, %v62
  %v64 = vmul.f32 %v56, %v63
  %vm65 = vcmp.eq.f32.partialorder %v56, inf
  %v66 = vsel %vm65, %v56, %v64
  %vm67 = vcmp.eq.f32.partialorder %v56, 0.0
  %v68 = vand.u32 %v56, 2147483648
  %v69 = vsel %vm67, %v68, %v66
  %v70 = vrsqrt.pop %v57
  %v71 = vmul.f32 %v70, %v57
  %v72 = vmul.f32 %v71, %v70
  %v73 = vmul.f32 0.5, %v72
  %v74 = vsub.f32 1.5, %v73
  %v75 = vmul.f32 %v70, %v74
  %v76 = vmul.f32 %v57, %v75
  %vm77 = vcmp.eq.f32.partialorder %v57, inf
  %v78 = vsel %vm77, %v57, %v76
  %vm79 = vcmp.eq.f32.partialorder %v57, 0.0
  %v80 = vand.u32 %v57, 2147483648
  %v81 = vsel %vm79, %v80, %v78
  %v83 = vperm.slane %v28, 0
  %v85 = vmul.f32 %v83, %v46
  %v86 = vmul.f32 %v83, %v47
  %v87 = vadd.f32 %v69, 1e-06
  %v88 = vadd.f32 %v81, 1e-06
  %v89 = vrcp.pop %v87
  %v90 = vmul.f32 %v87, %v89
  %v91 = vsub.f32 1.0, %v90
  %v92 = vmul.f32 %v89, %v91
  %v93 = vadd.f32 %v89, %v92
  %vm94 = vweird.f32 %v87
  %vm95 = vweird.f32 %v89
  %vm96 = vmor %vm94, %vm95
  %v97 = vsel %vm96, %v89, %v93
  %v98 = vand.u32 2147483647, %v87
  %vm99 = vcmp.eq.f32.partialorder %v98, 8.507059e+37
  %v100 = vand.u32 %v87, 2147483648
  %v101 = vor.u32 1.1754944e-38, %v100
  %v102 = vsel %vm99, %v101, %v97
  %v103 = vmul.f32 %v85, %v102
  %v104 = vrcp.pop %v88
  %v105 = vmul.f32 %v88, %v104
  %v106 = vsub.f32 1.0, %v105
  %v107 = vmul.f32 %v104, %v106
  %v108 = vadd.f32 %v104, %v107
  %vm109 = vweird.f32 %v88
  %vm110 = vweird.f32 %v104
  %vm111 = vmor %vm109, %vm110
  %v112 = vsel %vm111, %v104, %v108
  %v113 = vand.u32 2147483647, %v88
  %vm114 = vcmp.eq.f32.partialorder %v113, 8.507059e+37
  %v115 = vand.u32 %v88, 2147483648
  %v116 = vor.u32 1.1754944e-38, %v115
  %v117 = vsel %vm114, %v116, %v112
  %v118 = vmul.f32 %v86, %v117
  %v120 = vperm.slane %v29, 0
  %v122 = vadd.f32 %v103, %v120
  %v123 = vadd.f32 %v118, %v120
  %v124 = vld [vmem:[%s3] sm:$0xff]
  %v125 = vld [vmem:[%s3 + $0x8] sm:$0xff]
  %v126 = vld [vmem:[%s3 + $0x10] sm:$0xff]
  %v127 = vld [vmem:[%s3 + $0x18] sm:$0xff]
  %v128 = vld [vmem:[%s4] sm:$0x1]
  %v130 = vperm.slane %v128, 0
  %v133 = vsel %vm30, %v122, 0
  %v136 = vsel %vm30, %v123, 0
  %138 = vmatpush.msra.mxu0 0.0
  %139 = vmatpush.msra.mxu0 0.0
  %140 = vmatpush.msra.mxu0 0.0
  %141 = vmatpush.msra.mxu0 0.0
  %142 = vmatpush.msra.mxu0 0.0
  %143 = vmatpush.msra.mxu0 0.0
  %144 = vmatpush.msra.mxu0 0.0
  %145 = vmatpush.msra.mxu0 0.0
  %146 = vmatpush.msra.mxu0 0.0
  %147 = vmatpush.msra.mxu0 0.0
  %148 = vmatpush.msra.mxu0 0.0
  %149 = vmatpush.msra.mxu0 0.0
  %150 = vmatpush.msra.mxu0 %v127
  %151 = vmatpush.msra.mxu0 %v126
  %152 = vmatpush.msra.mxu0 %v125
  %153 = vmatpush.msra.mxu0 %v124
  %154 = vmatmul.f32.gmra.mxu0 %v133
  %v155 = vpop.f32.mrf.mxu0
  %v156 = vadd.f32 %v130, %v155
  %157 = vmatmul.f32.gmra.mxu0 %v136
  %v158 = vpop.f32.mrf.mxu0
  %v159 = vadd.f32 %v130, %v158
  %160 = vdwg.mxu0
  %v161 = vmax.f32 %v156, 0.0
  %v162 = vmax.f32 %v159, 0.0
  %v163 = vld [vmem:[%s5] sm:$0xff]
  %v164 = vld [vmem:[%s5 + $0x8] sm:$0xff]
  %v165 = vld [vmem:[%s5 + $0x10] sm:$0xff]
  %v166 = vld [vmem:[%s5 + $0x18] sm:$0xff]
  %v167 = vld [vmem:[%s5 + $0x20] sm:$0xff]
  %v168 = vld [vmem:[%s5 + $0x28] sm:$0xff]
  %v169 = vld [vmem:[%s5 + $0x30] sm:$0xff]
  %v170 = vld [vmem:[%s5 + $0x38] sm:$0xff]
  %v171 = vld [vmem:[%s6] sm:$0x1]
  %v173 = vperm.slane %v171, 0
  %vm175 = vcmask 523264
  %v177 = vsel %vm175, %v161, 0
  %v180 = vsel %vm175, %v162, 0
  %182 = vmatpush.msra.mxu0 0.0
  %183 = vmatpush.msra.mxu0 0.0
  %184 = vmatpush.msra.mxu0 0.0
  %185 = vmatpush.msra.mxu0 0.0
  %186 = vmatpush.msra.mxu0 0.0
  %187 = vmatpush.msra.mxu0 0.0
  %188 = vmatpush.msra.mxu0 0.0
  %189 = vmatpush.msra.mxu0 0.0
  %190 = vmatpush.msra.mxu0 %v170
  %191 = vmatpush.msra.mxu0 %v169
  %192 = vmatpush.msra.mxu0 %v168
  %193 = vmatpush.msra.mxu0 %v167
  %194 = vmatpush.msra.mxu0 %v166
  %195 = vmatpush.msra.mxu0 %v165
  %196 = vmatpush.msra.mxu0 %v164
  %197 = vmatpush.msra.mxu0 %v163
  %198 = vmatmul.f32.gmra.mxu0 %v177
  %v199 = vpop.f32.mrf.mxu0
  %v200 = vadd.f32 %v173, %v199
  %201 = vmatmul.f32.gmra.mxu0 %v180
  %v202 = vpop.f32.mrf.mxu0
  %v203 = vadd.f32 %v173, %v202
  %204 = vdwg.mxu0
  %v205 = vadd.f32 %v26, %v200
  %v206 = vadd.f32 %v27, %v203
  %207 = vst.msk [vmem:[%s7] sm:$0xff] %vm30, %v205
  %208 = vst.msk [vmem:[%s7 + $0x8] sm:$0xff] %vm30, %v206
  // Predicated region
  $region30: #{decoder_forward.26} parent=0 // pred_check
    _
  $region31: #{decoder_forward.26} parent=0 // pred_check_branch
    %210 = sbr.rel (0) target = $region33
  $region32: #{decoder_forward.26} parent=0 // pred_region
    _
  $region33: #{decoder_forward.26} parent=0 // pred_fallthru
    _
  // Predicated region
  $region34: #{decoder_forward.26} parent=0 // pred_check
    _
  $region35: #{decoder_forward.26} parent=0 // pred_check_branch
    %212 = sbr.rel (0) target = $region37
  $region36: #{decoder_forward.26} parent=0 // pred_region
    _
  $region37: #{decoder_forward.26} parent=0 // pred_fallthru
    _

</llo_original>
